<compile_context>
chip_gen: v7x
topology: tpu7x:2x2x1
jax: 0.10.0
libtpu: 0.0.40
codegen_flags: <defaults>
</compile_context>

<pallas_src>
import functools

import jax
import jax.numpy as jnp
from jax.experimental import pallas as pl
from jax.experimental.pallas import tpu as pltpu


# --------------------------------------------------------------------------- helpers
def _shift_lanes(x, s):
    """out[:, n] = x[:, n + s], zero-filled where n + s falls outside [0, N)."""
    if s == 0:
        return x
    n = x.shape[-1]
    z = jnp.zeros(x.shape[:-1] + (abs(s),), x.dtype)
    if s > 0:
        return jnp.concatenate([x[:, s:], z], axis=-1)
    return jnp.concatenate([z, x[:, :n + s]], axis=-1)


# --------------------------------------------------------------------------- kernel
def _aclstm_kernel(gx_ref, whc_ref, wqkv_ref, bqkv_ref, gamma_ref,
                   h_out_ref, hcol_ref, c_ref, *, H, W):
    """One timestep for ALL batch elements.

    gx_ref    : (1, 4*Ch, B*N) f32   precomputed x-part of the gates (incl. bias)
    whc_ref   : (4*Ch, 9*Ch)   bf16  hidden->gates conv weights, channels-major
    wqkv_ref  : (2*Cqp+Ch, Ch) bf16  fused 1x1 q|k|v weights (q/k rows zero-padded)
    bqkv_ref  : (2*Cqp+Ch, 1)  f32
    gamma_ref : (1,)           f32   attention residual scale (SMEM scalar)
    h_out_ref : (B, 1, Ch, N)  f32   h_attn for this t, channels-major (torch NCHW)
    hcol_ref  : (9*Ch, B*N)    bf16  pre-im2col'd h_{t-1}            (VMEM scratch)
    c_ref     : (Ch, B*N)      f32   c_{t-1}                         (VMEM scratch)
    """
    t = pl.program_id(0)
    Ch, BN = c_ref.shape
    B = h_out_ref.shape[0]
    N = H * W
    Cqp = (wqkv_ref.shape[0] - Ch) // 2          # padded q/k channel rows (>= 8)

    # New sequence: zero the recurrent state (scratch persists across grid steps).
    @pl.when(t == 0)
    def _():
        hcol_ref[...] = jnp.zeros_like(hcol_ref)
        c_ref[...] = jnp.zeros_like(c_ref)

    # ---- gates: precomputed x contribution + ONE fused K=9*Ch hidden-conv matmul ----
    gates = gx_ref[0] + jnp.dot(whc_ref[...], hcol_ref[...],
                                preferred_element_type=jnp.float32)      # (4Ch, B*N)

    # ---- LSTM cell update (channels-major; 32-sublane slices, f32 nonlinearities) ----
    i = jax.nn.sigmoid(gates[0 * Ch:1 * Ch])
    f = jax.nn.sigmoid(gates[1 * Ch:2 * Ch])
    o = jax.nn.sigmoid(gates[2 * Ch:3 * Ch])
    g = jnp.tanh(gates[3 * Ch:4 * Ch])
    c_new = f * c_ref[...] + i * g                                        # (Ch, B*N)
    h_new = o * jnp.tanh(c_new)
    c_ref[...] = c_new

    # ---- fused q|k|v 1x1 projection for all batches at once -------------------------
    qkv = jnp.dot(wqkv_ref[...], h_new.astype(jnp.bfloat16),
                  preferred_element_type=jnp.float32) + bqkv_ref[...]     # (2Cqp+Ch, B*N)

    gamma = gamma_ref[0]
    col = jax.lax.broadcasted_iota(jnp.int32, (Ch, N), 1)
    x_pos = (col & (W - 1)) if (W & (W - 1)) == 0 else (col % W)          # spatial x of lane

    for b in range(B):                # attention is per-image (N, N); B is small
        lo, hi = b * N, (b + 1) * N
        q = jnp.transpose(qkv[0:Cqp, lo:hi]).astype(jnp.bfloat16)         # (N, Cqp)
        k = qkv[Cqp:2 * Cqp, lo:hi].astype(jnp.bfloat16)                  # (Cqp, N)
        v = qkv[2 * Cqp:2 * Cqp + Ch, lo:hi]                              # (Ch, N) f32
        h_new_b = h_new[:, lo:hi]

        # TODO(synk): for large H*W, stream K/V blocks flash-style (running max/sum)
        # so the (N, N) energy/attn temporaries stay inside v7x's 64 MiB VMEM.
        energy = jnp.dot(q, k, preferred_element_type=jnp.float32)        # (N, N)
        energy = energy - jnp.max(energy, axis=-1, keepdims=True)
        p = jnp.exp(energy)
        attn = p * pl.reciprocal(jnp.sum(p, axis=-1, keepdims=True), approx=True)
        # out[c, n] = sum_m v[c, m] * attn[n, m]  (contract the two lane dims)
        out = jax.lax.dot_general(v.astype(jnp.bfloat16), attn.astype(jnp.bfloat16),
                                  (((1,), (1,)), ((), ())),
                                  preferred_element_type=jnp.float32)     # (Ch, N)
        h_attn = gamma * out + h_new_b                                    # (Ch, N) f32

        # channels-major, lane-dense output store (already the torch NCHW layout)
        h_out_ref[b, 0] = h_attn.astype(h_out_ref.dtype)

        # ---- recurrent-state writeback: refresh the pre-im2col'd h ------------------
        # tap (dy, dx): hcol[tap, (y, x)] = h_attn[(y+dy-1, x+dx-1)] (zero if OOB)
        #  = lane-shift by (dy-1)*W + (dx-1); the linear zero-fill handles the y edges
        #  and pre-zeroing one source column handles the x edges (incl. row wrap).
        ha = h_attn.astype(jnp.bfloat16)
        z = jnp.zeros_like(ha)
        ha_l0 = jnp.where(x_pos == 0, z, ha)          # source col x=0 zeroed (dx=+1 taps)
        ha_r0 = jnp.where(x_pos == W - 1, z, ha)      # source col x=W-1 zeroed (dx=-1 taps)
        src_by_dx = (ha_r0, ha, ha_l0)
        for k9 in range(9):
            dy, dx = k9 // 3, k9 % 3
            s = (dy - 1) * W + (dx - 1)
            hcol_ref[k9 * Ch:(k9 + 1) * Ch, lo:hi] = _shift_lanes(src_by_dx[dx], s)


# -------------------------------------------------------------------------- wrappers
def _gates_x(x, wx, bg):
    """x: (B, T, Cin, H, W) -> x-part of the gates, channels-major (B, T, 4*Ch, N) f32."""
    B, T, Cin, H, W = x.shape
    x_nhwc = jnp.transpose(x, (0, 1, 3, 4, 2))
    xpad = jnp.pad(x_nhwc, ((0, 0), (0, 0), (1, 1), (1, 1), (0, 0)))
    slabs = [xpad[:, :, dy:dy + H, dx:dx + W, :] for dy in range(3) for dx in range(3)]
    xp = jnp.concatenate(slabs, axis=-1).reshape(B, T, H * W, 9 * Cin)
    return jnp.einsum("btnk,kg->btgn", xp, wx) + bg[None, None, :, None]


@jax.jit
def aclstm_forward(x, params):
    """x: (B, T, Cin, H, W)  ->  h_attn sequence (B, T, Ch, H, W), NCHW like torch."""
    B, T, Cin, H, W = x.shape
    N = H * W
    Ch = params["wh_cm"].shape[0] // 4
    Pq = params["wqkv_cm"].shape[0]
    assert N % 128 == 0 and Ch % 16 == 0, "layout assumes lane-dense N and packed Ch"

    gx = _gates_x(x, params["wx"], params["bg"])                          # (B,T,4Ch,N)
    gx_cm = jnp.transpose(gx, (1, 2, 0, 3)).reshape(T, 4 * Ch, B * N)     # (T,4Ch,B*N)

    kernel = functools.partial(_aclstm_kernel, H=H, W=W)
    h_seq = pl.pallas_call(
        kernel,
        out_shape=jax.ShapeDtypeStruct((B, T, Ch, N), jnp.float32),
        grid=(T,),
        in_specs=[
            pl.BlockSpec((1, 4 * Ch, B * N), lambda t: (t, 0, 0)),        # gates_x stream
            pl.BlockSpec((4 * Ch, 9 * Ch), lambda t: (0, 0)),             # resident weights
            pl.BlockSpec((Pq, Ch), lambda t: (0, 0)),
            pl.BlockSpec((Pq, 1), lambda t: (0, 0)),
            pl.BlockSpec(memory_space=pltpu.MemorySpace.SMEM),            # gamma scalar
        ],
        out_specs=pl.BlockSpec((B, 1, Ch, N), lambda t: (0, t, 0, 0)),
        scratch_shapes=[
            pltpu.VMEM((9 * Ch, B * N), jnp.bfloat16),                    # pre-im2col'd h
            pltpu.VMEM((Ch, B * N), jnp.float32),                         # c state
        ],
        # TODO(synk): on v7x (2 TCs) add a core-parallel split over B or N; the single
        # recurrent T axis must stay sequential ("arbitrary").
        compiler_params=pltpu.CompilerParams(
            dimension_semantics=("arbitrary",),
            vmem_limit_bytes=48 * 1024 * 1024),
    )(gx_cm, params["wh_cm"], params["wqkv_cm"], params["bqkv_cm"], params["gamma"])

    return h_seq.reshape(B, T, Ch, H, W)


# ----------------------------------------------------------------- pure-JAX reference
@jax.jit
def aclstm_reference(x, params):
    """Same math (incl. bf16 matmul operands) in plain JAX, via a padded-image im2col
    (independent of the kernel's shift/mask state update) for cross-checking."""
    B, T, Cin, H, W = x.shape
    Ch = params["wh_cm"].shape[0] // 4
    Pq = params["wqkv_cm"].shape[0]
    Cqp = (Pq - Ch) // 2
    N = H * W
    gx = _gates_x(x, params["wx"], params["bg"])                          # (B,T,4Ch,N)
    wh_cm, wqkv, bqkv = params["wh_cm"], params["wqkv_cm"], params["bqkv_cm"]
    gamma = params["gamma"][0]

    h = jnp.zeros((B, Ch, H, W), jnp.float32)
    c = jnp.zeros((B, Ch, N), jnp.float32)
    outs = []
    for t in range(T):
        hpad = jnp.pad(h, ((0, 0), (0, 0), (1, 1), (1, 1)))
        cols = [hpad[:, :, dy:dy + H, dx:dx + W].reshape(B, Ch, N)
                for dy in range(3) for dx in range(3)]
        hcol = jnp.concatenate(cols, axis=1).astype(jnp.bfloat16)         # (B, 9Ch, N)
        gates = gx[:, t] + jnp.einsum("gk,bkn->bgn", wh_cm, hcol,
                                      preferred_element_type=jnp.float32)
        i = jax.nn.sigmoid(gates[:, 0 * Ch:1 * Ch])
        f = jax.nn.sigmoid(gates[:, 1 * Ch:2 * Ch])
        o = jax.nn.sigmoid(gates[:, 2 * Ch:3 * Ch])
        g = jnp.tanh(gates[:, 3 * Ch:4 * Ch])
        c = f * c + i * g
        h_new = o * jnp.tanh(c)                                           # (B, Ch, N)

        qkv = jnp.einsum("pc,bcn->bpn", wqkv, h_new.astype(jnp.bfloat16),
                         preferred_element_type=jnp.float32) + bqkv
        q = qkv[:, 0:Cqp].astype(jnp.bfloat16)
        k = qkv[:, Cqp:2 * Cqp].astype(jnp.bfloat16)
        v = qkv[:, 2 * Cqp:2 * Cqp + Ch]
        energy = jnp.einsum("bcn,bcm->bnm", q, k, preferred_element_type=jnp.float32)
        attn = jax.nn.softmax(energy, axis=-1)
        out = jnp.einsum("bcm,bnm->bcn", v.astype(jnp.bfloat16), attn.astype(jnp.bfloat16),
                         preferred_element_type=jnp.float32)
        h_attn = gamma * out + h_new
        outs.append(h_attn)
        h = h_attn.reshape(B, Ch, H, W)
    return jnp.stack(outs, axis=1).reshape(B, T, Ch, H, W)


# --------------------------------------------------------------------------- params
def init_params(key, input_channels, hidden_channels):
    Cin, Ch = input_channels, hidden_channels
    Cq = Ch // 8
    Cqp = max(8, ((Cq + 7) // 8) * 8)          # q/k rows padded to a sublane multiple
    Pq = 2 * Cqp + Ch
    ks = jax.random.split(key, 9)

    def winit(k, shape, fan_in):
        return jax.random.normal(k, shape, jnp.float32) / jnp.sqrt(fan_in)

    fan = 9 * (Cin + Ch)
    # 3x3 gate conv [i|f|o|g] split into input part (used only in the XLA precompute)
    # and hidden part (channels-major, row g, column = tap*Ch + c_in).
    wx = winit(ks[0], (9 * Cin, 4 * Ch), fan)
    wh_cm = winit(ks[1], (4 * Ch, 9 * Ch), fan).astype(jnp.bfloat16)
    bg = winit(ks[2], (4 * Ch,), fan)

    # Fused 1x1 attention projections, channels-major rows [q | k | v] with the q/k
    # blocks zero-padded to Cqp rows (zero weight + zero bias -> energy unchanged).
    wq = winit(ks[3], (Cq, Ch), Ch)
    wk = winit(ks[4], (Cq, Ch), Ch)
    wv = winit(ks[5], (Ch, Ch), Ch)
    bq = winit(ks[6], (Cq, 1), Ch)
    bk = winit(ks[7], (Cq, 1), Ch)
    bv = winit(ks[8], (Ch, 1), Ch)
    wqkv = (jnp.zeros((Pq, Ch), jnp.float32)
            .at[0:Cq].set(wq).at[Cqp:Cqp + Cq].set(wk).at[2 * Cqp:2 * Cqp + Ch].set(wv))
    bqkv = (jnp.zeros((Pq, 1), jnp.float32)
            .at[0:Cq].set(bq).at[Cqp:Cqp + Cq].set(bk).at[2 * Cqp:2 * Cqp + Ch].set(bv))

    # torch initializes gamma to 0 (attention path disabled at init); use a nonzero
    # value here so the attention matmuls/softmax are exercised numerically.
    gamma = jnp.full((1,), 0.5, jnp.float32)

    return dict(wx=wx, wh_cm=wh_cm, bg=bg,
                wqkv_cm=wqkv.astype(jnp.bfloat16), bqkv_cm=bqkv, gamma=gamma)


# ----------------------------------------------------------------------------- main
if __name__ == "__main__":
    B, T, Cin, H, W = 2, 4, 1, 16, 16
    Ch = 32

    key = jax.random.PRNGKey(0)
    k_x, k_p = jax.random.split(key)
    x = jax.random.normal(k_x, (B, T, Cin, H, W), jnp.float32)
    params = init_params(k_p, Cin, Ch)

    out = jax.block_until_ready(aclstm_forward(x, params))
    assert out.shape == (B, T, Ch, H, W), out.shape

    ref = jax.block_until_ready(aclstm_reference(x, params))
    # bf16 MXU operands are mirrored in the reference; remaining deltas come from the
    # approximate EUP reciprocal in the softmax, transcendental approximations and
    # accumulation order, compounded over the T-step recurrence.
    err = float(jnp.max(jnp.abs(out - ref)))
    assert jnp.allclose(out, ref, atol=2e-2, rtol=2e-2), err

    print("KERNEL_OK")
</pallas_src>

<mosaic_0001>
module attributes {stable_mosaic.version = 11 : i64} {
  func.func @_aclstm_kernel(%arg0: i32, %arg1: memref<1x128x512xf32, #tpu.memory_space<vmem>>, %arg2: memref<128x288xbf16, #tpu.memory_space<vmem>>, %arg3: memref<48x32xbf16, #tpu.memory_space<vmem>>, %arg4: memref<48x1xf32, #tpu.memory_space<vmem>>, %arg5: memref<1xf32, #tpu.memory_space<smem>>, %arg6: memref<2x1x32x256xf32, #tpu.memory_space<vmem>>, %arg7: memref<288x512xbf16, #tpu.memory_space<vmem>>, %arg8: memref<32x512xf32, #tpu.memory_space<vmem>>) attributes {dimension_semantics = [#tpu.dimension_semantics<arbitrary>], iteration_bounds = array<i64: 4>, scalar_prefetch = 0 : i64, scratch_operands = 2 : i64, tpu.core_type = #tpu.core_type<tc>, window_params = [{transform_indices = @transform_0, window_bounds = array<i64: 1, 128, 512>}, {pipeline_mode = #tpu.pipeline_mode<synchronous>, transform_indices = @transform_1, window_bounds = array<i64: 128, 288>}, {pipeline_mode = #tpu.pipeline_mode<synchronous>, transform_indices = @transform_2, window_bounds = array<i64: 48, 32>}, {pipeline_mode = #tpu.pipeline_mode<synchronous>, transform_indices = @transform_3, window_bounds = array<i64: 48, 1>}, {transform_indices = @transform_4, window_bounds = array<i64: 1>}, {transform_indices = @transform_5, window_bounds = array<i64: 2, 1, 32, 256>}]} {
    %c0_i32 = arith.constant 0 : i32
    %0 = arith.cmpi eq, %arg0, %c0_i32 : i32
    %1 = arith.extui %0 : i1 to i32
    %c0_i32_0 = arith.constant 0 : i32
    %2 = arith.cmpi ne, %1, %c0_i32_0 : i32
    scf.if %2 {
      %cst_85 = arith.constant 0.000000e+00 : bf16
      %182 = vector.broadcast %cst_85 : bf16 to vector<288x512xbf16>
      %c0_86 = arith.constant 0 : index
      %c0_87 = arith.constant 0 : index
      %183 = vector.load %arg7[%c0_86, %c0_87] : memref<288x512xbf16, #tpu.memory_space<vmem>>, vector<288x512xbf16>
      tpu.vector_store %arg7[%c0_86, %c0_87], %182 {strides = array<i32>} : memref<288x512xbf16, #tpu.memory_space<vmem>>, vector<288x512xbf16>,
      %cst_88 = arith.constant 0.000000e+00 : f32
      %184 = vector.broadcast %cst_88 : f32 to vector<32x512xf32>
      %c0_89 = arith.constant 0 : index
      %c0_90 = arith.constant 0 : index
      %185 = vector.load %arg8[%c0_89, %c0_90] : memref<32x512xf32, #tpu.memory_space<vmem>>, vector<32x512xf32>
      tpu.vector_store %arg8[%c0_89, %c0_90], %184 {strides = array<i32>} : memref<32x512xf32, #tpu.memory_space<vmem>>, vector<32x512xf32>,
    } else {
    }
    %c0 = arith.constant 0 : index
    %c0_1 = arith.constant 0 : index
    %c0_2 = arith.constant 0 : index
    %3 = vector.load %arg1[%c0, %c0_1, %c0_2] : memref<1x128x512xf32, #tpu.memory_space<vmem>>, vector<1x128x512xf32>
    %4 = vector.shape_cast %3 : vector<1x128x512xf32> to vector<128x512xf32>
    %c0_3 = arith.constant 0 : index
    %c0_4 = arith.constant 0 : index
    %5 = vector.load %arg2[%c0_3, %c0_4] : memref<128x288xbf16, #tpu.memory_space<vmem>>, vector<128x288xbf16>
    %c0_5 = arith.constant 0 : index
    %c0_6 = arith.constant 0 : index
    %6 = vector.load %arg7[%c0_5, %c0_6] : memref<288x512xbf16, #tpu.memory_space<vmem>>, vector<288x512xbf16>
    %cst = arith.constant dense<0.000000e+00> : vector<128x512xf32>
    %7 = tpu.matmul %5, %6, %cst {dimension_numbers = #tpu.dot_dimension_numbers<[1], [0], [0], [1], [0, 0, 1, 1], [], []>} : vector<128x288xbf16>, vector<288x512xbf16>, vector<128x512xf32> -> vector<128x512xf32>
    %8 = arith.addf %4, %7 : vector<128x512xf32>
    %9 = vector.extract_strided_slice %8 {offsets = [0, 0], sizes = [32, 512], strides = [1, 1]} : vector<128x512xf32> to vector<32x512xf32>
    %10 = arith.negf %9 : vector<32x512xf32>
    %11 = math.exp %10 : vector<32x512xf32>
    %cst_7 = arith.constant 1.000000e+00 : f32
    %12 = vector.broadcast %cst_7 : f32 to vector<32x512xf32>
    %13 = arith.addf %12, %11 : vector<32x512xf32>
    %14 = arith.divf %12, %13 : vector<32x512xf32>
    %15 = vector.extract_strided_slice %8 {offsets = [32, 0], sizes = [32, 512], strides = [1, 1]} : vector<128x512xf32> to vector<32x512xf32>
    %16 = arith.negf %15 : vector<32x512xf32>
    %17 = math.exp %16 : vector<32x512xf32>
    %cst_8 = arith.constant 1.000000e+00 : f32
    %18 = vector.broadcast %cst_8 : f32 to vector<32x512xf32>
    %19 = arith.addf %18, %17 : vector<32x512xf32>
    %20 = arith.divf %18, %19 : vector<32x512xf32>
    %21 = vector.extract_strided_slice %8 {offsets = [64, 0], sizes = [32, 512], strides = [1, 1]} : vector<128x512xf32> to vector<32x512xf32>
    %22 = arith.negf %21 : vector<32x512xf32>
    %23 = math.exp %22 : vector<32x512xf32>
    %cst_9 = arith.constant 1.000000e+00 : f32
    %24 = vector.broadcast %cst_9 : f32 to vector<32x512xf32>
    %25 = arith.addf %24, %23 : vector<32x512xf32>
    %26 = arith.divf %24, %25 : vector<32x512xf32>
    %27 = vector.extract_strided_slice %8 {offsets = [96, 0], sizes = [32, 512], strides = [1, 1]} : vector<128x512xf32> to vector<32x512xf32>
    %28 = math.tanh %27 : vector<32x512xf32>
    %c0_10 = arith.constant 0 : index
    %c0_11 = arith.constant 0 : index
    %29 = vector.load %arg8[%c0_10, %c0_11] : memref<32x512xf32, #tpu.memory_space<vmem>>, vector<32x512xf32>
    %30 = arith.mulf %20, %29 : vector<32x512xf32>
    %31 = arith.mulf %14, %28 : vector<32x512xf32>
    %32 = arith.addf %30, %31 : vector<32x512xf32>
    %33 = math.tanh %32 : vector<32x512xf32>
    %34 = arith.mulf %26, %33 : vector<32x512xf32>
    %c0_12 = arith.constant 0 : index
    %c0_13 = arith.constant 0 : index
    %35 = vector.load %arg8[%c0_12, %c0_13] : memref<32x512xf32, #tpu.memory_space<vmem>>, vector<32x512xf32>
    tpu.vector_store %arg8[%c0_12, %c0_13], %32 {strides = array<i32>} : memref<32x512xf32, #tpu.memory_space<vmem>>, vector<32x512xf32>,
    %c0_14 = arith.constant 0 : index
    %c0_15 = arith.constant 0 : index
    %36 = vector.load %arg3[%c0_14, %c0_15] : memref<48x32xbf16, #tpu.memory_space<vmem>>, vector<48x32xbf16>
    %37 = arith.truncf %34 : vector<32x512xf32> to vector<32x512xbf16>
    %cst_16 = arith.constant dense<0.000000e+00> : vector<48x512xf32>
    %38 = tpu.matmul %36, %37, %cst_16 {dimension_numbers = #tpu.dot_dimension_numbers<[1], [0], [0], [1], [0, 0, 1, 1], [], []>} : vector<48x32xbf16>, vector<32x512xbf16>, vector<48x512xf32> -> vector<48x512xf32>
    %c0_17 = arith.constant 0 : index
    %c0_18 = arith.constant 0 : index
    %39 = vector.load %arg4[%c0_17, %c0_18] : memref<48x1xf32, #tpu.memory_space<vmem>>, vector<48x1xf32>
    %40 = vector.broadcast %39 : vector<48x1xf32> to vector<48x512xf32>
    %41 = arith.addf %38, %40 : vector<48x512xf32>
    %c0_19 = arith.constant 0 : index
    %42 = memref.load %arg5[%c0_19] : memref<1xf32, #tpu.memory_space<smem>>
    %43 = tpu.iota {dimensions = array<i32: 1>} : vector<32x256xi32>
    %c15_i32 = arith.constant 15 : i32
    %44 = vector.broadcast %c15_i32 : i32 to vector<32x256xi32>
    %45 = arith.andi %43, %44 : vector<32x256xi32>
    %46 = vector.extract_strided_slice %41 {offsets = [0, 0], sizes = [8, 256], strides = [1, 1]} : vector<48x512xf32> to vector<8x256xf32>
    %47 = tpu.transpose %46, [1, 0] : vector<8x256xf32> -> vector<256x8xf32>
    %48 = arith.truncf %47 : vector<256x8xf32> to vector<256x8xbf16>
    %49 = vector.extract_strided_slice %41 {offsets = [8, 0], sizes = [8, 256], strides = [1, 1]} : vector<48x512xf32> to vector<8x256xf32>
    %50 = arith.truncf %49 : vector<8x256xf32> to vector<8x256xbf16>
    %51 = vector.extract_strided_slice %41 {offsets = [16, 0], sizes = [32, 256], strides = [1, 1]} : vector<48x512xf32> to vector<32x256xf32>
    %52 = vector.extract_strided_slice %34 {offsets = [0, 0], sizes = [32, 256], strides = [1, 1]} : vector<32x512xf32> to vector<32x256xf32>
    %cst_20 = arith.constant dense<0.000000e+00> : vector<256x256xf32>
    %53 = tpu.matmul %48, %50, %cst_20 {dimension_numbers = #tpu.dot_dimension_numbers<[1], [0], [0], [1], [0, 0, 1, 1], [], []>} : vector<256x8xbf16>, vector<8x256xbf16>, vector<256x256xf32> -> vector<256x256xf32>
    %cst_21 = arith.constant dense<0xFF800000> : vector<256xf32>
    %54 = vector.multi_reduction <maximumf>, %53, %cst_21 [1] : vector<256x256xf32> to vector<256xf32>
    %55 = vector.shape_cast %54 : vector<256xf32> to vector<256x1xf32>
    %56 = vector.broadcast %55 : vector<256x1xf32> to vector<256x256xf32>
    %57 = arith.subf %53, %56 : vector<256x256xf32>
    %58 = math.exp %57 : vector<256x256xf32>
    %cst_22 = arith.constant dense<0.000000e+00> : vector<256xf32>
    %59 = vector.multi_reduction <add>, %58, %cst_22 [1] : vector<256x256xf32> to vector<256xf32>
    %60 = vector.shape_cast %59 : vector<256xf32> to vector<256x1xf32>
    %61 = tpu.reciprocal %60 {approx = true} : vector<256x1xf32> -> vector<256x1xf32>
    %62 = vector.broadcast %61 : vector<256x1xf32> to vector<256x256xf32>
    %63 = arith.mulf %58, %62 : vector<256x256xf32>
    %64 = arith.truncf %51 : vector<32x256xf32> to vector<32x256xbf16>
    %65 = arith.truncf %63 : vector<256x256xf32> to vector<256x256xbf16>
    %cst_23 = arith.constant dense<0.000000e+00> : vector<32x256xf32>
    %66 = tpu.matmul %64, %65, %cst_23 {dimension_numbers = #tpu.dot_dimension_numbers<[1], [1], [0], [0], [0, 0, 1, 0], [], []>} : vector<32x256xbf16>, vector<256x256xbf16>, vector<32x256xf32> -> vector<32x256xf32>
    %67 = vector.broadcast %42 : f32 to vector<32x256xf32>
    %68 = arith.mulf %67, %66 : vector<32x256xf32>
    %69 = arith.addf %68, %52 : vector<32x256xf32>
    %c0_24 = arith.constant 0 : index
    %c0_25 = arith.constant 0 : index
    %c0_26 = arith.constant 0 : index
    %c0_27 = arith.constant 0 : index
    %70 = vector.load %arg6[%c0_24, %c0_25, %c0_26, %c0_27] : memref<2x1x32x256xf32, #tpu.memory_space<vmem>>, vector<1x1x32x256xf32>
    %71 = vector.shape_cast %70 : vector<1x1x32x256xf32> to vector<32x256xf32>
    %72 = vector.shape_cast %69 : vector<32x256xf32> to vector<1x1x32x256xf32>
    tpu.vector_store %arg6[%c0_24, %c0_25, %c0_26, %c0_27], %72 {strides = array<i32>} : memref<2x1x32x256xf32, #tpu.memory_space<vmem>>, vector<1x1x32x256xf32>,
    %73 = arith.truncf %69 : vector<32x256xf32> to vector<32x256xbf16>
    %cst_28 = arith.constant 0.000000e+00 : bf16
    %74 = vector.broadcast %cst_28 : bf16 to vector<32x256xbf16>
    %c0_i32_29 = arith.constant 0 : i32
    %75 = vector.broadcast %c0_i32_29 : i32 to vector<32x256xi32>
    %76 = arith.cmpi eq, %45, %75 : vector<32x256xi32>
    %77 = arith.select %76, %74, %73 : vector<32x256xi1>, vector<32x256xbf16>
    %c15_i32_30 = arith.constant 15 : i32
    %78 = vector.broadcast %c15_i32_30 : i32 to vector<32x256xi32>
    %79 = arith.cmpi eq, %45, %78 : vector<32x256xi32>
    %80 = arith.select %79, %74, %73 : vector<32x256xi1>, vector<32x256xbf16>
    %cst_31 = arith.constant 0.000000e+00 : bf16
    %81 = vector.broadcast %cst_31 : bf16 to vector<32x17xbf16>
    %82 = vector.extract_strided_slice %80 {offsets = [0, 0], sizes = [32, 239], strides = [1, 1]} : vector<32x256xbf16> to vector<32x239xbf16>
    %83 = tpu.concatenate %81, %82 in 1 : vector<32x17xbf16>, vector<32x239xbf16> -> vector<32x256xbf16>
    %c0_32 = arith.constant 0 : index
    %c0_33 = arith.constant 0 : index
    %84 = vector.load %arg7[%c0_32, %c0_33] : memref<288x512xbf16, #tpu.memory_space<vmem>>, vector<32x256xbf16>
    tpu.vector_store %arg7[%c0_32, %c0_33], %83 {strides = array<i32>} : memref<288x512xbf16, #tpu.memory_space<vmem>>, vector<32x256xbf16>,
    %cst_34 = arith.constant 0.000000e+00 : bf16
    %85 = vector.broadcast %cst_34 : bf16 to vector<32x16xbf16>
    %86 = vector.extract_strided_slice %73 {offsets = [0, 0], sizes = [32, 240], strides = [1, 1]} : vector<32x256xbf16> to vector<32x240xbf16>
    %87 = tpu.concatenate %85, %86 in 1 : vector<32x16xbf16>, vector<32x240xbf16> -> vector<32x256xbf16>
    %c32 = arith.constant 32 : index
    %c0_35 = arith.constant 0 : index
    %88 = vector.load %arg7[%c32, %c0_35] : memref<288x512xbf16, #tpu.memory_space<vmem>>, vector<32x256xbf16>
    tpu.vector_store %arg7[%c32, %c0_35], %87 {strides = array<i32>} : memref<288x512xbf16, #tpu.memory_space<vmem>>, vector<32x256xbf16>,
    %cst_36 = arith.constant 0.000000e+00 : bf16
    %89 = vector.broadcast %cst_36 : bf16 to vector<32x15xbf16>
    %90 = vector.extract_strided_slice %77 {offsets = [0, 0], sizes = [32, 241], strides = [1, 1]} : vector<32x256xbf16> to vector<32x241xbf16>
    %91 = tpu.concatenate %89, %90 in 1 : vector<32x15xbf16>, vector<32x241xbf16> -> vector<32x256xbf16>
    %c64 = arith.constant 64 : index
    %c0_37 = arith.constant 0 : index
    %92 = vector.load %arg7[%c64, %c0_37] : memref<288x512xbf16, #tpu.memory_space<vmem>>, vector<32x256xbf16>
    tpu.vector_store %arg7[%c64, %c0_37], %91 {strides = array<i32>} : memref<288x512xbf16, #tpu.memory_space<vmem>>, vector<32x256xbf16>,
    %cst_38 = arith.constant 0.000000e+00 : bf16
    %93 = vector.broadcast %cst_38 : bf16 to vector<32x1xbf16>
    %94 = vector.extract_strided_slice %80 {offsets = [0, 0], sizes = [32, 255], strides = [1, 1]} : vector<32x256xbf16> to vector<32x255xbf16>
    %95 = tpu.concatenate %93, %94 in 1 : vector<32x1xbf16>, vector<32x255xbf16> -> vector<32x256xbf16>
    %c96 = arith.constant 96 : index
    %c0_39 = arith.constant 0 : index
    %96 = vector.load %arg7[%c96, %c0_39] : memref<288x512xbf16, #tpu.memory_space<vmem>>, vector<32x256xbf16>
    tpu.vector_store %arg7[%c96, %c0_39], %95 {strides = array<i32>} : memref<288x512xbf16, #tpu.memory_space<vmem>>, vector<32x256xbf16>,
    %c128 = arith.constant 128 : index
    %c0_40 = arith.constant 0 : index
    %97 = vector.load %arg7[%c128, %c0_40] : memref<288x512xbf16, #tpu.memory_space<vmem>>, vector<32x256xbf16>
    tpu.vector_store %arg7[%c128, %c0_40], %73 {strides = array<i32>} : memref<288x512xbf16, #tpu.memory_space<vmem>>, vector<32x256xbf16>,
    %cst_41 = arith.constant 0.000000e+00 : bf16
    %98 = vector.broadcast %cst_41 : bf16 to vector<32x1xbf16>
    %99 = vector.extract_strided_slice %77 {offsets = [0, 1], sizes = [32, 255], strides = [1, 1]} : vector<32x256xbf16> to vector<32x255xbf16>
    %100 = tpu.concatenate %99, %98 in 1 : vector<32x255xbf16>, vector<32x1xbf16> -> vector<32x256xbf16>
    %c160 = arith.constant 160 : index
    %c0_42 = arith.constant 0 : index
    %101 = vector.load %arg7[%c160, %c0_42] : memref<288x512xbf16, #tpu.memory_space<vmem>>, vector<32x256xbf16>
    tpu.vector_store %arg7[%c160, %c0_42], %100 {strides = array<i32>} : memref<288x512xbf16, #tpu.memory_space<vmem>>, vector<32x256xbf16>,
    %cst_43 = arith.constant 0.000000e+00 : bf16
    %102 = vector.broadcast %cst_43 : bf16 to vector<32x15xbf16>
    %103 = vector.extract_strided_slice %80 {offsets = [0, 15], sizes = [32, 241], strides = [1, 1]} : vector<32x256xbf16> to vector<32x241xbf16>
    %104 = tpu.concatenate %103, %102 in 1 : vector<32x241xbf16>, vector<32x15xbf16> -> vector<32x256xbf16>
    %c192 = arith.constant 192 : index
    %c0_44 = arith.constant 0 : index
    %105 = vector.load %arg7[%c192, %c0_44] : memref<288x512xbf16, #tpu.memory_space<vmem>>, vector<32x256xbf16>
    tpu.vector_store %arg7[%c192, %c0_44], %104 {strides = array<i32>} : memref<288x512xbf16, #tpu.memory_space<vmem>>, vector<32x256xbf16>,
    %cst_45 = arith.constant 0.000000e+00 : bf16
    %106 = vector.broadcast %cst_45 : bf16 to vector<32x16xbf16>
    %107 = vector.extract_strided_slice %73 {offsets = [0, 16], sizes = [32, 240], strides = [1, 1]} : vector<32x256xbf16> to vector<32x240xbf16>
    %108 = tpu.concatenate %107, %106 in 1 : vector<32x240xbf16>, vector<32x16xbf16> -> vector<32x256xbf16>
    %c224 = arith.constant 224 : index
    %c0_46 = arith.constant 0 : index
    %109 = vector.load %arg7[%c224, %c0_46] : memref<288x512xbf16, #tpu.memory_space<vmem>>, vector<32x256xbf16>
    tpu.vector_store %arg7[%c224, %c0_46], %108 {strides = array<i32>} : memref<288x512xbf16, #tpu.memory_space<vmem>>, vector<32x256xbf16>,
    %cst_47 = arith.constant 0.000000e+00 : bf16
    %110 = vector.broadcast %cst_47 : bf16 to vector<32x17xbf16>
    %111 = vector.extract_strided_slice %77 {offsets = [0, 17], sizes = [32, 239], strides = [1, 1]} : vector<32x256xbf16> to vector<32x239xbf16>
    %112 = tpu.concatenate %111, %110 in 1 : vector<32x239xbf16>, vector<32x17xbf16> -> vector<32x256xbf16>
    %c256 = arith.constant 256 : index
    %c0_48 = arith.constant 0 : index
    %113 = vector.load %arg7[%c256, %c0_48] : memref<288x512xbf16, #tpu.memory_space<vmem>>, vector<32x256xbf16>
    tpu.vector_store %arg7[%c256, %c0_48], %112 {strides = array<i32>} : memref<288x512xbf16, #tpu.memory_space<vmem>>, vector<32x256xbf16>,
    %114 = vector.extract_strided_slice %41 {offsets = [0, 256], sizes = [8, 256], strides = [1, 1]} : vector<48x512xf32> to vector<8x256xf32>
    %115 = tpu.transpose %114, [1, 0] : vector<8x256xf32> -> vector<256x8xf32>
    %116 = arith.truncf %115 : vector<256x8xf32> to vector<256x8xbf16>
    %117 = vector.extract_strided_slice %41 {offsets = [8, 256], sizes = [8, 256], strides = [1, 1]} : vector<48x512xf32> to vector<8x256xf32>
    %118 = arith.truncf %117 : vector<8x256xf32> to vector<8x256xbf16>
    %119 = vector.extract_strided_slice %41 {offsets = [16, 256], sizes = [32, 256], strides = [1, 1]} : vector<48x512xf32> to vector<32x256xf32>
    %120 = vector.extract_strided_slice %34 {offsets = [0, 256], sizes = [32, 256], strides = [1, 1]} : vector<32x512xf32> to vector<32x256xf32>
    %cst_49 = arith.constant dense<0.000000e+00> : vector<256x256xf32>
    %121 = tpu.matmul %116, %118, %cst_49 {dimension_numbers = #tpu.dot_dimension_numbers<[1], [0], [0], [1], [0, 0, 1, 1], [], []>} : vector<256x8xbf16>, vector<8x256xbf16>, vector<256x256xf32> -> vector<256x256xf32>
    %cst_50 = arith.constant dense<0xFF800000> : vector<256xf32>
    %122 = vector.multi_reduction <maximumf>, %121, %cst_50 [1] : vector<256x256xf32> to vector<256xf32>
    %123 = vector.shape_cast %122 : vector<256xf32> to vector<256x1xf32>
    %124 = vector.broadcast %123 : vector<256x1xf32> to vector<256x256xf32>
    %125 = arith.subf %121, %124 : vector<256x256xf32>
    %126 = math.exp %125 : vector<256x256xf32>
    %cst_51 = arith.constant dense<0.000000e+00> : vector<256xf32>
    %127 = vector.multi_reduction <add>, %126, %cst_51 [1] : vector<256x256xf32> to vector<256xf32>
    %128 = vector.shape_cast %127 : vector<256xf32> to vector<256x1xf32>
    %129 = tpu.reciprocal %128 {approx = true} : vector<256x1xf32> -> vector<256x1xf32>
    %130 = vector.broadcast %129 : vector<256x1xf32> to vector<256x256xf32>
    %131 = arith.mulf %126, %130 : vector<256x256xf32>
    %132 = arith.truncf %119 : vector<32x256xf32> to vector<32x256xbf16>
    %133 = arith.truncf %131 : vector<256x256xf32> to vector<256x256xbf16>
    %cst_52 = arith.constant dense<0.000000e+00> : vector<32x256xf32>
    %134 = tpu.matmul %132, %133, %cst_52 {dimension_numbers = #tpu.dot_dimension_numbers<[1], [1], [0], [0], [0, 0, 1, 0], [], []>} : vector<32x256xbf16>, vector<256x256xbf16>, vector<32x256xf32> -> vector<32x256xf32>
    %135 = vector.broadcast %42 : f32 to vector<32x256xf32>
    %136 = arith.mulf %135, %134 : vector<32x256xf32>
    %137 = arith.addf %136, %120 : vector<32x256xf32>
    %c1 = arith.constant 1 : index
    %c0_53 = arith.constant 0 : index
    %c0_54 = arith.constant 0 : index
    %c0_55 = arith.constant 0 : index
    %138 = vector.load %arg6[%c1, %c0_53, %c0_54, %c0_55] : memref<2x1x32x256xf32, #tpu.memory_space<vmem>>, vector<1x1x32x256xf32>
    %139 = vector.shape_cast %138 : vector<1x1x32x256xf32> to vector<32x256xf32>
    %140 = vector.shape_cast %137 : vector<32x256xf32> to vector<1x1x32x256xf32>
    tpu.vector_store %arg6[%c1, %c0_53, %c0_54, %c0_55], %140 {strides = array<i32>} : memref<2x1x32x256xf32, #tpu.memory_space<vmem>>, vector<1x1x32x256xf32>,
    %141 = arith.truncf %137 : vector<32x256xf32> to vector<32x256xbf16>
    %cst_56 = arith.constant 0.000000e+00 : bf16
    %142 = vector.broadcast %cst_56 : bf16 to vector<32x256xbf16>
    %c0_i32_57 = arith.constant 0 : i32
    %143 = vector.broadcast %c0_i32_57 : i32 to vector<32x256xi32>
    %144 = arith.cmpi eq, %45, %143 : vector<32x256xi32>
    %145 = arith.select %144, %142, %141 : vector<32x256xi1>, vector<32x256xbf16>
    %c15_i32_58 = arith.constant 15 : i32
    %146 = vector.broadcast %c15_i32_58 : i32 to vector<32x256xi32>
    %147 = arith.cmpi eq, %45, %146 : vector<32x256xi32>
    %148 = arith.select %147, %142, %141 : vector<32x256xi1>, vector<32x256xbf16>
    %cst_59 = arith.constant 0.000000e+00 : bf16
    %149 = vector.broadcast %cst_59 : bf16 to vector<32x17xbf16>
    %150 = vector.extract_strided_slice %148 {offsets = [0, 0], sizes = [32, 239], strides = [1, 1]} : vector<32x256xbf16> to vector<32x239xbf16>
    %151 = tpu.concatenate %149, %150 in 1 : vector<32x17xbf16>, vector<32x239xbf16> -> vector<32x256xbf16>
    %c0_60 = arith.constant 0 : index
    %c256_61 = arith.constant 256 : index
    %152 = vector.load %arg7[%c0_60, %c256_61] : memref<288x512xbf16, #tpu.memory_space<vmem>>, vector<32x256xbf16>
    tpu.vector_store %arg7[%c0_60, %c256_61], %151 {strides = array<i32>} : memref<288x512xbf16, #tpu.memory_space<vmem>>, vector<32x256xbf16>,
    %cst_62 = arith.constant 0.000000e+00 : bf16
    %153 = vector.broadcast %cst_62 : bf16 to vector<32x16xbf16>
    %154 = vector.extract_strided_slice %141 {offsets = [0, 0], sizes = [32, 240], strides = [1, 1]} : vector<32x256xbf16> to vector<32x240xbf16>
    %155 = tpu.concatenate %153, %154 in 1 : vector<32x16xbf16>, vector<32x240xbf16> -> vector<32x256xbf16>
    %c32_63 = arith.constant 32 : index
    %c256_64 = arith.constant 256 : index
    %156 = vector.load %arg7[%c32_63, %c256_64] : memref<288x512xbf16, #tpu.memory_space<vmem>>, vector<32x256xbf16>
    tpu.vector_store %arg7[%c32_63, %c256_64], %155 {strides = array<i32>} : memref<288x512xbf16, #tpu.memory_space<vmem>>, vector<32x256xbf16>,
    %cst_65 = arith.constant 0.000000e+00 : bf16
    %157 = vector.broadcast %cst_65 : bf16 to vector<32x15xbf16>
    %158 = vector.extract_strided_slice %145 {offsets = [0, 0], sizes = [32, 241], strides = [1, 1]} : vector<32x256xbf16> to vector<32x241xbf16>
    %159 = tpu.concatenate %157, %158 in 1 : vector<32x15xbf16>, vector<32x241xbf16> -> vector<32x256xbf16>
    %c64_66 = arith.constant 64 : index
    %c256_67 = arith.constant 256 : index
    %160 = vector.load %arg7[%c64_66, %c256_67] : memref<288x512xbf16, #tpu.memory_space<vmem>>, vector<32x256xbf16>
    tpu.vector_store %arg7[%c64_66, %c256_67], %159 {strides = array<i32>} : memref<288x512xbf16, #tpu.memory_space<vmem>>, vector<32x256xbf16>,
    %cst_68 = arith.constant 0.000000e+00 : bf16
    %161 = vector.broadcast %cst_68 : bf16 to vector<32x1xbf16>
    %162 = vector.extract_strided_slice %148 {offsets = [0, 0], sizes = [32, 255], strides = [1, 1]} : vector<32x256xbf16> to vector<32x255xbf16>
    %163 = tpu.concatenate %161, %162 in 1 : vector<32x1xbf16>, vector<32x255xbf16> -> vector<32x256xbf16>
    %c96_69 = arith.constant 96 : index
    %c256_70 = arith.constant 256 : index
    %164 = vector.load %arg7[%c96_69, %c256_70] : memref<288x512xbf16, #tpu.memory_space<vmem>>, vector<32x256xbf16>
    tpu.vector_store %arg7[%c96_69, %c256_70], %163 {strides = array<i32>} : memref<288x512xbf16, #tpu.memory_space<vmem>>, vector<32x256xbf16>,
    %c128_71 = arith.constant 128 : index
    %c256_72 = arith.constant 256 : index
    %165 = vector.load %arg7[%c128_71, %c256_72] : memref<288x512xbf16, #tpu.memory_space<vmem>>, vector<32x256xbf16>
    tpu.vector_store %arg7[%c128_71, %c256_72], %141 {strides = array<i32>} : memref<288x512xbf16, #tpu.memory_space<vmem>>, vector<32x256xbf16>,
    %cst_73 = arith.constant 0.000000e+00 : bf16
    %166 = vector.broadcast %cst_73 : bf16 to vector<32x1xbf16>
    %167 = vector.extract_strided_slice %145 {offsets = [0, 1], sizes = [32, 255], strides = [1, 1]} : vector<32x256xbf16> to vector<32x255xbf16>
    %168 = tpu.concatenate %167, %166 in 1 : vector<32x255xbf16>, vector<32x1xbf16> -> vector<32x256xbf16>
    %c160_74 = arith.constant 160 : index
    %c256_75 = arith.constant 256 : index
    %169 = vector.load %arg7[%c160_74, %c256_75] : memref<288x512xbf16, #tpu.memory_space<vmem>>, vector<32x256xbf16>
    tpu.vector_store %arg7[%c160_74, %c256_75], %168 {strides = array<i32>} : memref<288x512xbf16, #tpu.memory_space<vmem>>, vector<32x256xbf16>,
    %cst_76 = arith.constant 0.000000e+00 : bf16
    %170 = vector.broadcast %cst_76 : bf16 to vector<32x15xbf16>
    %171 = vector.extract_strided_slice %148 {offsets = [0, 15], sizes = [32, 241], strides = [1, 1]} : vector<32x256xbf16> to vector<32x241xbf16>
    %172 = tpu.concatenate %171, %170 in 1 : vector<32x241xbf16>, vector<32x15xbf16> -> vector<32x256xbf16>
    %c192_77 = arith.constant 192 : index
    %c256_78 = arith.constant 256 : index
    %173 = vector.load %arg7[%c192_77, %c256_78] : memref<288x512xbf16, #tpu.memory_space<vmem>>, vector<32x256xbf16>
    tpu.vector_store %arg7[%c192_77, %c256_78], %172 {strides = array<i32>} : memref<288x512xbf16, #tpu.memory_space<vmem>>, vector<32x256xbf16>,
    %cst_79 = arith.constant 0.000000e+00 : bf16
    %174 = vector.broadcast %cst_79 : bf16 to vector<32x16xbf16>
    %175 = vector.extract_strided_slice %141 {offsets = [0, 16], sizes = [32, 240], strides = [1, 1]} : vector<32x256xbf16> to vector<32x240xbf16>
    %176 = tpu.concatenate %175, %174 in 1 : vector<32x240xbf16>, vector<32x16xbf16> -> vector<32x256xbf16>
    %c224_80 = arith.constant 224 : index
    %c256_81 = arith.constant 256 : index
    %177 = vector.load %arg7[%c224_80, %c256_81] : memref<288x512xbf16, #tpu.memory_space<vmem>>, vector<32x256xbf16>
    tpu.vector_store %arg7[%c224_80, %c256_81], %176 {strides = array<i32>} : memref<288x512xbf16, #tpu.memory_space<vmem>>, vector<32x256xbf16>,
    %cst_82 = arith.constant 0.000000e+00 : bf16
    %178 = vector.broadcast %cst_82 : bf16 to vector<32x17xbf16>
    %179 = vector.extract_strided_slice %145 {offsets = [0, 17], sizes = [32, 239], strides = [1, 1]} : vector<32x256xbf16> to vector<32x239xbf16>
    %180 = tpu.concatenate %179, %178 in 1 : vector<32x239xbf16>, vector<32x17xbf16> -> vector<32x256xbf16>
    %c256_83 = arith.constant 256 : index
    %c256_84 = arith.constant 256 : index
    %181 = vector.load %arg7[%c256_83, %c256_84] : memref<288x512xbf16, #tpu.memory_space<vmem>>, vector<32x256xbf16>
    tpu.vector_store %arg7[%c256_83, %c256_84], %180 {strides = array<i32>} : memref<288x512xbf16, #tpu.memory_space<vmem>>, vector<32x256xbf16>,
    return
  }
  func.func @transform_0(%arg0: i32) -> (i32, i32, i32) {
    %c0_i32 = arith.constant 0 : i32
    %c0_i32_0 = arith.constant 0 : i32
    %c0_i32_1 = arith.constant 0 : i32
    return %arg0, %c0_i32, %c0_i32_0 : i32, i32, i32
  }
  func.func @transform_1(%arg0: i32) -> (i32, i32) {
    %c0_i32 = arith.constant 0 : i32
    %c0_i32_0 = arith.constant 0 : i32
    %c0_i32_1 = arith.constant 0 : i32
    return %c0_i32, %c0_i32_0 : i32, i32
  }
  func.func @transform_2(%arg0: i32) -> (i32, i32) {
    %c0_i32 = arith.constant 0 : i32
    %c0_i32_0 = arith.constant 0 : i32
    %c0_i32_1 = arith.constant 0 : i32
    return %c0_i32, %c0_i32_0 : i32, i32
  }
  func.func @transform_3(%arg0: i32) -> (i32, i32) {
    %c0_i32 = arith.constant 0 : i32
    %c0_i32_0 = arith.constant 0 : i32
    %c0_i32_1 = arith.constant 0 : i32
    return %c0_i32, %c0_i32_0 : i32, i32
  }
  func.func @transform_4(%arg0: i32) -> i32 {
    %c0_i32 = arith.constant 0 : i32
    %c0_i32_0 = arith.constant 0 : i32
    return %c0_i32 : i32
  }
  func.func @transform_5(%arg0: i32) -> (i32, i32, i32, i32) {
    %c0_i32 = arith.constant 0 : i32
    %c0_i32_0 = arith.constant 0 : i32
    %c0_i32_1 = arith.constant 0 : i32
    %c0_i32_2 = arith.constant 0 : i32
    return %c0_i32, %arg0, %c0_i32_0, %c0_i32_1 : i32, i32, i32, i32
  }
}

</mosaic_0001>

<llo_original>
// kernel: aclstm_forward.1
$region0: #{aclstm_forward.1}
  #allocation0 [shape = 'u32[]', space=smem, size = 0x4, offset = 0x4, fixed_abs, tag = 'smem constant byte address 0x4 - core index']
  #allocation1 [shape = 'u32[144,128]{1,0:T(1,128)}', space=vmem, size = 0x12000, scoped, tag = 'internal scratch']
  #allocation2 [shape = 'bf16[288,512]{1,0:T(16,128)(2,1)}', space=vmem, size = 0x48000, scoped, tag = 'scratch operand']
  #allocation3 [shape = 'f32[32,512]{1,0:T(8,128)}', space=vmem, size = 0x10000, scoped, tag = 'scratch operand']
  #allocation4 [shape = 'f32[1]{0:T(128)S(6)}', space=smem, size = 0x200, scoped, tag = 'scoped memory for aclstm_forward.1']
  %s0 = inlined_call_operand.vmem [shape: f32[4,128,512], index: 0, kind: input, shape index: {}]
  %s1 = inlined_call_operand.vmem [shape: bf16[128,288], index: 1, kind: input, shape index: {}]
  %s2 = inlined_call_operand.vmem [shape: bf16[48,32], index: 2, kind: input, shape index: {}]
  %s3 = inlined_call_operand.vmem [shape: f32[48,1], index: 3, kind: input, shape index: {}]
  %s4 = inlined_call_operand.<no memory space> [shape: f32[1], index: 4, kind: input, shape index: {}]
  %s5 = inlined_call_operand.vmem [shape: f32[2,4,32,256], index: 5, kind: output, shape index: {}]
  %s6 = sld [smem:[#allocation0]]
  $region76: #{aclstm_forward.1} parent=0
    _
  %s8 = ssub.s32 1, %s6
  %s9 = scalar_select 0, %s8, %s6
  %10 = sst [smem:[#allocation4]] %s4
  $region1: #{aclstm_forward.1} parent=0
    #allocation5 [shape = 'u8[131072]{0}', space=vmem, size = 0x20000, scoped, tag = 'output window, operand 0']
    loop: start=0, step=1, limit=6
    $region2: #{aclstm_forward.1} parent=1 // loop_pre_header
      _
    $region3: #{aclstm_forward.1} parent=1 // loop_header
      %s12 = sphi 0, %s16
      %p13 = scmp.ge.s32.totalorder %s12, 6
      %s22 = sphi 0, %s24
      %s25 = sphi 0, %s22
      %s26 = sphi 0, %s25
      %s42 = sphi 0, %s26
      %s46 = sphi 0, %s46
      %s48 = sphi 0, %s46
      %s49 = sphi 0, %s48
      %s63 = sphi 0, %s49
      %s67 = sphi 0, %s67
      %s69 = sphi 0, %s67
      %s70 = sphi 0, %s69
      %s84 = sphi 0, %s70
      %s88 = sphi 0, %s88
      %s90 = sphi 0, %s88
      %s91 = sphi 0, %s90
      %s105 = sphi 0, %s91
      %s109 = sphi 0, %s109
      %s111 = sphi 0, %s109
      %s112 = sphi 0, %s111
      %s126 = sphi 0, %s112
      %s132 = sphi 0, %s134
      %s135 = sphi 0, %s132
      %s136 = sphi 0, %s135
      %s152 = sphi 0, %s136
    $region4: #{aclstm_forward.1} parent=1 // loop_header_branch
      %15 = sbr.rel (%p13) target = $region8
    $region5: #{aclstm_forward.1} parent=1 // loop_body
      %s17 = ssub.s32 %s12, 1
      %s18 = ssub.s32 %s12, 2
      %s19 = sadd.s32 %s12, 1
      %s20 = ssub.s32 %s12, %s19
      %p21 = scmp.eq.s32.totalorder %s20, 0
      %s23 = sadd.s32 %s22, 1
      %s24 = scalar_select %p21, %s22, %s23
      %p27 = pneg %p21
      %p28 = scmp.eq.s32.totalorder %s12, 3
      %p29 = por %p27, %p28
      %p30 = scmp.ne.s32.totalorder %s22, %s25
      %p31 = scmp.eq.s32.totalorder %s12, 0
      %p32 = por %p30, %p31
      %p33 = scmp.ne.s32.totalorder %s22, %s25
      %p34 = scmp.eq.s32.totalorder %s17, 3
      %p35 = por %p33, %p34
      %p36 = scmp.ne.s32.totalorder %s25, %s26
      %p37 = scmp.eq.s32.totalorder %s17, 0
      %p38 = por %p36, %p37
      %p39 = scmp.ne.s32.totalorder %s25, %s26
      %p40 = scmp.eq.s32.totalorder %s18, 3
      %p41 = por %p39, %p40
      %p43 = scmp.ne.s32.totalorder %s26, %s42
      %p44 = scmp.eq.s32.totalorder %s18, 0
      %p45 = por %p43, %p44
      %s47 = sadd.s32 %s46, 1
      %p50 = scmp.eq.s32.totalorder %s12, 3
      %p51 = scmp.ne.s32.totalorder %s46, %s48
      %p52 = scmp.eq.s32.totalorder %s12, 0
      %p53 = por %p51, %p52
      %p54 = scmp.ne.s32.totalorder %s46, %s48
      %p55 = scmp.eq.s32.totalorder %s17, 3
      %p56 = por %p54, %p55
      %p57 = scmp.ne.s32.totalorder %s48, %s49
      %p58 = scmp.eq.s32.totalorder %s17, 0
      %p59 = por %p57, %p58
      %p60 = scmp.ne.s32.totalorder %s48, %s49
      %p61 = scmp.eq.s32.totalorder %s18, 3
      %p62 = por %p60, %p61
      %p64 = scmp.ne.s32.totalorder %s49, %s63
      %p65 = scmp.eq.s32.totalorder %s18, 0
      %p66 = por %p64, %p65
      %s68 = sadd.s32 %s67, 1
      %p71 = scmp.eq.s32.totalorder %s12, 3
      %p72 = scmp.ne.s32.totalorder %s67, %s69
      %p73 = scmp.eq.s32.totalorder %s12, 0
      %p74 = por %p72, %p73
      %p75 = scmp.ne.s32.totalorder %s67, %s69
      %p76 = scmp.eq.s32.totalorder %s17, 3
      %p77 = por %p75, %p76
      %p78 = scmp.ne.s32.totalorder %s69, %s70
      %p79 = scmp.eq.s32.totalorder %s17, 0
      %p80 = por %p78, %p79
      %p81 = scmp.ne.s32.totalorder %s69, %s70
      %p82 = scmp.eq.s32.totalorder %s18, 3
      %p83 = por %p81, %p82
      %p85 = scmp.ne.s32.totalorder %s70, %s84
      %p86 = scmp.eq.s32.totalorder %s18, 0
      %p87 = por %p85, %p86
      %s89 = sadd.s32 %s88, 1
      %p92 = scmp.eq.s32.totalorder %s12, 3
      %p93 = scmp.ne.s32.totalorder %s88, %s90
      %p94 = scmp.eq.s32.totalorder %s12, 0
      %p95 = por %p93, %p94
      %p96 = scmp.ne.s32.totalorder %s88, %s90
      %p97 = scmp.eq.s32.totalorder %s17, 3
      %p98 = por %p96, %p97
      %p99 = scmp.ne.s32.totalorder %s90, %s91
      %p100 = scmp.eq.s32.totalorder %s17, 0
      %p101 = por %p99, %p100
      %p102 = scmp.ne.s32.totalorder %s90, %s91
      %p103 = scmp.eq.s32.totalorder %s18, 3
      %p104 = por %p102, %p103
      %p106 = scmp.ne.s32.totalorder %s91, %s105
      %p107 = scmp.eq.s32.totalorder %s18, 0
      %p108 = por %p106, %p107
      %s110 = sadd.s32 %s109, 1
      %p113 = scmp.eq.s32.totalorder %s12, 3
      %p114 = scmp.ne.s32.totalorder %s109, %s111
      %p115 = scmp.eq.s32.totalorder %s12, 0
      %p116 = por %p114, %p115
      %p117 = scmp.ne.s32.totalorder %s109, %s111
      %p118 = scmp.eq.s32.totalorder %s17, 3
      %p119 = por %p117, %p118
      %p120 = scmp.ne.s32.totalorder %s111, %s112
      %p121 = scmp.eq.s32.totalorder %s17, 0
      %p122 = por %p120, %p121
      %p123 = scmp.ne.s32.totalorder %s111, %s112
      %p124 = scmp.eq.s32.totalorder %s18, 3
      %p125 = por %p123, %p124
      %p127 = scmp.ne.s32.totalorder %s112, %s126
      %p128 = scmp.eq.s32.totalorder %s18, 0
      %p129 = por %p127, %p128
      %s130 = ssub.s32 %s12, %s19
      %p131 = scmp.eq.s32.totalorder %s130, 0
      %s133 = sadd.s32 %s132, 1
      %s134 = scalar_select %p131, %s132, %s133
      %p137 = pneg %p131
      %p138 = scmp.eq.s32.totalorder %s12, 3
      %p139 = por %p137, %p138
      %p140 = scmp.ne.s32.totalorder %s132, %s135
      %p141 = scmp.eq.s32.totalorder %s12, 0
      %p142 = por %p140, %p141
      %p143 = scmp.ne.s32.totalorder %s132, %s135
      %p144 = scmp.eq.s32.totalorder %s17, 3
      %p145 = por %p143, %p144
      %p146 = scmp.ne.s32.totalorder %s135, %s136
      %p147 = scmp.eq.s32.totalorder %s17, 0
      %p148 = por %p146, %p147
      %p149 = scmp.ne.s32.totalorder %s135, %s136
      %p150 = scmp.eq.s32.totalorder %s18, 3
      %p151 = por %p149, %p150
      %p153 = scmp.ne.s32.totalorder %s136, %s152
      %p154 = scmp.eq.s32.totalorder %s18, 0
      %p155 = por %p153, %p154
      %p156 = scmp.le.s32.totalorder 1, %s12
      %p157 = scmp.lt.s32.totalorder %s12, 5
      %p158 = pnand %p156, %p157
      %p159 = pneg %p158
      // Predicated region
      $region9: #{aclstm_forward.1} parent=5 // pred_check
        _
      $region10: #{aclstm_forward.1} parent=5 // pred_check_branch
        %161 = sbr.rel (%p158) target = $region12
      $region11: #{aclstm_forward.1} parent=5 // pred_region
        %s162 = ssub.s32 %s12, 1
        // Predicated region
        $region13: #{aclstm_forward.1} parent=11 // pred_check
          %p163 = pneg %p59
        $region14: #{aclstm_forward.1} parent=11 // pred_check_branch
          %165 = sbr.rel (%p163) target = $region16
        $region15: #{aclstm_forward.1} parent=11 // pred_region
          _
        $region16: #{aclstm_forward.1} parent=11 // pred_fallthru
          _
        // Predicated region
        $region17: #{aclstm_forward.1} parent=11 // pred_check
          %p166 = pneg %p80
        $region18: #{aclstm_forward.1} parent=11 // pred_check_branch
          %168 = sbr.rel (%p166) target = $region20
        $region19: #{aclstm_forward.1} parent=11 // pred_region
          _
        $region20: #{aclstm_forward.1} parent=11 // pred_fallthru
          _
        // Predicated region
        $region21: #{aclstm_forward.1} parent=11 // pred_check
          %p169 = pneg %p101
        $region22: #{aclstm_forward.1} parent=11 // pred_check_branch
          %171 = sbr.rel (%p169) target = $region24
        $region23: #{aclstm_forward.1} parent=11 // pred_region
          _
        $region24: #{aclstm_forward.1} parent=11 // pred_fallthru
          _
        // Predicated region
        $region25: #{aclstm_forward.1} parent=11 // pred_check
          %p172 = pneg %p122
        $region26: #{aclstm_forward.1} parent=11 // pred_check_branch
          %174 = sbr.rel (%p172) target = $region28
        $region27: #{aclstm_forward.1} parent=11 // pred_region
          _
        $region28: #{aclstm_forward.1} parent=11 // pred_fallthru
          _
      $region12: #{aclstm_forward.1} parent=5 // pred_fallthru
        _
      %p175 = scmp.lt.s32.totalorder %s12, 4
      // Predicated region
      $region29: #{aclstm_forward.1} parent=5 // pred_check
        %p176 = pneg %p175
      $region30: #{aclstm_forward.1} parent=5 // pred_check_branch
        %178 = sbr.rel (%p176) target = $region32
      $region31: #{aclstm_forward.1} parent=5 // pred_region
        // Predicated region
        $region33: #{aclstm_forward.1} parent=31 // pred_check
          %p179 = pneg %p32
        $region34: #{aclstm_forward.1} parent=31 // pred_check_branch
          %181 = sbr.rel (%p179) target = $region36
        $region35: #{aclstm_forward.1} parent=31 // pred_region
          %p182 = scmp.lt.s32.totalorder %s12, 3
          %s183 = scalar_select %p182, %s12, 3
          %s184 = smul.addr %s183, 64
          %s185 = smul.addr %s184, 8
          %s186 = scalar_lea.vmem %s0, %s185
        $region36: #{aclstm_forward.1} parent=31 // pred_fallthru
          _
      $region32: #{aclstm_forward.1} parent=5 // pred_fallthru
        _
      %p187 = scmp.le.s32.totalorder 1, %s12
      %p188 = scmp.lt.s32.totalorder %s12, 5
      %p189 = pnand %p187, %p188
      %p190 = pneg %p189
      // Predicated region
      $region37: #{aclstm_forward.1} parent=5 // pred_check
        _
      $region38: #{aclstm_forward.1} parent=5 // pred_check_branch
        %192 = sbr.rel (%p189) target = $region40
      $region39: #{aclstm_forward.1} parent=5 // pred_region
        %s193 = ssub.s32 %s12, 1
        %p194 = scmp.lt.s32.totalorder %s17, 3
        %s195 = scalar_select %p194, %s17, 3
        %s196 = smul.addr %s195, 64
        %s197 = smul.addr %s196, 8
        %s198 = scalar_lea.vmem %s0, %s197
        %p199 = pneg %p38
        %p200 = pneg %p35
        %p201 = pneg %p59
        %p202 = pneg %p56
        %p203 = pneg %p80
        %p204 = pneg %p77
        %p205 = pneg %p101
        %p206 = pneg %p98
        %p207 = pneg %p122
        %p208 = pneg %p119
        %p209 = pneg %p148
        %p210 = pneg %p145
        %s211 = sand.u32 %s135, 1
        %s212 = sand.u32 %s135, 1
        %s213 = smul.addr %s212, 128
        %s214 = scalar_lea.vmem [#allocation5], %s213
        %p215 = scmp.lt.s32.totalorder %s17, 3
        %s216 = scalar_select %p215, %s17, 3
        %s217 = smul.addr %s216, 64
        %s218 = smul.addr %s217, 8
        %s219 = scalar_lea.vmem %s0, %s218
        %p223 = scmp.eq.s32.totalorder %s17, 0
        // Predicated region
        $region41: #{aclstm_forward.1} parent=39 // pred_check
          %p224 = pneg %p223
        $region42: #{aclstm_forward.1} parent=39 // pred_check_branch
          %226 = sbr.rel (%p224) target = $region44
        $region43: #{aclstm_forward.1} parent=39 // pred_region
          %227 = vst [vmem:[#allocation2] sm:$0xff] 0
          %228 = vst [vmem:[#allocation2 + $0x8] sm:$0xff] 0
          %229 = vst [vmem:[#allocation2 + $0x10] sm:$0xff] 0
          %230 = vst [vmem:[#allocation2 + $0x18] sm:$0xff] 0
          %231 = vst [vmem:[#allocation2 + $0x20] sm:$0xff] 0
          %232 = vst [vmem:[#allocation2 + $0x28] sm:$0xff] 0
          %233 = vst [vmem:[#allocation2 + $0x30] sm:$0xff] 0
          %234 = vst [vmem:[#allocation2 + $0x38] sm:$0xff] 0
          %235 = vst [vmem:[#allocation2 + $0x40] sm:$0xff] 0
          %236 = vst [vmem:[#allocation2 + $0x48] sm:$0xff] 0
          %237 = vst [vmem:[#allocation2 + $0x50] sm:$0xff] 0
          %238 = vst [vmem:[#allocation2 + $0x58] sm:$0xff] 0
          %239 = vst [vmem:[#allocation2 + $0x60] sm:$0xff] 0
          %240 = vst [vmem:[#allocation2 + $0x68] sm:$0xff] 0
          %241 = vst [vmem:[#allocation2 + $0x70] sm:$0xff] 0
          %242 = vst [vmem:[#allocation2 + $0x78] sm:$0xff] 0
          %243 = vst [vmem:[#allocation2 + $0x80] sm:$0xff] 0
          %244 = vst [vmem:[#allocation2 + $0x88] sm:$0xff] 0
          %245 = vst [vmem:[#allocation2 + $0x90] sm:$0xff] 0
          %246 = vst [vmem:[#allocation2 + $0x98] sm:$0xff] 0
          %247 = vst [vmem:[#allocation2 + $0xa0] sm:$0xff] 0
          %248 = vst [vmem:[#allocation2 + $0xa8] sm:$0xff] 0
          %249 = vst [vmem:[#allocation2 + $0xb0] sm:$0xff] 0
          %250 = vst [vmem:[#allocation2 + $0xb8] sm:$0xff] 0
          %251 = vst [vmem:[#allocation2 + $0xc0] sm:$0xff] 0
          %252 = vst [vmem:[#allocation2 + $0xc8] sm:$0xff] 0
          %253 = vst [vmem:[#allocation2 + $0xd0] sm:$0xff] 0
          %254 = vst [vmem:[#allocation2 + $0xd8] sm:$0xff] 0
          %255 = vst [vmem:[#allocation2 + $0xe0] sm:$0xff] 0
          %256 = vst [vmem:[#allocation2 + $0xe8] sm:$0xff] 0
          %257 = vst [vmem:[#allocation2 + $0xf0] sm:$0xff] 0
          %258 = vst [vmem:[#allocation2 + $0xf8] sm:$0xff] 0
          %259 = vst [vmem:[#allocation2 + $0x100] sm:$0xff] 0
          %260 = vst [vmem:[#allocation2 + $0x108] sm:$0xff] 0
          %261 = vst [vmem:[#allocation2 + $0x110] sm:$0xff] 0
          %262 = vst [vmem:[#allocation2 + $0x118] sm:$0xff] 0
          %263 = vst [vmem:[#allocation2 + $0x120] sm:$0xff] 0
          %264 = vst [vmem:[#allocation2 + $0x128] sm:$0xff] 0
          %265 = vst [vmem:[#allocation2 + $0x130] sm:$0xff] 0
          %266 = vst [vmem:[#allocation2 + $0x138] sm:$0xff] 0
          %267 = vst [vmem:[#allocation2 + $0x140] sm:$0xff] 0
          %268 = vst [vmem:[#allocation2 + $0x148] sm:$0xff] 0
          %269 = vst [vmem:[#allocation2 + $0x150] sm:$0xff] 0
          %270 = vst [vmem:[#allocation2 + $0x158] sm:$0xff] 0
          %271 = vst [vmem:[#allocation2 + $0x160] sm:$0xff] 0
          %272 = vst [vmem:[#allocation2 + $0x168] sm:$0xff] 0
          %273 = vst [vmem:[#allocation2 + $0x170] sm:$0xff] 0
          %274 = vst [vmem:[#allocation2 + $0x178] sm:$0xff] 0
          %275 = vst [vmem:[#allocation2 + $0x180] sm:$0xff] 0
          %276 = vst [vmem:[#allocation2 + $0x188] sm:$0xff] 0
          %277 = vst [vmem:[#allocation2 + $0x190] sm:$0xff] 0
          %278 = vst [vmem:[#allocation2 + $0x198] sm:$0xff] 0
          %279 = vst [vmem:[#allocation2 + $0x1a0] sm:$0xff] 0
          %280 = vst [vmem:[#allocation2 + $0x1a8] sm:$0xff] 0
          %281 = vst [vmem:[#allocation2 + $0x1b0] sm:$0xff] 0
          %282 = vst [vmem:[#allocation2 + $0x1b8] sm:$0xff] 0
          %283 = vst [vmem:[#allocation2 + $0x1c0] sm:$0xff] 0
          %284 = vst [vmem:[#allocation2 + $0x1c8] sm:$0xff] 0
          %285 = vst [vmem:[#allocation2 + $0x1d0] sm:$0xff] 0
          %286 = vst [vmem:[#allocation2 + $0x1d8] sm:$0xff] 0
          %287 = vst [vmem:[#allocation2 + $0x1e0] sm:$0xff] 0
          %288 = vst [vmem:[#allocation2 + $0x1e8] sm:$0xff] 0
          %289 = vst [vmem:[#allocation2 + $0x1f0] sm:$0xff] 0
          %290 = vst [vmem:[#allocation2 + $0x1f8] sm:$0xff] 0
          %291 = vst [vmem:[#allocation2 + $0x200] sm:$0xff] 0
          %292 = vst [vmem:[#allocation2 + $0x208] sm:$0xff] 0
          %293 = vst [vmem:[#allocation2 + $0x210] sm:$0xff] 0
          %294 = vst [vmem:[#allocation2 + $0x218] sm:$0xff] 0
          %295 = vst [vmem:[#allocation2 + $0x220] sm:$0xff] 0
          %296 = vst [vmem:[#allocation2 + $0x228] sm:$0xff] 0
          %297 = vst [vmem:[#allocation2 + $0x230] sm:$0xff] 0
          %298 = vst [vmem:[#allocation2 + $0x238] sm:$0xff] 0
          %299 = vst [vmem:[#allocation3] sm:$0xff] 0.0
          %300 = vst [vmem:[#allocation3 + $0x8] sm:$0xff] 0.0
          %301 = vst [vmem:[#allocation3 + $0x10] sm:$0xff] 0.0
          %302 = vst [vmem:[#allocation3 + $0x18] sm:$0xff] 0.0
          %303 = vst [vmem:[#allocation3 + $0x20] sm:$0xff] 0.0
          %304 = vst [vmem:[#allocation3 + $0x28] sm:$0xff] 0.0
          %305 = vst [vmem:[#allocation3 + $0x30] sm:$0xff] 0.0
          %306 = vst [vmem:[#allocation3 + $0x38] sm:$0xff] 0.0
          %307 = vst [vmem:[#allocation3 + $0x40] sm:$0xff] 0.0
          %308 = vst [vmem:[#allocation3 + $0x48] sm:$0xff] 0.0
          %309 = vst [vmem:[#allocation3 + $0x50] sm:$0xff] 0.0
          %310 = vst [vmem:[#allocation3 + $0x58] sm:$0xff] 0.0
          %311 = vst [vmem:[#allocation3 + $0x60] sm:$0xff] 0.0
          %312 = vst [vmem:[#allocation3 + $0x68] sm:$0xff] 0.0
          %313 = vst [vmem:[#allocation3 + $0x70] sm:$0xff] 0.0
          %314 = vst [vmem:[#allocation3 + $0x78] sm:$0xff] 0.0
        $region44: #{aclstm_forward.1} parent=39 // pred_fallthru
          _
        %v315 = vld [vmem:[%s219] sm:$0xff]
        %v316 = vld [vmem:[%s219 + $0x8] sm:$0xff]
        %v317 = vld [vmem:[%s219 + $0x10] sm:$0xff]
        %v318 = vld [vmem:[%s219 + $0x18] sm:$0xff]
        %v319 = vld [vmem:[%s219 + $0x20] sm:$0xff]
        %v320 = vld [vmem:[%s219 + $0x28] sm:$0xff]
        %v321 = vld [vmem:[%s219 + $0x30] sm:$0xff]
        %v322 = vld [vmem:[%s219 + $0x38] sm:$0xff]
        %v323 = vld [vmem:[%s219 + $0x40] sm:$0xff]
        %v324 = vld [vmem:[%s219 + $0x48] sm:$0xff]
        %v325 = vld [vmem:[%s219 + $0x50] sm:$0xff]
        %v326 = vld [vmem:[%s219 + $0x58] sm:$0xff]
        %v327 = vld [vmem:[%s219 + $0x60] sm:$0xff]
        %v328 = vld [vmem:[%s219 + $0x68] sm:$0xff]
        %v329 = vld [vmem:[%s219 + $0x70] sm:$0xff]
        %v330 = vld [vmem:[%s219 + $0x78] sm:$0xff]
        %v331 = vld [vmem:[%s219 + $0x80] sm:$0xff]
        %v332 = vld [vmem:[%s219 + $0x88] sm:$0xff]
        %v333 = vld [vmem:[%s219 + $0x90] sm:$0xff]
        %v334 = vld [vmem:[%s219 + $0x98] sm:$0xff]
        %v335 = vld [vmem:[%s219 + $0xa0] sm:$0xff]
        %v336 = vld [vmem:[%s219 + $0xa8] sm:$0xff]
        %v337 = vld [vmem:[%s219 + $0xb0] sm:$0xff]
        %v338 = vld [vmem:[%s219 + $0xb8] sm:$0xff]
        %v339 = vld [vmem:[%s219 + $0xc0] sm:$0xff]
        %v340 = vld [vmem:[%s219 + $0xc8] sm:$0xff]
        %v341 = vld [vmem:[%s219 + $0xd0] sm:$0xff]
        %v342 = vld [vmem:[%s219 + $0xd8] sm:$0xff]
        %v343 = vld [vmem:[%s219 + $0xe0] sm:$0xff]
        %v344 = vld [vmem:[%s219 + $0xe8] sm:$0xff]
        %v345 = vld [vmem:[%s219 + $0xf0] sm:$0xff]
        %v346 = vld [vmem:[%s219 + $0xf8] sm:$0xff]
        %v347 = vld [vmem:[%s219 + $0x100] sm:$0xff]
        %v348 = vld [vmem:[%s219 + $0x108] sm:$0xff]
        %v349 = vld [vmem:[%s219 + $0x110] sm:$0xff]
        %v350 = vld [vmem:[%s219 + $0x118] sm:$0xff]
        %v351 = vld [vmem:[%s219 + $0x120] sm:$0xff]
        %v352 = vld [vmem:[%s219 + $0x128] sm:$0xff]
        %v353 = vld [vmem:[%s219 + $0x130] sm:$0xff]
        %v354 = vld [vmem:[%s219 + $0x138] sm:$0xff]
        %v355 = vld [vmem:[%s219 + $0x140] sm:$0xff]
        %v356 = vld [vmem:[%s219 + $0x148] sm:$0xff]
        %v357 = vld [vmem:[%s219 + $0x150] sm:$0xff]
        %v358 = vld [vmem:[%s219 + $0x158] sm:$0xff]
        %v359 = vld [vmem:[%s219 + $0x160] sm:$0xff]
        %v360 = vld [vmem:[%s219 + $0x168] sm:$0xff]
        %v361 = vld [vmem:[%s219 + $0x170] sm:$0xff]
        %v362 = vld [vmem:[%s219 + $0x178] sm:$0xff]
        %v363 = vld [vmem:[%s219 + $0x180] sm:$0xff]
        %v364 = vld [vmem:[%s219 + $0x188] sm:$0xff]
        %v365 = vld [vmem:[%s219 + $0x190] sm:$0xff]
        %v366 = vld [vmem:[%s219 + $0x198] sm:$0xff]
        %v367 = vld [vmem:[%s219 + $0x1a0] sm:$0xff]
        %v368 = vld [vmem:[%s219 + $0x1a8] sm:$0xff]
        %v369 = vld [vmem:[%s219 + $0x1b0] sm:$0xff]
        %v370 = vld [vmem:[%s219 + $0x1b8] sm:$0xff]
        %v371 = vld [vmem:[%s219 + $0x1c0] sm:$0xff]
        %v372 = vld [vmem:[%s219 + $0x1c8] sm:$0xff]
        %v373 = vld [vmem:[%s219 + $0x1d0] sm:$0xff]
        %v374 = vld [vmem:[%s219 + $0x1d8] sm:$0xff]
        %v375 = vld [vmem:[%s219 + $0x1e0] sm:$0xff]
        %v376 = vld [vmem:[%s219 + $0x1e8] sm:$0xff]
        %v377 = vld [vmem:[%s219 + $0x1f0] sm:$0xff]
        %v378 = vld [vmem:[%s219 + $0x1f8] sm:$0xff]
        %v379 = vld [vmem:[%s1] sm:$0xff]
        %v380 = vld [vmem:[%s1 + $0x8] sm:$0xf]
        %v381 = vld [vmem:[%s1 + $0xc] sm:$0xff]
        %v382 = vld [vmem:[%s1 + $0x14] sm:$0xf]
        %v383 = vld [vmem:[%s1 + $0x18] sm:$0xff]
        %v384 = vld [vmem:[%s1 + $0x20] sm:$0xf]
        %v385 = vld [vmem:[%s1 + $0x24] sm:$0xff]
        %v386 = vld [vmem:[%s1 + $0x2c] sm:$0xf]
        %v387 = vld [vmem:[%s1 + $0x30] sm:$0xff]
        %v388 = vld [vmem:[%s1 + $0x38] sm:$0xf]
        %v389 = vld [vmem:[%s1 + $0x3c] sm:$0xff]
        %v390 = vld [vmem:[%s1 + $0x44] sm:$0xf]
        %v391 = vld [vmem:[%s1 + $0x48] sm:$0xff]
        %v392 = vld [vmem:[%s1 + $0x50] sm:$0xf]
        %v393 = vld [vmem:[%s1 + $0x54] sm:$0xff]
        %v394 = vld [vmem:[%s1 + $0x5c] sm:$0xf]
        %v395 = vld [vmem:[%s1 + $0x60] sm:$0xff]
        %v396 = vld [vmem:[%s1 + $0x68] sm:$0xf]
        %v397 = vld [vmem:[%s1 + $0x6c] sm:$0xff]
        %v398 = vld [vmem:[%s1 + $0x74] sm:$0xf]
        %v399 = vld [vmem:[%s1 + $0x78] sm:$0xff]
        %v400 = vld [vmem:[%s1 + $0x80] sm:$0xf]
        %v401 = vld [vmem:[%s1 + $0x84] sm:$0xff]
        %v402 = vld [vmem:[%s1 + $0x8c] sm:$0xf]
        %v403 = vld [vmem:[%s1 + $0x90] sm:$0xff]
        %v404 = vld [vmem:[%s1 + $0x98] sm:$0xf]
        %v405 = vld [vmem:[%s1 + $0x9c] sm:$0xff]
        %v406 = vld [vmem:[%s1 + $0xa4] sm:$0xf]
        %v407 = vld [vmem:[%s1 + $0xa8] sm:$0xff]
        %v408 = vld [vmem:[%s1 + $0xb0] sm:$0xf]
        %v409 = vld [vmem:[%s1 + $0xb4] sm:$0xff]
        %v410 = vld [vmem:[%s1 + $0xbc] sm:$0xf]
        %v411 = vld [vmem:[#allocation2] sm:$0xff]
        %v412 = vld [vmem:[#allocation2 + $0x8] sm:$0xff]
        %v413 = vld [vmem:[#allocation2 + $0x10] sm:$0xff]
        %v414 = vld [vmem:[#allocation2 + $0x18] sm:$0xff]
        %v415 = vld [vmem:[#allocation2 + $0x20] sm:$0xff]
        %v416 = vld [vmem:[#allocation2 + $0x28] sm:$0xff]
        %v417 = vld [vmem:[#allocation2 + $0x30] sm:$0xff]
        %v418 = vld [vmem:[#allocation2 + $0x38] sm:$0xff]
        %v419 = vld [vmem:[#allocation2 + $0x40] sm:$0xff]
        %v420 = vld [vmem:[#allocation2 + $0x48] sm:$0xff]
        %v421 = vld [vmem:[#allocation2 + $0x50] sm:$0xff]
        %v422 = vld [vmem:[#allocation2 + $0x58] sm:$0xff]
        %v423 = vld [vmem:[#allocation2 + $0x60] sm:$0xff]
        %v424 = vld [vmem:[#allocation2 + $0x68] sm:$0xff]
        %v425 = vld [vmem:[#allocation2 + $0x70] sm:$0xff]
        %v426 = vld [vmem:[#allocation2 + $0x78] sm:$0xff]
        %v427 = vld [vmem:[#allocation2 + $0x80] sm:$0xff]
        %v428 = vld [vmem:[#allocation2 + $0x88] sm:$0xff]
        %v429 = vld [vmem:[#allocation2 + $0x90] sm:$0xff]
        %v430 = vld [vmem:[#allocation2 + $0x98] sm:$0xff]
        %v431 = vld [vmem:[#allocation2 + $0xa0] sm:$0xff]
        %v432 = vld [vmem:[#allocation2 + $0xa8] sm:$0xff]
        %v433 = vld [vmem:[#allocation2 + $0xb0] sm:$0xff]
        %v434 = vld [vmem:[#allocation2 + $0xb8] sm:$0xff]
        %v435 = vld [vmem:[#allocation2 + $0xc0] sm:$0xff]
        %v436 = vld [vmem:[#allocation2 + $0xc8] sm:$0xff]
        %v437 = vld [vmem:[#allocation2 + $0xd0] sm:$0xff]
        %v438 = vld [vmem:[#allocation2 + $0xd8] sm:$0xff]
        %v439 = vld [vmem:[#allocation2 + $0xe0] sm:$0xff]
        %v440 = vld [vmem:[#allocation2 + $0xe8] sm:$0xff]
        %v441 = vld [vmem:[#allocation2 + $0xf0] sm:$0xff]
        %v442 = vld [vmem:[#allocation2 + $0xf8] sm:$0xff]
        %v443 = vld [vmem:[#allocation2 + $0x100] sm:$0xff]
        %v444 = vld [vmem:[#allocation2 + $0x108] sm:$0xff]
        %v445 = vld [vmem:[#allocation2 + $0x110] sm:$0xff]
        %v446 = vld [vmem:[#allocation2 + $0x118] sm:$0xff]
        %v447 = vld [vmem:[#allocation2 + $0x120] sm:$0xff]
        %v448 = vld [vmem:[#allocation2 + $0x128] sm:$0xff]
        %v449 = vld [vmem:[#allocation2 + $0x130] sm:$0xff]
        %v450 = vld [vmem:[#allocation2 + $0x138] sm:$0xff]
        %v451 = vld [vmem:[#allocation2 + $0x140] sm:$0xff]
        %v452 = vld [vmem:[#allocation2 + $0x148] sm:$0xff]
        %v453 = vld [vmem:[#allocation2 + $0x150] sm:$0xff]
        %v454 = vld [vmem:[#allocation2 + $0x158] sm:$0xff]
        %v455 = vld [vmem:[#allocation2 + $0x160] sm:$0xff]
        %v456 = vld [vmem:[#allocation2 + $0x168] sm:$0xff]
        %v457 = vld [vmem:[#allocation2 + $0x170] sm:$0xff]
        %v458 = vld [vmem:[#allocation2 + $0x178] sm:$0xff]
        %v459 = vld [vmem:[#allocation2 + $0x180] sm:$0xff]
        %v460 = vld [vmem:[#allocation2 + $0x188] sm:$0xff]
        %v461 = vld [vmem:[#allocation2 + $0x190] sm:$0xff]
        %v462 = vld [vmem:[#allocation2 + $0x198] sm:$0xff]
        %v463 = vld [vmem:[#allocation2 + $0x1a0] sm:$0xff]
        %v464 = vld [vmem:[#allocation2 + $0x1a8] sm:$0xff]
        %v465 = vld [vmem:[#allocation2 + $0x1b0] sm:$0xff]
        %v466 = vld [vmem:[#allocation2 + $0x1b8] sm:$0xff]
        %v467 = vld [vmem:[#allocation2 + $0x1c0] sm:$0xff]
        %v468 = vld [vmem:[#allocation2 + $0x1c8] sm:$0xff]
        %v469 = vld [vmem:[#allocation2 + $0x1d0] sm:$0xff]
        %v470 = vld [vmem:[#allocation2 + $0x1d8] sm:$0xff]
        %v471 = vld [vmem:[#allocation2 + $0x1e0] sm:$0xff]
        %v472 = vld [vmem:[#allocation2 + $0x1e8] sm:$0xff]
        %v473 = vld [vmem:[#allocation2 + $0x1f0] sm:$0xff]
        %v474 = vld [vmem:[#allocation2 + $0x1f8] sm:$0xff]
        %v475 = vld [vmem:[#allocation2 + $0x200] sm:$0xff]
        %v476 = vld [vmem:[#allocation2 + $0x208] sm:$0xff]
        %v477 = vld [vmem:[#allocation2 + $0x210] sm:$0xff]
        %v478 = vld [vmem:[#allocation2 + $0x218] sm:$0xff]
        %v479 = vld [vmem:[#allocation2 + $0x220] sm:$0xff]
        %v480 = vld [vmem:[#allocation2 + $0x228] sm:$0xff]
        %v481 = vld [vmem:[#allocation2 + $0x230] sm:$0xff]
        %v482 = vld [vmem:[#allocation2 + $0x238] sm:$0xff]
        %v515 = vunpack.c.l.b16 %v379
        %v516 = vunpack.c.h.b16 %v379
        %v517 = vunpack.c.l.b16 %v380
        %v518 = vunpack.c.l.b16 %v381
        %v519 = vunpack.c.h.b16 %v381
        %v520 = vunpack.c.l.b16 %v382
        %v521 = vunpack.c.l.b16 %v383
        %v522 = vunpack.c.h.b16 %v383
        %v523 = vunpack.c.l.b16 %v384
        %v524 = vunpack.c.l.b16 %v385
        %v525 = vunpack.c.h.b16 %v385
        %v526 = vunpack.c.l.b16 %v386
        %v527 = vunpack.c.l.b16 %v387
        %v528 = vunpack.c.h.b16 %v387
        %v529 = vunpack.c.l.b16 %v388
        %v530 = vunpack.c.l.b16 %v389
        %v531 = vunpack.c.h.b16 %v389
        %v532 = vunpack.c.l.b16 %v390
        %v533 = vunpack.c.l.b16 %v391
        %v534 = vunpack.c.h.b16 %v391
        %v535 = vunpack.c.l.b16 %v392
        %v536 = vunpack.c.l.b16 %v393
        %v537 = vunpack.c.h.b16 %v393
        %v538 = vunpack.c.l.b16 %v394
        %v539 = vunpack.c.l.b16 %v395
        %v540 = vunpack.c.h.b16 %v395
        %v541 = vunpack.c.l.b16 %v396
        %v542 = vunpack.c.l.b16 %v397
        %v543 = vunpack.c.h.b16 %v397
        %v544 = vunpack.c.l.b16 %v398
        %v545 = vunpack.c.l.b16 %v399
        %v546 = vunpack.c.h.b16 %v399
        %v547 = vunpack.c.l.b16 %v400
        %v548 = vunpack.c.l.b16 %v401
        %v549 = vunpack.c.h.b16 %v401
        %v550 = vunpack.c.l.b16 %v402
        %v551 = vunpack.c.l.b16 %v403
        %v552 = vunpack.c.h.b16 %v403
        %v553 = vunpack.c.l.b16 %v404
        %v554 = vunpack.c.l.b16 %v405
        %v555 = vunpack.c.h.b16 %v405
        %v556 = vunpack.c.l.b16 %v406
        %v557 = vunpack.c.l.b16 %v407
        %v558 = vunpack.c.h.b16 %v407
        %v559 = vunpack.c.l.b16 %v408
        %v560 = vunpack.c.l.b16 %v409
        %v561 = vunpack.c.h.b16 %v409
        %v562 = vunpack.c.l.b16 %v410
        %v563 = vpack.c.b16 %v518, %v515
        %v564 = vpack.c.b16 %v519, %v516
        %v565 = vpack.c.b16 %v520, %v517
        %v566 = vpack.c.b16 %v524, %v521
        %v567 = vpack.c.b16 %v525, %v522
        %v568 = vpack.c.b16 %v526, %v523
        %v569 = vpack.c.b16 %v530, %v527
        %v570 = vpack.c.b16 %v531, %v528
        %v571 = vpack.c.b16 %v532, %v529
        %v572 = vpack.c.b16 %v536, %v533
        %v573 = vpack.c.b16 %v537, %v534
        %v574 = vpack.c.b16 %v538, %v535
        %v575 = vpack.c.b16 %v542, %v539
        %v576 = vpack.c.b16 %v543, %v540
        %v577 = vpack.c.b16 %v544, %v541
        %v578 = vpack.c.b16 %v548, %v545
        %v579 = vpack.c.b16 %v549, %v546
        %v580 = vpack.c.b16 %v550, %v547
        %v581 = vpack.c.b16 %v554, %v551
        %v582 = vpack.c.b16 %v555, %v552
        %v583 = vpack.c.b16 %v556, %v553
        %v584 = vpack.c.b16 %v560, %v557
        %v585 = vpack.c.b16 %v561, %v558
        %v586 = vpack.c.b16 %v562, %v559
        %vm603 = vcmask 261120
        %v605 = vsel %vm603, %v565, 0
        %v608 = vsel %vm603, %v568, 0
        %v611 = vsel %vm603, %v571, 0
        %v614 = vsel %vm603, %v574, 0
        %v617 = vsel %vm603, %v577, 0
        %v620 = vsel %vm603, %v580, 0
        %v623 = vsel %vm603, %v583, 0
        %v626 = vsel %vm603, %v586, 0
        %628 = vmatprep.subr.bf16.mxu0 %v412
        %629 = vmatpush1.bf16.msra.mxu0 %v411
        %630 = vmatprep.subr.bf16.mxu0 %v416
        %631 = vmatpush1.bf16.msra.mxu0 %v415
        %632 = vmatprep.subr.bf16.mxu0 %v420
        %633 = vmatpush1.bf16.msra.mxu0 %v419
        %634 = vmatprep.subr.bf16.mxu0 %v424
        %635 = vmatpush1.bf16.msra.mxu0 %v423
        %636 = vmatprep.subr.bf16.mxu0 %v428
        %637 = vmatpush1.bf16.msra.mxu0 %v427
        %638 = vmatprep.subr.bf16.mxu0 %v432
        %639 = vmatpush1.bf16.msra.mxu0 %v431
        %640 = vmatprep.subr.bf16.mxu0 %v436
        %641 = vmatpush1.bf16.msra.mxu0 %v435
        %642 = vmatprep.subr.bf16.mxu0 %v440
        %643 = vmatpush1.bf16.msra.mxu0 %v439
        %644 = vmatprep.subr.bf16.mxu0 %v444
        %645 = vmatpush1.bf16.msra.mxu0 %v443
        %646 = vmatprep.subr.bf16.mxu0 %v448
        %647 = vmatpush1.bf16.msra.mxu0 %v447
        %648 = vmatprep.subr.bf16.mxu0 %v452
        %649 = vmatpush1.bf16.msra.mxu0 %v451
        %650 = vmatprep.subr.bf16.mxu0 %v456
        %651 = vmatpush1.bf16.msra.mxu0 %v455
        %652 = vmatprep.subr.bf16.mxu0 %v460
        %653 = vmatpush1.bf16.msra.mxu0 %v459
        %654 = vmatprep.subr.bf16.mxu0 %v464
        %655 = vmatpush1.bf16.msra.mxu0 %v463
        %656 = vmatprep.subr.bf16.mxu0 %v468
        %657 = vmatpush1.bf16.msra.mxu0 %v467
        %658 = vmatprep.subr.bf16.mxu0 %v472
        %659 = vmatpush1.bf16.msra.mxu0 %v471
        %660 = vmatprep.mubr.bf16.mxu0 %v564
        %661 = vmatmul.mubr.bf16.gmra.mrb[0].mxu0 %v563
        %v662 = vpop.f32.mrb[0].mxu0
        %v663 = vadd.f32 0.0, %v662
        %v664 = vpop.f32.mrb[0].mxu0
        %v665 = vadd.f32 0.0, %v664
        %v666 = vpop.f32.mrb[0].mxu0
        %v667 = vadd.f32 0.0, %v666
        %v668 = vpop.f32.mrb[0].mxu0
        %v669 = vadd.f32 0.0, %v668
        %670 = vmatprep.mubr.bf16.mxu0 %v567
        %671 = vmatmul.mubr.bf16.gmra.mrb[0].mxu0 %v566
        %v672 = vpop.f32.mrb[0].mxu0
        %v673 = vadd.f32 0.0, %v672
        %v674 = vpop.f32.mrb[0].mxu0
        %v675 = vadd.f32 0.0, %v674
        %v676 = vpop.f32.mrb[0].mxu0
        %v677 = vadd.f32 0.0, %v676
        %v678 = vpop.f32.mrb[0].mxu0
        %v679 = vadd.f32 0.0, %v678
        %680 = vmatprep.mubr.bf16.mxu0 %v570
        %681 = vmatmul.mubr.bf16.gmra.mrb[0].mxu0 %v569
        %v682 = vpop.f32.mrb[0].mxu0
        %v683 = vadd.f32 0.0, %v682
        %v684 = vpop.f32.mrb[0].mxu0
        %v685 = vadd.f32 0.0, %v684
        %v686 = vpop.f32.mrb[0].mxu0
        %v687 = vadd.f32 0.0, %v686
        %v688 = vpop.f32.mrb[0].mxu0
        %v689 = vadd.f32 0.0, %v688
        %690 = vmatprep.mubr.bf16.mxu0 %v573
        %691 = vmatmul.mubr.bf16.gmra.mrb[0].mxu0 %v572
        %v692 = vpop.f32.mrb[0].mxu0
        %v693 = vadd.f32 0.0, %v692
        %v694 = vpop.f32.mrb[0].mxu0
        %v695 = vadd.f32 0.0, %v694
        %v696 = vpop.f32.mrb[0].mxu0
        %v697 = vadd.f32 0.0, %v696
        %v698 = vpop.f32.mrb[0].mxu0
        %v699 = vadd.f32 0.0, %v698
        %700 = vmatprep.mubr.bf16.mxu0 %v576
        %701 = vmatmul.mubr.bf16.gmra.mrb[0].mxu0 %v575
        %v702 = vpop.f32.mrb[0].mxu0
        %v703 = vadd.f32 0.0, %v702
        %v704 = vpop.f32.mrb[0].mxu0
        %v705 = vadd.f32 0.0, %v704
        %v706 = vpop.f32.mrb[0].mxu0
        %v707 = vadd.f32 0.0, %v706
        %v708 = vpop.f32.mrb[0].mxu0
        %v709 = vadd.f32 0.0, %v708
        %710 = vmatprep.mubr.bf16.mxu0 %v579
        %711 = vmatmul.mubr.bf16.gmra.mrb[0].mxu0 %v578
        %v712 = vpop.f32.mrb[0].mxu0
        %v713 = vadd.f32 0.0, %v712
        %v714 = vpop.f32.mrb[0].mxu0
        %v715 = vadd.f32 0.0, %v714
        %v716 = vpop.f32.mrb[0].mxu0
        %v717 = vadd.f32 0.0, %v716
        %v718 = vpop.f32.mrb[0].mxu0
        %v719 = vadd.f32 0.0, %v718
        %720 = vmatprep.mubr.bf16.mxu0 %v582
        %721 = vmatmul.mubr.bf16.gmra.mrb[0].mxu0 %v581
        %v722 = vpop.f32.mrb[0].mxu0
        %v723 = vadd.f32 0.0, %v722
        %v724 = vpop.f32.mrb[0].mxu0
        %v725 = vadd.f32 0.0, %v724
        %v726 = vpop.f32.mrb[0].mxu0
        %v727 = vadd.f32 0.0, %v726
        %v728 = vpop.f32.mrb[0].mxu0
        %v729 = vadd.f32 0.0, %v728
        %730 = vmatprep.mubr.bf16.mxu0 %v585
        %731 = vmatmul.mubr.bf16.gmra.mrb[0].mxu0 %v584
        %v732 = vpop.f32.mrb[0].mxu0
        %v733 = vadd.f32 0.0, %v732
        %v734 = vpop.f32.mrb[0].mxu0
        %v735 = vadd.f32 0.0, %v734
        %v736 = vpop.f32.mrb[0].mxu0
        %v737 = vadd.f32 0.0, %v736
        %v738 = vpop.f32.mrb[0].mxu0
        %v739 = vadd.f32 0.0, %v738
        %740 = vdwg.mxu0
        %741 = vmatprep.subr.bf16.mxu0 %v476
        %742 = vmatpush1.bf16.msra.mxu0 %v475
        %743 = vmatprep.subr.bf16.mxu0 %v480
        %744 = vmatpush1.bf16.msra.mxu0 %v479
        %745 = vmatprep.subr.bf16.mxu0 0
        %746 = vmatpush1.bf16.msra.mxu0 0
        %747 = vmatprep.subr.bf16.mxu0 0
        %748 = vmatpush1.bf16.msra.mxu0 0
        %749 = vmatprep.subr.bf16.mxu0 0
        %750 = vmatpush1.bf16.msra.mxu0 0
        %751 = vmatprep.subr.bf16.mxu0 0
        %752 = vmatpush1.bf16.msra.mxu0 0
        %753 = vmatprep.subr.bf16.mxu0 0
        %754 = vmatpush1.bf16.msra.mxu0 0
        %755 = vmatprep.subr.bf16.mxu0 0
        %756 = vmatpush1.bf16.msra.mxu0 0
        %757 = vmatprep.subr.bf16.mxu0 0
        %758 = vmatpush1.bf16.msra.mxu0 0
        %759 = vmatprep.subr.bf16.mxu0 0
        %760 = vmatpush1.bf16.msra.mxu0 0
        %761 = vmatprep.subr.bf16.mxu0 0
        %762 = vmatpush1.bf16.msra.mxu0 0
        %763 = vmatprep.subr.bf16.mxu0 0
        %764 = vmatpush1.bf16.msra.mxu0 0
        %765 = vmatprep.subr.bf16.mxu0 0
        %766 = vmatpush1.bf16.msra.mxu0 0
        %767 = vmatprep.subr.bf16.mxu0 0
        %768 = vmatpush1.bf16.msra.mxu0 0
        %769 = vmatprep.subr.bf16.mxu0 0
        %770 = vmatpush1.bf16.msra.mxu0 0
        %771 = vmatprep.subr.bf16.mxu0 0
        %772 = vmatpush1.bf16.msra.mxu0 0
        %773 = vmatprep.mubr.bf16.mxu0 0
        %774 = vmatmul.mubr.bf16.gmra.mrb[0].mxu0 %v605
        %v775 = vpop.f32.mrb[0].mxu0
        %v776 = vadd.f32 %v663, %v775
        %v777 = vpop.f32.mrb[0].mxu0
        %v778 = vadd.f32 %v665, %v777
        %v779 = vpop.f32.mrb[0].mxu0
        %v780 = vadd.f32 %v667, %v779
        %v781 = vpop.f32.mrb[0].mxu0
        %v782 = vadd.f32 %v669, %v781
        %783 = vmatprep.mubr.bf16.mxu0 0
        %784 = vmatmul.mubr.bf16.gmra.mrb[0].mxu0 %v608
        %v785 = vpop.f32.mrb[0].mxu0
        %v786 = vadd.f32 %v673, %v785
        %v787 = vpop.f32.mrb[0].mxu0
        %v788 = vadd.f32 %v675, %v787
        %v789 = vpop.f32.mrb[0].mxu0
        %v790 = vadd.f32 %v677, %v789
        %v791 = vpop.f32.mrb[0].mxu0
        %v792 = vadd.f32 %v679, %v791
        %793 = vmatprep.mubr.bf16.mxu0 0
        %794 = vmatmul.mubr.bf16.gmra.mrb[0].mxu0 %v611
        %v795 = vpop.f32.mrb[0].mxu0
        %v796 = vadd.f32 %v683, %v795
        %v797 = vpop.f32.mrb[0].mxu0
        %v798 = vadd.f32 %v685, %v797
        %v799 = vpop.f32.mrb[0].mxu0
        %v800 = vadd.f32 %v687, %v799
        %v801 = vpop.f32.mrb[0].mxu0
        %v802 = vadd.f32 %v689, %v801
        %803 = vmatprep.mubr.bf16.mxu0 0
        %804 = vmatmul.mubr.bf16.gmra.mrb[0].mxu0 %v614
        %v805 = vpop.f32.mrb[0].mxu0
        %v806 = vadd.f32 %v693, %v805
        %v807 = vpop.f32.mrb[0].mxu0
        %v808 = vadd.f32 %v695, %v807
        %v809 = vpop.f32.mrb[0].mxu0
        %v810 = vadd.f32 %v697, %v809
        %v811 = vpop.f32.mrb[0].mxu0
        %v812 = vadd.f32 %v699, %v811
        %813 = vmatprep.mubr.bf16.mxu0 0
        %814 = vmatmul.mubr.bf16.gmra.mrb[0].mxu0 %v617
        %v815 = vpop.f32.mrb[0].mxu0
        %v816 = vadd.f32 %v703, %v815
        %v817 = vpop.f32.mrb[0].mxu0
        %v818 = vadd.f32 %v705, %v817
        %v819 = vpop.f32.mrb[0].mxu0
        %v820 = vadd.f32 %v707, %v819
        %v821 = vpop.f32.mrb[0].mxu0
        %v822 = vadd.f32 %v709, %v821
        %823 = vmatprep.mubr.bf16.mxu0 0
        %824 = vmatmul.mubr.bf16.gmra.mrb[0].mxu0 %v620
        %v825 = vpop.f32.mrb[0].mxu0
        %v826 = vadd.f32 %v713, %v825
        %v827 = vpop.f32.mrb[0].mxu0
        %v828 = vadd.f32 %v715, %v827
        %v829 = vpop.f32.mrb[0].mxu0
        %v830 = vadd.f32 %v717, %v829
        %v831 = vpop.f32.mrb[0].mxu0
        %v832 = vadd.f32 %v719, %v831
        %833 = vmatprep.mubr.bf16.mxu0 0
        %834 = vmatmul.mubr.bf16.gmra.mrb[0].mxu0 %v623
        %v835 = vpop.f32.mrb[0].mxu0
        %v836 = vadd.f32 %v723, %v835
        %v837 = vpop.f32.mrb[0].mxu0
        %v838 = vadd.f32 %v725, %v837
        %v839 = vpop.f32.mrb[0].mxu0
        %v840 = vadd.f32 %v727, %v839
        %v841 = vpop.f32.mrb[0].mxu0
        %v842 = vadd.f32 %v729, %v841
        %843 = vmatprep.mubr.bf16.mxu0 0
        %844 = vmatmul.mubr.bf16.gmra.mrb[0].mxu0 %v626
        %v845 = vpop.f32.mrb[0].mxu0
        %v846 = vadd.f32 %v733, %v845
        %v847 = vpop.f32.mrb[0].mxu0
        %v848 = vadd.f32 %v735, %v847
        %v849 = vpop.f32.mrb[0].mxu0
        %v850 = vadd.f32 %v737, %v849
        %v851 = vpop.f32.mrb[0].mxu0
        %v852 = vadd.f32 %v739, %v851
        %853 = vdwg.mxu0
        %854 = vmatprep.subr.bf16.mxu0 %v414
        %855 = vmatpush1.bf16.msra.mxu0 %v413
        %856 = vmatprep.subr.bf16.mxu0 %v418
        %857 = vmatpush1.bf16.msra.mxu0 %v417
        %858 = vmatprep.subr.bf16.mxu0 %v422
        %859 = vmatpush1.bf16.msra.mxu0 %v421
        %860 = vmatprep.subr.bf16.mxu0 %v426
        %861 = vmatpush1.bf16.msra.mxu0 %v425
        %862 = vmatprep.subr.bf16.mxu0 %v430
        %863 = vmatpush1.bf16.msra.mxu0 %v429
        %864 = vmatprep.subr.bf16.mxu0 %v434
        %865 = vmatpush1.bf16.msra.mxu0 %v433
        %866 = vmatprep.subr.bf16.mxu0 %v438
        %867 = vmatpush1.bf16.msra.mxu0 %v437
        %868 = vmatprep.subr.bf16.mxu0 %v442
        %869 = vmatpush1.bf16.msra.mxu0 %v441
        %870 = vmatprep.subr.bf16.mxu0 %v446
        %871 = vmatpush1.bf16.msra.mxu0 %v445
        %872 = vmatprep.subr.bf16.mxu0 %v450
        %873 = vmatpush1.bf16.msra.mxu0 %v449
        %874 = vmatprep.subr.bf16.mxu0 %v454
        %875 = vmatpush1.bf16.msra.mxu0 %v453
        %876 = vmatprep.subr.bf16.mxu0 %v458
        %877 = vmatpush1.bf16.msra.mxu0 %v457
        %878 = vmatprep.subr.bf16.mxu0 %v462
        %879 = vmatpush1.bf16.msra.mxu0 %v461
        %880 = vmatprep.subr.bf16.mxu0 %v466
        %881 = vmatpush1.bf16.msra.mxu0 %v465
        %882 = vmatprep.subr.bf16.mxu0 %v470
        %883 = vmatpush1.bf16.msra.mxu0 %v469
        %884 = vmatprep.subr.bf16.mxu0 %v474
        %885 = vmatpush1.bf16.msra.mxu0 %v473
        %886 = vmatprep.mubr.bf16.mxu0 %v564
        %887 = vmatmul.mubr.bf16.gmra.mrb[0].mxu0 %v563
        %v888 = vpop.f32.mrb[0].mxu0
        %v889 = vadd.f32 0.0, %v888
        %v890 = vpop.f32.mrb[0].mxu0
        %v891 = vadd.f32 0.0, %v890
        %v892 = vpop.f32.mrb[0].mxu0
        %v893 = vadd.f32 0.0, %v892
        %v894 = vpop.f32.mrb[0].mxu0
        %v895 = vadd.f32 0.0, %v894
        %896 = vmatprep.mubr.bf16.mxu0 %v567
        %897 = vmatmul.mubr.bf16.gmra.mrb[0].mxu0 %v566
        %v898 = vpop.f32.mrb[0].mxu0
        %v899 = vadd.f32 0.0, %v898
        %v900 = vpop.f32.mrb[0].mxu0
        %v901 = vadd.f32 0.0, %v900
        %v902 = vpop.f32.mrb[0].mxu0
        %v903 = vadd.f32 0.0, %v902
        %v904 = vpop.f32.mrb[0].mxu0
        %v905 = vadd.f32 0.0, %v904
        %906 = vmatprep.mubr.bf16.mxu0 %v570
        %907 = vmatmul.mubr.bf16.gmra.mrb[0].mxu0 %v569
        %v908 = vpop.f32.mrb[0].mxu0
        %v909 = vadd.f32 0.0, %v908
        %v910 = vpop.f32.mrb[0].mxu0
        %v911 = vadd.f32 0.0, %v910
        %v912 = vpop.f32.mrb[0].mxu0
        %v913 = vadd.f32 0.0, %v912
        %v914 = vpop.f32.mrb[0].mxu0
        %v915 = vadd.f32 0.0, %v914
        %916 = vmatprep.mubr.bf16.mxu0 %v573
        %917 = vmatmul.mubr.bf16.gmra.mrb[0].mxu0 %v572
        %v918 = vpop.f32.mrb[0].mxu0
        %v919 = vadd.f32 0.0, %v918
        %v920 = vpop.f32.mrb[0].mxu0
        %v921 = vadd.f32 0.0, %v920
        %v922 = vpop.f32.mrb[0].mxu0
        %v923 = vadd.f32 0.0, %v922
        %v924 = vpop.f32.mrb[0].mxu0
        %v925 = vadd.f32 0.0, %v924
        %926 = vmatprep.mubr.bf16.mxu0 %v576
        %927 = vmatmul.mubr.bf16.gmra.mrb[0].mxu0 %v575
        %v928 = vpop.f32.mrb[0].mxu0
        %v929 = vadd.f32 0.0, %v928
        %v930 = vpop.f32.mrb[0].mxu0
        %v931 = vadd.f32 0.0, %v930
        %v932 = vpop.f32.mrb[0].mxu0
        %v933 = vadd.f32 0.0, %v932
        %v934 = vpop.f32.mrb[0].mxu0
        %v935 = vadd.f32 0.0, %v934
        %936 = vmatprep.mubr.bf16.mxu0 %v579
        %937 = vmatmul.mubr.bf16.gmra.mrb[0].mxu0 %v578
        %v938 = vpop.f32.mrb[0].mxu0
        %v939 = vadd.f32 0.0, %v938
        %v940 = vpop.f32.mrb[0].mxu0
        %v941 = vadd.f32 0.0, %v940
        %v942 = vpop.f32.mrb[0].mxu0
        %v943 = vadd.f32 0.0, %v942
        %v944 = vpop.f32.mrb[0].mxu0
        %v945 = vadd.f32 0.0, %v944
        %946 = vmatprep.mubr.bf16.mxu0 %v582
        %947 = vmatmul.mubr.bf16.gmra.mrb[0].mxu0 %v581
        %v948 = vpop.f32.mrb[0].mxu0
        %v949 = vadd.f32 0.0, %v948
        %v950 = vpop.f32.mrb[0].mxu0
        %v951 = vadd.f32 0.0, %v950
        %v952 = vpop.f32.mrb[0].mxu0
        %v953 = vadd.f32 0.0, %v952
        %v954 = vpop.f32.mrb[0].mxu0
        %v955 = vadd.f32 0.0, %v954
        %956 = vmatprep.mubr.bf16.mxu0 %v585
        %957 = vmatmul.mubr.bf16.gmra.mrb[0].mxu0 %v584
        %v958 = vpop.f32.mrb[0].mxu0
        %v959 = vadd.f32 0.0, %v958
        %v960 = vpop.f32.mrb[0].mxu0
        %v961 = vadd.f32 0.0, %v960
        %v962 = vpop.f32.mrb[0].mxu0
        %v963 = vadd.f32 0.0, %v962
        %v964 = vpop.f32.mrb[0].mxu0
        %v965 = vadd.f32 0.0, %v964
        %966 = vdwg.mxu0
        %967 = vmatprep.subr.bf16.mxu0 %v478
        %968 = vmatpush1.bf16.msra.mxu0 %v477
        %969 = vmatprep.subr.bf16.mxu0 %v482
        %970 = vmatpush1.bf16.msra.mxu0 %v481
        %971 = vmatprep.subr.bf16.mxu0 0
        %972 = vmatpush1.bf16.msra.mxu0 0
        %973 = vmatprep.subr.bf16.mxu0 0
        %974 = vmatpush1.bf16.msra.mxu0 0
        %975 = vmatprep.subr.bf16.mxu0 0
        %976 = vmatpush1.bf16.msra.mxu0 0
        %977 = vmatprep.subr.bf16.mxu0 0
        %978 = vmatpush1.bf16.msra.mxu0 0
        %979 = vmatprep.subr.bf16.mxu0 0
        %980 = vmatpush1.bf16.msra.mxu0 0
        %981 = vmatprep.subr.bf16.mxu0 0
        %982 = vmatpush1.bf16.msra.mxu0 0
        %983 = vmatprep.subr.bf16.mxu0 0
        %984 = vmatpush1.bf16.msra.mxu0 0
        %985 = vmatprep.subr.bf16.mxu0 0
        %986 = vmatpush1.bf16.msra.mxu0 0
        %987 = vmatprep.subr.bf16.mxu0 0
        %988 = vmatpush1.bf16.msra.mxu0 0
        %989 = vmatprep.subr.bf16.mxu0 0
        %990 = vmatpush1.bf16.msra.mxu0 0
        %991 = vmatprep.subr.bf16.mxu0 0
        %992 = vmatpush1.bf16.msra.mxu0 0
        %993 = vmatprep.subr.bf16.mxu0 0
        %994 = vmatpush1.bf16.msra.mxu0 0
        %995 = vmatprep.subr.bf16.mxu0 0
        %996 = vmatpush1.bf16.msra.mxu0 0
        %997 = vmatprep.subr.bf16.mxu0 0
        %998 = vmatpush1.bf16.msra.mxu0 0
        %999 = vmatprep.mubr.bf16.mxu0 0
        %1000 = vmatmul.mubr.bf16.gmra.mrb[0].mxu0 %v605
        %v1001 = vpop.f32.mrb[0].mxu0
        %v1002 = vadd.f32 %v889, %v1001
        %v1003 = vpop.f32.mrb[0].mxu0
        %v1004 = vadd.f32 %v891, %v1003
        %v1005 = vpop.f32.mrb[0].mxu0
        %v1006 = vadd.f32 %v893, %v1005
        %v1007 = vpop.f32.mrb[0].mxu0
        %v1008 = vadd.f32 %v895, %v1007
        %1009 = vmatprep.mubr.bf16.mxu0 0
        %1010 = vmatmul.mubr.bf16.gmra.mrb[0].mxu0 %v608
        %v1011 = vpop.f32.mrb[0].mxu0
        %v1012 = vadd.f32 %v899, %v1011
        %v1013 = vpop.f32.mrb[0].mxu0
        %v1014 = vadd.f32 %v901, %v1013
        %v1015 = vpop.f32.mrb[0].mxu0
        %v1016 = vadd.f32 %v903, %v1015
        %v1017 = vpop.f32.mrb[0].mxu0
        %v1018 = vadd.f32 %v905, %v1017
        %1019 = vmatprep.mubr.bf16.mxu0 0
        %1020 = vmatmul.mubr.bf16.gmra.mrb[0].mxu0 %v611
        %v1021 = vpop.f32.mrb[0].mxu0
        %v1022 = vadd.f32 %v909, %v1021
        %v1023 = vpop.f32.mrb[0].mxu0
        %v1024 = vadd.f32 %v911, %v1023
        %v1025 = vpop.f32.mrb[0].mxu0
        %v1026 = vadd.f32 %v913, %v1025
        %v1027 = vpop.f32.mrb[0].mxu0
        %v1028 = vadd.f32 %v915, %v1027
        %1029 = vmatprep.mubr.bf16.mxu0 0
        %1030 = vmatmul.mubr.bf16.gmra.mrb[0].mxu0 %v614
        %v1031 = vpop.f32.mrb[0].mxu0
        %v1032 = vadd.f32 %v919, %v1031
        %v1033 = vpop.f32.mrb[0].mxu0
        %v1034 = vadd.f32 %v921, %v1033
        %v1035 = vpop.f32.mrb[0].mxu0
        %v1036 = vadd.f32 %v923, %v1035
        %v1037 = vpop.f32.mrb[0].mxu0
        %v1038 = vadd.f32 %v925, %v1037
        %1039 = vmatprep.mubr.bf16.mxu0 0
        %1040 = vmatmul.mubr.bf16.gmra.mrb[0].mxu0 %v617
        %v1041 = vpop.f32.mrb[0].mxu0
        %v1042 = vadd.f32 %v929, %v1041
        %v1043 = vpop.f32.mrb[0].mxu0
        %v1044 = vadd.f32 %v931, %v1043
        %v1045 = vpop.f32.mrb[0].mxu0
        %v1046 = vadd.f32 %v933, %v1045
        %v1047 = vpop.f32.mrb[0].mxu0
        %v1048 = vadd.f32 %v935, %v1047
        %1049 = vmatprep.mubr.bf16.mxu0 0
        %1050 = vmatmul.mubr.bf16.gmra.mrb[0].mxu0 %v620
        %v1051 = vpop.f32.mrb[0].mxu0
        %v1052 = vadd.f32 %v939, %v1051
        %v1053 = vpop.f32.mrb[0].mxu0
        %v1054 = vadd.f32 %v941, %v1053
        %v1055 = vpop.f32.mrb[0].mxu0
        %v1056 = vadd.f32 %v943, %v1055
        %v1057 = vpop.f32.mrb[0].mxu0
        %v1058 = vadd.f32 %v945, %v1057
        %1059 = vmatprep.mubr.bf16.mxu0 0
        %1060 = vmatmul.mubr.bf16.gmra.mrb[0].mxu0 %v623
        %v1061 = vpop.f32.mrb[0].mxu0
        %v1062 = vadd.f32 %v949, %v1061
        %v1063 = vpop.f32.mrb[0].mxu0
        %v1064 = vadd.f32 %v951, %v1063
        %v1065 = vpop.f32.mrb[0].mxu0
        %v1066 = vadd.f32 %v953, %v1065
        %v1067 = vpop.f32.mrb[0].mxu0
        %v1068 = vadd.f32 %v955, %v1067
        %1069 = vmatprep.mubr.bf16.mxu0 0
        %1070 = vmatmul.mubr.bf16.gmra.mrb[0].mxu0 %v626
        %v1071 = vpop.f32.mrb[0].mxu0
        %v1072 = vadd.f32 %v959, %v1071
        %v1073 = vpop.f32.mrb[0].mxu0
        %v1074 = vadd.f32 %v961, %v1073
        %v1075 = vpop.f32.mrb[0].mxu0
        %v1076 = vadd.f32 %v963, %v1075
        %v1077 = vpop.f32.mrb[0].mxu0
        %v1078 = vadd.f32 %v965, %v1077
        %1079 = vdwg.mxu0
        %v1080 = vadd.f32 %v315, %v776
        %v1081 = vadd.f32 %v316, %v778
        %v1082 = vadd.f32 %v317, %v1002
        %v1083 = vadd.f32 %v318, %v1004
        %v1084 = vadd.f32 %v319, %v780
        %v1085 = vadd.f32 %v320, %v782
        %v1086 = vadd.f32 %v321, %v1006
        %v1087 = vadd.f32 %v322, %v1008
        %v1088 = vadd.f32 %v323, %v786
        %v1089 = vadd.f32 %v324, %v788
        %v1090 = vadd.f32 %v325, %v1012
        %v1091 = vadd.f32 %v326, %v1014
        %v1092 = vadd.f32 %v327, %v790
        %v1093 = vadd.f32 %v328, %v792
        %v1094 = vadd.f32 %v329, %v1016
        %v1095 = vadd.f32 %v330, %v1018
        %v1096 = vadd.f32 %v331, %v796
        %v1097 = vadd.f32 %v332, %v798
        %v1098 = vadd.f32 %v333, %v1022
        %v1099 = vadd.f32 %v334, %v1024
        %v1100 = vadd.f32 %v335, %v800
        %v1101 = vadd.f32 %v336, %v802
        %v1102 = vadd.f32 %v337, %v1026
        %v1103 = vadd.f32 %v338, %v1028
        %v1104 = vadd.f32 %v339, %v806
        %v1105 = vadd.f32 %v340, %v808
        %v1106 = vadd.f32 %v341, %v1032
        %v1107 = vadd.f32 %v342, %v1034
        %v1108 = vadd.f32 %v343, %v810
        %v1109 = vadd.f32 %v344, %v812
        %v1110 = vadd.f32 %v345, %v1036
        %v1111 = vadd.f32 %v346, %v1038
        %v1112 = vadd.f32 %v347, %v816
        %v1113 = vadd.f32 %v348, %v818
        %v1114 = vadd.f32 %v349, %v1042
        %v1115 = vadd.f32 %v350, %v1044
        %v1116 = vadd.f32 %v351, %v820
        %v1117 = vadd.f32 %v352, %v822
        %v1118 = vadd.f32 %v353, %v1046
        %v1119 = vadd.f32 %v354, %v1048
        %v1120 = vadd.f32 %v355, %v826
        %v1121 = vadd.f32 %v356, %v828
        %v1122 = vadd.f32 %v357, %v1052
        %v1123 = vadd.f32 %v358, %v1054
        %v1124 = vadd.f32 %v359, %v830
        %v1125 = vadd.f32 %v360, %v832
        %v1126 = vadd.f32 %v361, %v1056
        %v1127 = vadd.f32 %v362, %v1058
        %v1128 = vadd.f32 %v363, %v836
        %v1129 = vadd.f32 %v364, %v838
        %v1130 = vadd.f32 %v365, %v1062
        %v1131 = vadd.f32 %v366, %v1064
        %v1132 = vadd.f32 %v367, %v840
        %v1133 = vadd.f32 %v368, %v842
        %v1134 = vadd.f32 %v369, %v1066
        %v1135 = vadd.f32 %v370, %v1068
        %v1136 = vadd.f32 %v371, %v846
        %v1137 = vadd.f32 %v372, %v848
        %v1138 = vadd.f32 %v373, %v1072
        %v1139 = vadd.f32 %v374, %v1074
        %v1140 = vadd.f32 %v375, %v850
        %v1141 = vadd.f32 %v376, %v852
        %v1142 = vadd.f32 %v377, %v1076
        %v1143 = vadd.f32 %v378, %v1078
        %v1144 = vxor.u32 %v1080, 2147483648
        %v1145 = vxor.u32 %v1081, 2147483648
        %v1146 = vxor.u32 %v1082, 2147483648
        %v1147 = vxor.u32 %v1083, 2147483648
        %v1148 = vxor.u32 %v1084, 2147483648
        %v1149 = vxor.u32 %v1085, 2147483648
        %v1150 = vxor.u32 %v1086, 2147483648
        %v1151 = vxor.u32 %v1087, 2147483648
        %v1152 = vxor.u32 %v1088, 2147483648
        %v1153 = vxor.u32 %v1089, 2147483648
        %v1154 = vxor.u32 %v1090, 2147483648
        %v1155 = vxor.u32 %v1091, 2147483648
        %v1156 = vxor.u32 %v1092, 2147483648
        %v1157 = vxor.u32 %v1093, 2147483648
        %v1158 = vxor.u32 %v1094, 2147483648
        %v1159 = vxor.u32 %v1095, 2147483648
        %v1160 = vmul.f32 %v1144, 1.442695
        %v1161 = vpow.pop %v1160
        %v1162 = vmul.f32 %v1145, 1.442695
        %v1163 = vpow.pop %v1162
        %v1164 = vmul.f32 %v1146, 1.442695
        %v1165 = vpow.pop %v1164
        %v1166 = vmul.f32 %v1147, 1.442695
        %v1167 = vpow.pop %v1166
        %v1168 = vmul.f32 %v1148, 1.442695
        %v1169 = vpow.pop %v1168
        %v1170 = vmul.f32 %v1149, 1.442695
        %v1171 = vpow.pop %v1170
        %v1172 = vmul.f32 %v1150, 1.442695
        %v1173 = vpow.pop %v1172
        %v1174 = vmul.f32 %v1151, 1.442695
        %v1175 = vpow.pop %v1174
        %v1176 = vmul.f32 %v1152, 1.442695
        %v1177 = vpow.pop %v1176
        %v1178 = vmul.f32 %v1153, 1.442695
        %v1179 = vpow.pop %v1178
        %v1180 = vmul.f32 %v1154, 1.442695
        %v1181 = vpow.pop %v1180
        %v1182 = vmul.f32 %v1155, 1.442695
        %v1183 = vpow.pop %v1182
        %v1184 = vmul.f32 %v1156, 1.442695
        %v1185 = vpow.pop %v1184
        %v1186 = vmul.f32 %v1157, 1.442695
        %v1187 = vpow.pop %v1186
        %v1188 = vmul.f32 %v1158, 1.442695
        %v1189 = vpow.pop %v1188
        %v1190 = vmul.f32 %v1159, 1.442695
        %v1191 = vpow.pop %v1190
        %v1192 = vadd.f32 %v1161, 1.0
        %v1193 = vadd.f32 %v1163, 1.0
        %v1194 = vadd.f32 %v1165, 1.0
        %v1195 = vadd.f32 %v1167, 1.0
        %v1196 = vadd.f32 %v1169, 1.0
        %v1197 = vadd.f32 %v1171, 1.0
        %v1198 = vadd.f32 %v1173, 1.0
        %v1199 = vadd.f32 %v1175, 1.0
        %v1200 = vadd.f32 %v1177, 1.0
        %v1201 = vadd.f32 %v1179, 1.0
        %v1202 = vadd.f32 %v1181, 1.0
        %v1203 = vadd.f32 %v1183, 1.0
        %v1204 = vadd.f32 %v1185, 1.0
        %v1205 = vadd.f32 %v1187, 1.0
        %v1206 = vadd.f32 %v1189, 1.0
        %v1207 = vadd.f32 %v1191, 1.0
        %v1208 = vrcp.pop %v1192
        %v1209 = vmul.f32 1.0, %v1208
        %v1210 = vrcp.pop %v1193
        %v1211 = vmul.f32 1.0, %v1210
        %v1212 = vrcp.pop %v1194
        %v1213 = vmul.f32 1.0, %v1212
        %v1214 = vrcp.pop %v1195
        %v1215 = vmul.f32 1.0, %v1214
        %v1216 = vrcp.pop %v1196
        %v1217 = vmul.f32 1.0, %v1216
        %v1218 = vrcp.pop %v1197
        %v1219 = vmul.f32 1.0, %v1218
        %v1220 = vrcp.pop %v1198
        %v1221 = vmul.f32 1.0, %v1220
        %v1222 = vrcp.pop %v1199
        %v1223 = vmul.f32 1.0, %v1222
        %v1224 = vrcp.pop %v1200
        %v1225 = vmul.f32 1.0, %v1224
        %v1226 = vrcp.pop %v1201
        %v1227 = vmul.f32 1.0, %v1226
        %v1228 = vrcp.pop %v1202
        %v1229 = vmul.f32 1.0, %v1228
        %v1230 = vrcp.pop %v1203
        %v1231 = vmul.f32 1.0, %v1230
        %v1232 = vrcp.pop %v1204
        %v1233 = vmul.f32 1.0, %v1232
        %v1234 = vrcp.pop %v1205
        %v1235 = vmul.f32 1.0, %v1234
        %v1236 = vrcp.pop %v1206
        %v1237 = vmul.f32 1.0, %v1236
        %v1238 = vrcp.pop %v1207
        %v1239 = vmul.f32 1.0, %v1238
        %v1240 = vxor.u32 %v1096, 2147483648
        %v1241 = vxor.u32 %v1097, 2147483648
        %v1242 = vxor.u32 %v1098, 2147483648
        %v1243 = vxor.u32 %v1099, 2147483648
        %v1244 = vxor.u32 %v1100, 2147483648
        %v1245 = vxor.u32 %v1101, 2147483648
        %v1246 = vxor.u32 %v1102, 2147483648
        %v1247 = vxor.u32 %v1103, 2147483648
        %v1248 = vxor.u32 %v1104, 2147483648
        %v1249 = vxor.u32 %v1105, 2147483648
        %v1250 = vxor.u32 %v1106, 2147483648
        %v1251 = vxor.u32 %v1107, 2147483648
        %v1252 = vxor.u32 %v1108, 2147483648
        %v1253 = vxor.u32 %v1109, 2147483648
        %v1254 = vxor.u32 %v1110, 2147483648
        %v1255 = vxor.u32 %v1111, 2147483648
        %v1256 = vmul.f32 %v1240, 1.442695
        %v1257 = vpow.pop %v1256
        %v1258 = vmul.f32 %v1241, 1.442695
        %v1259 = vpow.pop %v1258
        %v1260 = vmul.f32 %v1242, 1.442695
        %v1261 = vpow.pop %v1260
        %v1262 = vmul.f32 %v1243, 1.442695
        %v1263 = vpow.pop %v1262
        %v1264 = vmul.f32 %v1244, 1.442695
        %v1265 = vpow.pop %v1264
        %v1266 = vmul.f32 %v1245, 1.442695
        %v1267 = vpow.pop %v1266
        %v1268 = vmul.f32 %v1246, 1.442695
        %v1269 = vpow.pop %v1268
        %v1270 = vmul.f32 %v1247, 1.442695
        %v1271 = vpow.pop %v1270
        %v1272 = vmul.f32 %v1248, 1.442695
        %v1273 = vpow.pop %v1272
        %v1274 = vmul.f32 %v1249, 1.442695
        %v1275 = vpow.pop %v1274
        %v1276 = vmul.f32 %v1250, 1.442695
        %v1277 = vpow.pop %v1276
        %v1278 = vmul.f32 %v1251, 1.442695
        %v1279 = vpow.pop %v1278
        %v1280 = vmul.f32 %v1252, 1.442695
        %v1281 = vpow.pop %v1280
        %v1282 = vmul.f32 %v1253, 1.442695
        %v1283 = vpow.pop %v1282
        %v1284 = vmul.f32 %v1254, 1.442695
        %v1285 = vpow.pop %v1284
        %v1286 = vmul.f32 %v1255, 1.442695
        %v1287 = vpow.pop %v1286
        %v1288 = vadd.f32 %v1257, 1.0
        %v1289 = vadd.f32 %v1259, 1.0
        %v1290 = vadd.f32 %v1261, 1.0
        %v1291 = vadd.f32 %v1263, 1.0
        %v1292 = vadd.f32 %v1265, 1.0
        %v1293 = vadd.f32 %v1267, 1.0
        %v1294 = vadd.f32 %v1269, 1.0
        %v1295 = vadd.f32 %v1271, 1.0
        %v1296 = vadd.f32 %v1273, 1.0
        %v1297 = vadd.f32 %v1275, 1.0
        %v1298 = vadd.f32 %v1277, 1.0
        %v1299 = vadd.f32 %v1279, 1.0
        %v1300 = vadd.f32 %v1281, 1.0
        %v1301 = vadd.f32 %v1283, 1.0
        %v1302 = vadd.f32 %v1285, 1.0
        %v1303 = vadd.f32 %v1287, 1.0
        %v1304 = vrcp.pop %v1288
        %v1305 = vmul.f32 1.0, %v1304
        %v1306 = vrcp.pop %v1289
        %v1307 = vmul.f32 1.0, %v1306
        %v1308 = vrcp.pop %v1290
        %v1309 = vmul.f32 1.0, %v1308
        %v1310 = vrcp.pop %v1291
        %v1311 = vmul.f32 1.0, %v1310
        %v1312 = vrcp.pop %v1292
        %v1313 = vmul.f32 1.0, %v1312
        %v1314 = vrcp.pop %v1293
        %v1315 = vmul.f32 1.0, %v1314
        %v1316 = vrcp.pop %v1294
        %v1317 = vmul.f32 1.0, %v1316
        %v1318 = vrcp.pop %v1295
        %v1319 = vmul.f32 1.0, %v1318
        %v1320 = vrcp.pop %v1296
        %v1321 = vmul.f32 1.0, %v1320
        %v1322 = vrcp.pop %v1297
        %v1323 = vmul.f32 1.0, %v1322
        %v1324 = vrcp.pop %v1298
        %v1325 = vmul.f32 1.0, %v1324
        %v1326 = vrcp.pop %v1299
        %v1327 = vmul.f32 1.0, %v1326
        %v1328 = vrcp.pop %v1300
        %v1329 = vmul.f32 1.0, %v1328
        %v1330 = vrcp.pop %v1301
        %v1331 = vmul.f32 1.0, %v1330
        %v1332 = vrcp.pop %v1302
        %v1333 = vmul.f32 1.0, %v1332
        %v1334 = vrcp.pop %v1303
        %v1335 = vmul.f32 1.0, %v1334
        %v1336 = vxor.u32 %v1112, 2147483648
        %v1337 = vxor.u32 %v1113, 2147483648
        %v1338 = vxor.u32 %v1114, 2147483648
        %v1339 = vxor.u32 %v1115, 2147483648
        %v1340 = vxor.u32 %v1116, 2147483648
        %v1341 = vxor.u32 %v1117, 2147483648
        %v1342 = vxor.u32 %v1118, 2147483648
        %v1343 = vxor.u32 %v1119, 2147483648
        %v1344 = vxor.u32 %v1120, 2147483648
        %v1345 = vxor.u32 %v1121, 2147483648
        %v1346 = vxor.u32 %v1122, 2147483648
        %v1347 = vxor.u32 %v1123, 2147483648
        %v1348 = vxor.u32 %v1124, 2147483648
        %v1349 = vxor.u32 %v1125, 2147483648
        %v1350 = vxor.u32 %v1126, 2147483648
        %v1351 = vxor.u32 %v1127, 2147483648
        %v1352 = vmul.f32 %v1336, 1.442695
        %v1353 = vpow.pop %v1352
        %v1354 = vmul.f32 %v1337, 1.442695
        %v1355 = vpow.pop %v1354
        %v1356 = vmul.f32 %v1338, 1.442695
        %v1357 = vpow.pop %v1356
        %v1358 = vmul.f32 %v1339, 1.442695
        %v1359 = vpow.pop %v1358
        %v1360 = vmul.f32 %v1340, 1.442695
        %v1361 = vpow.pop %v1360
        %v1362 = vmul.f32 %v1341, 1.442695
        %v1363 = vpow.pop %v1362
        %v1364 = vmul.f32 %v1342, 1.442695
        %v1365 = vpow.pop %v1364
        %v1366 = vmul.f32 %v1343, 1.442695
        %v1367 = vpow.pop %v1366
        %v1368 = vmul.f32 %v1344, 1.442695
        %v1369 = vpow.pop %v1368
        %v1370 = vmul.f32 %v1345, 1.442695
        %v1371 = vpow.pop %v1370
        %v1372 = vmul.f32 %v1346, 1.442695
        %v1373 = vpow.pop %v1372
        %v1374 = vmul.f32 %v1347, 1.442695
        %v1375 = vpow.pop %v1374
        %v1376 = vmul.f32 %v1348, 1.442695
        %v1377 = vpow.pop %v1376
        %v1378 = vmul.f32 %v1349, 1.442695
        %v1379 = vpow.pop %v1378
        %v1380 = vmul.f32 %v1350, 1.442695
        %v1381 = vpow.pop %v1380
        %v1382 = vmul.f32 %v1351, 1.442695
        %v1383 = vpow.pop %v1382
        %v1384 = vadd.f32 %v1353, 1.0
        %v1385 = vadd.f32 %v1355, 1.0
        %v1386 = vadd.f32 %v1357, 1.0
        %v1387 = vadd.f32 %v1359, 1.0
        %v1388 = vadd.f32 %v1361, 1.0
        %v1389 = vadd.f32 %v1363, 1.0
        %v1390 = vadd.f32 %v1365, 1.0
        %v1391 = vadd.f32 %v1367, 1.0
        %v1392 = vadd.f32 %v1369, 1.0
        %v1393 = vadd.f32 %v1371, 1.0
        %v1394 = vadd.f32 %v1373, 1.0
        %v1395 = vadd.f32 %v1375, 1.0
        %v1396 = vadd.f32 %v1377, 1.0
        %v1397 = vadd.f32 %v1379, 1.0
        %v1398 = vadd.f32 %v1381, 1.0
        %v1399 = vadd.f32 %v1383, 1.0
        %v1400 = vrcp.pop %v1384
        %v1401 = vmul.f32 1.0, %v1400
        %v1402 = vrcp.pop %v1385
        %v1403 = vmul.f32 1.0, %v1402
        %v1404 = vrcp.pop %v1386
        %v1405 = vmul.f32 1.0, %v1404
        %v1406 = vrcp.pop %v1387
        %v1407 = vmul.f32 1.0, %v1406
        %v1408 = vrcp.pop %v1388
        %v1409 = vmul.f32 1.0, %v1408
        %v1410 = vrcp.pop %v1389
        %v1411 = vmul.f32 1.0, %v1410
        %v1412 = vrcp.pop %v1390
        %v1413 = vmul.f32 1.0, %v1412
        %v1414 = vrcp.pop %v1391
        %v1415 = vmul.f32 1.0, %v1414
        %v1416 = vrcp.pop %v1392
        %v1417 = vmul.f32 1.0, %v1416
        %v1418 = vrcp.pop %v1393
        %v1419 = vmul.f32 1.0, %v1418
        %v1420 = vrcp.pop %v1394
        %v1421 = vmul.f32 1.0, %v1420
        %v1422 = vrcp.pop %v1395
        %v1423 = vmul.f32 1.0, %v1422
        %v1424 = vrcp.pop %v1396
        %v1425 = vmul.f32 1.0, %v1424
        %v1426 = vrcp.pop %v1397
        %v1427 = vmul.f32 1.0, %v1426
        %v1428 = vrcp.pop %v1398
        %v1429 = vmul.f32 1.0, %v1428
        %v1430 = vrcp.pop %v1399
        %v1431 = vmul.f32 1.0, %v1430
        %v1432 = vtanh.pop %v1128
        %v1433 = vtanh.pop %v1129
        %v1434 = vtanh.pop %v1130
        %v1435 = vtanh.pop %v1131
        %v1436 = vtanh.pop %v1132
        %v1437 = vtanh.pop %v1133
        %v1438 = vtanh.pop %v1134
        %v1439 = vtanh.pop %v1135
        %v1440 = vtanh.pop %v1136
        %v1441 = vtanh.pop %v1137
        %v1442 = vtanh.pop %v1138
        %v1443 = vtanh.pop %v1139
        %v1444 = vtanh.pop %v1140
        %v1445 = vtanh.pop %v1141
        %v1446 = vtanh.pop %v1142
        %v1447 = vtanh.pop %v1143
        %v1448 = vld [vmem:[#allocation3] sm:$0xff]
        %v1449 = vld [vmem:[#allocation3 + $0x8] sm:$0xff]
        %v1450 = vld [vmem:[#allocation3 + $0x10] sm:$0xff]
        %v1451 = vld [vmem:[#allocation3 + $0x18] sm:$0xff]
        %v1452 = vld [vmem:[#allocation3 + $0x20] sm:$0xff]
        %v1453 = vld [vmem:[#allocation3 + $0x28] sm:$0xff]
        %v1454 = vld [vmem:[#allocation3 + $0x30] sm:$0xff]
        %v1455 = vld [vmem:[#allocation3 + $0x38] sm:$0xff]
        %v1456 = vld [vmem:[#allocation3 + $0x40] sm:$0xff]
        %v1457 = vld [vmem:[#allocation3 + $0x48] sm:$0xff]
        %v1458 = vld [vmem:[#allocation3 + $0x50] sm:$0xff]
        %v1459 = vld [vmem:[#allocation3 + $0x58] sm:$0xff]
        %v1460 = vld [vmem:[#allocation3 + $0x60] sm:$0xff]
        %v1461 = vld [vmem:[#allocation3 + $0x68] sm:$0xff]
        %v1462 = vld [vmem:[#allocation3 + $0x70] sm:$0xff]
        %v1463 = vld [vmem:[#allocation3 + $0x78] sm:$0xff]
        %v1464 = vmul.f32 %v1305, %v1448
        %v1465 = vmul.f32 %v1307, %v1449
        %v1466 = vmul.f32 %v1309, %v1450
        %v1467 = vmul.f32 %v1311, %v1451
        %v1468 = vmul.f32 %v1313, %v1452
        %v1469 = vmul.f32 %v1315, %v1453
        %v1470 = vmul.f32 %v1317, %v1454
        %v1471 = vmul.f32 %v1319, %v1455
        %v1472 = vmul.f32 %v1321, %v1456
        %v1473 = vmul.f32 %v1323, %v1457
        %v1474 = vmul.f32 %v1325, %v1458
        %v1475 = vmul.f32 %v1327, %v1459
        %v1476 = vmul.f32 %v1329, %v1460
        %v1477 = vmul.f32 %v1331, %v1461
        %v1478 = vmul.f32 %v1333, %v1462
        %v1479 = vmul.f32 %v1335, %v1463
        %v1480 = vmul.f32 %v1209, %v1432
        %v1481 = vmul.f32 %v1211, %v1433
        %v1482 = vmul.f32 %v1213, %v1434
        %v1483 = vmul.f32 %v1215, %v1435
        %v1484 = vmul.f32 %v1217, %v1436
        %v1485 = vmul.f32 %v1219, %v1437
        %v1486 = vmul.f32 %v1221, %v1438
        %v1487 = vmul.f32 %v1223, %v1439
        %v1488 = vmul.f32 %v1225, %v1440
        %v1489 = vmul.f32 %v1227, %v1441
        %v1490 = vmul.f32 %v1229, %v1442
        %v1491 = vmul.f32 %v1231, %v1443
        %v1492 = vmul.f32 %v1233, %v1444
        %v1493 = vmul.f32 %v1235, %v1445
        %v1494 = vmul.f32 %v1237, %v1446
        %v1495 = vmul.f32 %v1239, %v1447
        %v1496 = vadd.f32 %v1464, %v1480
        %v1497 = vadd.f32 %v1465, %v1481
        %v1498 = vadd.f32 %v1466, %v1482
        %v1499 = vadd.f32 %v1467, %v1483
        %v1500 = vadd.f32 %v1468, %v1484
        %v1501 = vadd.f32 %v1469, %v1485
        %v1502 = vadd.f32 %v1470, %v1486
        %v1503 = vadd.f32 %v1471, %v1487
        %v1504 = vadd.f32 %v1472, %v1488
        %v1505 = vadd.f32 %v1473, %v1489
        %v1506 = vadd.f32 %v1474, %v1490
        %v1507 = vadd.f32 %v1475, %v1491
        %v1508 = vadd.f32 %v1476, %v1492
        %v1509 = vadd.f32 %v1477, %v1493
        %v1510 = vadd.f32 %v1478, %v1494
        %v1511 = vadd.f32 %v1479, %v1495
        %v1512 = vtanh.pop %v1496
        %v1513 = vtanh.pop %v1497
        %v1514 = vtanh.pop %v1498
        %v1515 = vtanh.pop %v1499
        %v1516 = vtanh.pop %v1500
        %v1517 = vtanh.pop %v1501
        %v1518 = vtanh.pop %v1502
        %v1519 = vtanh.pop %v1503
        %v1520 = vtanh.pop %v1504
        %v1521 = vtanh.pop %v1505
        %v1522 = vtanh.pop %v1506
        %v1523 = vtanh.pop %v1507
        %v1524 = vtanh.pop %v1508
        %v1525 = vtanh.pop %v1509
        %v1526 = vtanh.pop %v1510
        %v1527 = vtanh.pop %v1511
        %v1528 = vmul.f32 %v1401, %v1512
        %v1529 = vmul.f32 %v1403, %v1513
        %v1530 = vmul.f32 %v1405, %v1514
        %v1531 = vmul.f32 %v1407, %v1515
        %v1532 = vmul.f32 %v1409, %v1516
        %v1533 = vmul.f32 %v1411, %v1517
        %v1534 = vmul.f32 %v1413, %v1518
        %v1535 = vmul.f32 %v1415, %v1519
        %v1536 = vmul.f32 %v1417, %v1520
        %v1537 = vmul.f32 %v1419, %v1521
        %v1538 = vmul.f32 %v1421, %v1522
        %v1539 = vmul.f32 %v1423, %v1523
        %v1540 = vmul.f32 %v1425, %v1524
        %v1541 = vmul.f32 %v1427, %v1525
        %v1542 = vmul.f32 %v1429, %v1526
        %v1543 = vmul.f32 %v1431, %v1527
        %1544 = vst [vmem:[#allocation3] sm:$0xff] %v1496
        %1545 = vst [vmem:[#allocation3 + $0x8] sm:$0xff] %v1497
        %1546 = vst [vmem:[#allocation3 + $0x10] sm:$0xff] %v1498
        %1547 = vst [vmem:[#allocation3 + $0x18] sm:$0xff] %v1499
        %1548 = vst [vmem:[#allocation3 + $0x20] sm:$0xff] %v1500
        %1549 = vst [vmem:[#allocation3 + $0x28] sm:$0xff] %v1501
        %1550 = vst [vmem:[#allocation3 + $0x30] sm:$0xff] %v1502
        %1551 = vst [vmem:[#allocation3 + $0x38] sm:$0xff] %v1503
        %1552 = vst [vmem:[#allocation3 + $0x40] sm:$0xff] %v1504
        %1553 = vst [vmem:[#allocation3 + $0x48] sm:$0xff] %v1505
        %1554 = vst [vmem:[#allocation3 + $0x50] sm:$0xff] %v1506
        %1555 = vst [vmem:[#allocation3 + $0x58] sm:$0xff] %v1507
        %1556 = vst [vmem:[#allocation3 + $0x60] sm:$0xff] %v1508
        %1557 = vst [vmem:[#allocation3 + $0x68] sm:$0xff] %v1509
        %1558 = vst [vmem:[#allocation3 + $0x70] sm:$0xff] %v1510
        %1559 = vst [vmem:[#allocation3 + $0x78] sm:$0xff] %v1511
        %v1560 = vld [vmem:[%s2] sm:$0xf]
        %v1561 = vld [vmem:[%s2 + $0x4] sm:$0xf]
        %v1562 = vld [vmem:[%s2 + $0x8] sm:$0xf]
        %v1563 = vld [vmem:[%s2 + $0xc] sm:$0xf]
        %v1564 = vld [vmem:[%s2 + $0x10] sm:$0xf]
        %v1565 = vld [vmem:[%s2 + $0x14] sm:$0xf]
        %v1566 = vpack.c.bf16 %v1532, %v1528
        %v1567 = vpack.c.bf16 %v1533, %v1529
        %v1568 = vpack.c.bf16 %v1534, %v1530
        %v1569 = vpack.c.bf16 %v1535, %v1531
        %v1570 = vpack.c.bf16 %v1540, %v1536
        %v1571 = vpack.c.bf16 %v1541, %v1537
        %v1572 = vpack.c.bf16 %v1542, %v1538
        %v1573 = vpack.c.bf16 %v1543, %v1539
        %v1574 = vld [vmem:[%s3] sm:$0xff]
        %v1575 = vld [vmem:[%s3 + $0x8] sm:$0xff]
        %v1576 = vld [vmem:[%s3 + $0x10] sm:$0xff]
        %v1577 = vld [vmem:[%s3 + $0x18] sm:$0xff]
        %v1578 = vld [vmem:[%s3 + $0x20] sm:$0xff]
        %v1579 = vld [vmem:[%s3 + $0x28] sm:$0xff]
        %1581 = vset.pattern.permute.xlu0 0
        %1582 = vperm.xlu0 %1581, %v1574
        %v1583 = vpop.permute.xlu0 %1582
        %1586 = vset.pattern.permute.xlu0 0
        %1587 = vperm.xlu0 %1586, %v1575
        %v1588 = vpop.permute.xlu0 %1587
        %1591 = vset.pattern.permute.xlu0 0
        %1592 = vperm.xlu0 %1591, %v1576
        %v1593 = vpop.permute.xlu0 %1592
        %1596 = vset.pattern.permute.xlu0 0
        %1597 = vperm.xlu0 %1596, %v1577
        %v1598 = vpop.permute.xlu0 %1597
        %1601 = vset.pattern.permute.xlu0 0
        %1602 = vperm.xlu0 %1601, %v1578
        %v1603 = vpop.permute.xlu0 %1602
        %1606 = vset.pattern.permute.xlu0 0
        %1607 = vperm.xlu0 %1606, %v1579
        %v1608 = vpop.permute.xlu0 %1607
        %v1616 = vunpack.c.l.b16 %v1560
        %v1617 = vunpack.c.l.b16 %v1561
        %v1618 = vunpack.c.l.b16 %v1562
        %v1619 = vunpack.c.l.b16 %v1563
        %v1620 = vunpack.c.l.b16 %v1564
        %v1621 = vunpack.c.l.b16 %v1565
        %v1622 = vpack.c.b16 %v1617, %v1616
        %v1623 = vpack.c.b16 %v1619, %v1618
        %v1624 = vpack.c.b16 %v1621, %v1620
        %v1626 = vsel %vm603, %v1622, 0
        %v1629 = vsel %vm603, %v1623, 0
        %v1632 = vsel %vm603, %v1624, 0
        %1634 = vmatprep.subr.bf16.mxu0 %v1567
        %1635 = vmatpush1.bf16.msra.mxu0 %v1566
        %1636 = vmatprep.subr.bf16.mxu0 %v1571
        %1637 = vmatpush1.bf16.msra.mxu0 %v1570
        %1638 = vmatprep.subr.bf16.mxu0 0
        %1639 = vmatpush1.bf16.msra.mxu0 0
        %1640 = vmatprep.subr.bf16.mxu0 0
        %1641 = vmatpush1.bf16.msra.mxu0 0
        %1642 = vmatprep.subr.bf16.mxu0 0
        %1643 = vmatpush1.bf16.msra.mxu0 0
        %1644 = vmatprep.subr.bf16.mxu0 0
        %1645 = vmatpush1.bf16.msra.mxu0 0
        %1646 = vmatprep.subr.bf16.mxu0 0
        %1647 = vmatpush1.bf16.msra.mxu0 0
        %1648 = vmatprep.subr.bf16.mxu0 0
        %1649 = vmatpush1.bf16.msra.mxu0 0
        %1650 = vmatprep.subr.bf16.mxu0 0
        %1651 = vmatpush1.bf16.msra.mxu0 0
        %1652 = vmatprep.subr.bf16.mxu0 0
        %1653 = vmatpush1.bf16.msra.mxu0 0
        %1654 = vmatprep.subr.bf16.mxu0 0
        %1655 = vmatpush1.bf16.msra.mxu0 0
        %1656 = vmatprep.subr.bf16.mxu0 0
        %1657 = vmatpush1.bf16.msra.mxu0 0
        %1658 = vmatprep.subr.bf16.mxu0 0
        %1659 = vmatpush1.bf16.msra.mxu0 0
        %1660 = vmatprep.subr.bf16.mxu0 0
        %1661 = vmatpush1.bf16.msra.mxu0 0
        %1662 = vmatprep.subr.bf16.mxu0 0
        %1663 = vmatpush1.bf16.msra.mxu0 0
        %1664 = vmatprep.subr.bf16.mxu0 0
        %1665 = vmatpush1.bf16.msra.mxu0 0
        %1666 = vmatprep.mubr.bf16.mxu0 0
        %1667 = vmatmul.mubr.bf16.gmra.mrb[0].mxu0 %v1626
        %v1668 = vpop.f32.mrb[0].mxu0
        %v1669 = vadd.f32 %v1583, %v1668
        %v1670 = vpop.f32.mrb[0].mxu0
        %v1671 = vadd.f32 %v1583, %v1670
        %v1672 = vpop.f32.mrb[0].mxu0
        %v1673 = vadd.f32 %v1588, %v1672
        %v1674 = vpop.f32.mrb[0].mxu0
        %v1675 = vadd.f32 %v1588, %v1674
        %1676 = vmatprep.mubr.bf16.mxu0 0
        %1677 = vmatmul.mubr.bf16.gmra.mrb[0].mxu0 %v1629
        %v1678 = vpop.f32.mrb[0].mxu0
        %v1679 = vadd.f32 %v1593, %v1678
        %v1680 = vpop.f32.mrb[0].mxu0
        %v1681 = vadd.f32 %v1593, %v1680
        %v1682 = vpop.f32.mrb[0].mxu0
        %v1683 = vadd.f32 %v1598, %v1682
        %v1684 = vpop.f32.mrb[0].mxu0
        %v1685 = vadd.f32 %v1598, %v1684
        %1686 = vmatprep.mubr.bf16.mxu0 0
        %1687 = vmatmul.mubr.bf16.gmra.mrb[0].mxu0 %v1632
        %v1688 = vpop.f32.mrb[0].mxu0
        %v1689 = vadd.f32 %v1603, %v1688
        %v1690 = vpop.f32.mrb[0].mxu0
        %v1691 = vadd.f32 %v1603, %v1690
        %v1692 = vpop.f32.mrb[0].mxu0
        %v1693 = vadd.f32 %v1608, %v1692
        %v1694 = vpop.f32.mrb[0].mxu0
        %v1695 = vadd.f32 %v1608, %v1694
        %1696 = vdwg.mxu0
        %1697 = vmatprep.subr.bf16.mxu0 %v1569
        %1698 = vmatpush1.bf16.msra.mxu0 %v1568
        %1699 = vmatprep.subr.bf16.mxu0 %v1573
        %1700 = vmatpush1.bf16.msra.mxu0 %v1572
        %1701 = vmatprep.subr.bf16.mxu0 0
        %1702 = vmatpush1.bf16.msra.mxu0 0
        %1703 = vmatprep.subr.bf16.mxu0 0
        %1704 = vmatpush1.bf16.msra.mxu0 0
        %1705 = vmatprep.subr.bf16.mxu0 0
        %1706 = vmatpush1.bf16.msra.mxu0 0
        %1707 = vmatprep.subr.bf16.mxu0 0
        %1708 = vmatpush1.bf16.msra.mxu0 0
        %1709 = vmatprep.subr.bf16.mxu0 0
        %1710 = vmatpush1.bf16.msra.mxu0 0
        %1711 = vmatprep.subr.bf16.mxu0 0
        %1712 = vmatpush1.bf16.msra.mxu0 0
        %1713 = vmatprep.subr.bf16.mxu0 0
        %1714 = vmatpush1.bf16.msra.mxu0 0
        %1715 = vmatprep.subr.bf16.mxu0 0
        %1716 = vmatpush1.bf16.msra.mxu0 0
        %1717 = vmatprep.subr.bf16.mxu0 0
        %1718 = vmatpush1.bf16.msra.mxu0 0
        %1719 = vmatprep.subr.bf16.mxu0 0
        %1720 = vmatpush1.bf16.msra.mxu0 0
        %1721 = vmatprep.subr.bf16.mxu0 0
        %1722 = vmatpush1.bf16.msra.mxu0 0
        %1723 = vmatprep.subr.bf16.mxu0 0
        %1724 = vmatpush1.bf16.msra.mxu0 0
        %1725 = vmatprep.subr.bf16.mxu0 0
        %1726 = vmatpush1.bf16.msra.mxu0 0
        %1727 = vmatprep.subr.bf16.mxu0 0
        %1728 = vmatpush1.bf16.msra.mxu0 0
        %1729 = vmatprep.mubr.bf16.mxu0 0
        %1730 = vmatmul.mubr.bf16.gmra.mrb[0].mxu0 %v1626
        %v1731 = vpop.f32.mrb[0].mxu0
        %v1732 = vadd.f32 %v1583, %v1731
        %v1733 = vpop.f32.mrb[0].mxu0
        %v1734 = vadd.f32 %v1583, %v1733
        %v1735 = vpop.f32.mrb[0].mxu0
        %v1736 = vadd.f32 %v1588, %v1735
        %v1737 = vpop.f32.mrb[0].mxu0
        %v1738 = vadd.f32 %v1588, %v1737
        %1739 = vmatprep.mubr.bf16.mxu0 0
        %1740 = vmatmul.mubr.bf16.gmra.mrb[0].mxu0 %v1629
        %v1741 = vpop.f32.mrb[0].mxu0
        %v1742 = vadd.f32 %v1593, %v1741
        %v1743 = vpop.f32.mrb[0].mxu0
        %v1744 = vadd.f32 %v1593, %v1743
        %v1745 = vpop.f32.mrb[0].mxu0
        %v1746 = vadd.f32 %v1598, %v1745
        %v1747 = vpop.f32.mrb[0].mxu0
        %v1748 = vadd.f32 %v1598, %v1747
        %1749 = vmatprep.mubr.bf16.mxu0 0
        %1750 = vmatmul.mubr.bf16.gmra.mrb[0].mxu0 %v1632
        %v1751 = vpop.f32.mrb[0].mxu0
        %v1752 = vadd.f32 %v1603, %v1751
        %v1753 = vpop.f32.mrb[0].mxu0
        %v1754 = vadd.f32 %v1603, %v1753
        %v1755 = vpop.f32.mrb[0].mxu0
        %v1756 = vadd.f32 %v1608, %v1755
        %v1757 = vpop.f32.mrb[0].mxu0
        %v1758 = vadd.f32 %v1608, %v1757
        %1759 = vdwg.mxu0
        %s1760 = sld [smem:[#allocation4]]
        %v1761 = vlaneseq
        %v1762 = vand.u32 %v1761, 127
        %v1763 = vadd.s32 %v1762, 128
        %v1764 = vand.u32 %v1762, 15
        %v1765 = vand.u32 %v1763, 15
        %1766 = vxpose.xlu0.b32.start [1/16] %v1669, 128
        %1767 = vxpose.xlu0.b32.cont [2/16] 0.0, 128
        %1768 = vxpose.xlu0.b32.cont [3/16] 0.0, 128
        %1769 = vxpose.xlu0.b32.cont [4/16] 0.0, 128
        %1770 = vxpose.xlu0.b32.cont [5/16] 0.0, 128
        %1771 = vxpose.xlu0.b32.cont [6/16] 0.0, 128
        %1772 = vxpose.xlu0.b32.cont [7/16] 0.0, 128
        %1773 = vxpose.xlu0.b32.cont [8/16] 0.0, 128
        %1774 = vxpose.xlu0.b32.cont [9/16] 0.0, 128
        %1775 = vxpose.xlu0.b32.cont [10/16] 0.0, 128
        %1776 = vxpose.xlu0.b32.cont [11/16] 0.0, 128
        %1777 = vxpose.xlu0.b32.cont [12/16] 0.0, 128
        %1778 = vxpose.xlu0.b32.cont [13/16] 0.0, 128
        %1779 = vxpose.xlu0.b32.cont [14/16] 0.0, 128
        %1780 = vxpose.xlu0.b32.cont [15/16] 0.0, 128
        %1781 = vxpose.xlu0.b32.end [16/16] 0.0, 128
        %v1782 = vpop.trf.xlu0
        %v1783 = vpop.trf.xlu0
        %v1784 = vpop.trf.xlu0
        %v1785 = vpop.trf.xlu0
        %v1786 = vpop.trf.xlu0
        %v1787 = vpop.trf.xlu0
        %v1788 = vpop.trf.xlu0
        %v1789 = vpop.trf.xlu0
        %v1790 = vpop.trf.xlu0
        %v1791 = vpop.trf.xlu0
        %v1792 = vpop.trf.xlu0
        %v1793 = vpop.trf.xlu0
        %v1794 = vpop.trf.xlu0
        %v1795 = vpop.trf.xlu0
        %v1796 = vpop.trf.xlu0
        %v1797 = vpop.trf.xlu0
        %1798 = vxpose.xlu0.b32.start [1/16] %v1671, 128
        %1799 = vxpose.xlu0.b32.cont [2/16] 0.0, 128
        %1800 = vxpose.xlu0.b32.cont [3/16] 0.0, 128
        %1801 = vxpose.xlu0.b32.cont [4/16] 0.0, 128
        %1802 = vxpose.xlu0.b32.cont [5/16] 0.0, 128
        %1803 = vxpose.xlu0.b32.cont [6/16] 0.0, 128
        %1804 = vxpose.xlu0.b32.cont [7/16] 0.0, 128
        %1805 = vxpose.xlu0.b32.cont [8/16] 0.0, 128
        %1806 = vxpose.xlu0.b32.cont [9/16] 0.0, 128
        %1807 = vxpose.xlu0.b32.cont [10/16] 0.0, 128
        %1808 = vxpose.xlu0.b32.cont [11/16] 0.0, 128
        %1809 = vxpose.xlu0.b32.cont [12/16] 0.0, 128
        %1810 = vxpose.xlu0.b32.cont [13/16] 0.0, 128
        %1811 = vxpose.xlu0.b32.cont [14/16] 0.0, 128
        %1812 = vxpose.xlu0.b32.cont [15/16] 0.0, 128
        %1813 = vxpose.xlu0.b32.end [16/16] 0.0, 128
        %v1814 = vpop.trf.xlu0
        %v1815 = vpop.trf.xlu0
        %v1816 = vpop.trf.xlu0
        %v1817 = vpop.trf.xlu0
        %v1818 = vpop.trf.xlu0
        %v1819 = vpop.trf.xlu0
        %v1820 = vpop.trf.xlu0
        %v1821 = vpop.trf.xlu0
        %v1822 = vpop.trf.xlu0
        %v1823 = vpop.trf.xlu0
        %v1824 = vpop.trf.xlu0
        %v1825 = vpop.trf.xlu0
        %v1826 = vpop.trf.xlu0
        %v1827 = vpop.trf.xlu0
        %v1828 = vpop.trf.xlu0
        %v1829 = vpop.trf.xlu0
        %v1830 = vpack.c.bf16 %v1783, %v1782
        %v1831 = vpack.c.bf16 %v1785, %v1784
        %v1832 = vpack.c.bf16 %v1787, %v1786
        %v1833 = vpack.c.bf16 %v1789, %v1788
        %v1834 = vpack.c.bf16 %v1791, %v1790
        %v1835 = vpack.c.bf16 %v1793, %v1792
        %v1836 = vpack.c.bf16 %v1795, %v1794
        %v1837 = vpack.c.bf16 %v1797, %v1796
        %v1838 = vpack.c.bf16 %v1815, %v1814
        %v1839 = vpack.c.bf16 %v1817, %v1816
        %v1840 = vpack.c.bf16 %v1819, %v1818
        %v1841 = vpack.c.bf16 %v1821, %v1820
        %v1842 = vpack.c.bf16 %v1823, %v1822
        %v1843 = vpack.c.bf16 %v1825, %v1824
        %v1844 = vpack.c.bf16 %v1827, %v1826
        %v1845 = vpack.c.bf16 %v1829, %v1828
        %v1846 = vpack.c.bf16 %v1673, %v1673
        %v1847 = vpack.c.bf16 %v1675, %v1675
        %vm1848 = vcmask 64512
        %v1850 = vsel %vm1848, %v1830, 0
        %v1853 = vsel %vm1848, %v1831, 0
        %v1856 = vsel %vm1848, %v1832, 0
        %v1859 = vsel %vm1848, %v1833, 0
        %v1862 = vsel %vm1848, %v1834, 0
        %v1865 = vsel %vm1848, %v1835, 0
        %v1868 = vsel %vm1848, %v1836, 0
        %v1871 = vsel %vm1848, %v1837, 0
        %v1874 = vsel %vm1848, %v1838, 0
        %v1877 = vsel %vm1848, %v1839, 0
        %v1880 = vsel %vm1848, %v1840, 0
        %v1883 = vsel %vm1848, %v1841, 0
        %v1886 = vsel %vm1848, %v1842, 0
        %v1889 = vsel %vm1848, %v1843, 0
        %v1892 = vsel %vm1848, %v1844, 0
        %v1895 = vsel %vm1848, %v1845, 0
        %vm1897 = vcmask 1043456
        %v1899 = vsel %vm1897, %v1846, 0
        %v1902 = vsel %vm1897, %v1847, 0
        %1904 = vmatprep.subr.bf16.mxu0 %v1902
        %1905 = vmatpush1.bf16.msra.mxu0 %v1899
        %1906 = vmatprep.subr.bf16.mxu0 0
        %1907 = vmatpush1.bf16.msra.mxu0 0
        %1908 = vmatprep.subr.bf16.mxu0 0
        %1909 = vmatpush1.bf16.msra.mxu0 0
        %1910 = vmatprep.subr.bf16.mxu0 0
        %1911 = vmatpush1.bf16.msra.mxu0 0
        %1912 = vmatprep.subr.bf16.mxu0 0
        %1913 = vmatpush1.bf16.msra.mxu0 0
        %1914 = vmatprep.subr.bf16.mxu0 0
        %1915 = vmatpush1.bf16.msra.mxu0 0
        %1916 = vmatprep.subr.bf16.mxu0 0
        %1917 = vmatpush1.bf16.msra.mxu0 0
        %1918 = vmatprep.subr.bf16.mxu0 0
        %1919 = vmatpush1.bf16.msra.mxu0 0
        %1920 = vmatprep.subr.bf16.mxu0 0
        %1921 = vmatpush1.bf16.msra.mxu0 0
        %1922 = vmatprep.subr.bf16.mxu0 0
        %1923 = vmatpush1.bf16.msra.mxu0 0
        %1924 = vmatprep.subr.bf16.mxu0 0
        %1925 = vmatpush1.bf16.msra.mxu0 0
        %1926 = vmatprep.subr.bf16.mxu0 0
        %1927 = vmatpush1.bf16.msra.mxu0 0
        %1928 = vmatprep.subr.bf16.mxu0 0
        %1929 = vmatpush1.bf16.msra.mxu0 0
        %1930 = vmatprep.subr.bf16.mxu0 0
        %1931 = vmatpush1.bf16.msra.mxu0 0
        %1932 = vmatprep.subr.bf16.mxu0 0
        %1933 = vmatpush1.bf16.msra.mxu0 0
        %1934 = vmatprep.subr.bf16.mxu0 0
        %1935 = vmatpush1.bf16.msra.mxu0 0
        %1936 = vmatprep.mubr.bf16.mxu0 0
        %1937 = vmatmul.mubr.bf16.gmra.mrb[0].mxu0 %v1850
        %v1938 = vpop.f32.mrb[0].mxu0
        %v1939 = vadd.f32 0.0, %v1938
        %v1940 = vpop.f32.mrb[0].mxu0
        %v1941 = vadd.f32 0.0, %v1940
        %v1942 = vpop.f32.mrb[0].mxu0
        %v1943 = vadd.f32 0.0, %v1942
        %v1944 = vpop.f32.mrb[0].mxu0
        %v1945 = vadd.f32 0.0, %v1944
        %1946 = vmatprep.mubr.bf16.mxu0 0
        %1947 = vmatmul.mubr.bf16.gmra.mrb[0].mxu0 %v1853
        %v1948 = vpop.f32.mrb[0].mxu0
        %v1949 = vadd.f32 0.0, %v1948
        %v1950 = vpop.f32.mrb[0].mxu0
        %v1951 = vadd.f32 0.0, %v1950
        %v1952 = vpop.f32.mrb[0].mxu0
        %v1953 = vadd.f32 0.0, %v1952
        %v1954 = vpop.f32.mrb[0].mxu0
        %v1955 = vadd.f32 0.0, %v1954
        %1956 = vmatprep.mubr.bf16.mxu0 0
        %1957 = vmatmul.mubr.bf16.gmra.mrb[0].mxu0 %v1856
        %v1958 = vpop.f32.mrb[0].mxu0
        %v1959 = vadd.f32 0.0, %v1958
        %v1960 = vpop.f32.mrb[0].mxu0
        %v1961 = vadd.f32 0.0, %v1960
        %v1962 = vpop.f32.mrb[0].mxu0
        %v1963 = vadd.f32 0.0, %v1962
        %v1964 = vpop.f32.mrb[0].mxu0
        %v1965 = vadd.f32 0.0, %v1964
        %1966 = vmatprep.mubr.bf16.mxu0 0
        %1967 = vmatmul.mubr.bf16.gmra.mrb[0].mxu0 %v1859
        %v1968 = vpop.f32.mrb[0].mxu0
        %v1969 = vadd.f32 0.0, %v1968
        %v1970 = vpop.f32.mrb[0].mxu0
        %v1971 = vadd.f32 0.0, %v1970
        %v1972 = vpop.f32.mrb[0].mxu0
        %v1973 = vadd.f32 0.0, %v1972
        %v1974 = vpop.f32.mrb[0].mxu0
        %v1975 = vadd.f32 0.0, %v1974
        %1976 = vmatprep.mubr.bf16.mxu0 0
        %1977 = vmatmul.mubr.bf16.gmra.mrb[0].mxu0 %v1862
        %v1978 = vpop.f32.mrb[0].mxu0
        %v1979 = vadd.f32 0.0, %v1978
        %v1980 = vpop.f32.mrb[0].mxu0
        %v1981 = vadd.f32 0.0, %v1980
        %v1982 = vpop.f32.mrb[0].mxu0
        %v1983 = vadd.f32 0.0, %v1982
        %v1984 = vpop.f32.mrb[0].mxu0
        %v1985 = vadd.f32 0.0, %v1984
        %1986 = vmatprep.mubr.bf16.mxu0 0
        %1987 = vmatmul.mubr.bf16.gmra.mrb[0].mxu0 %v1865
        %v1988 = vpop.f32.mrb[0].mxu0
        %v1989 = vadd.f32 0.0, %v1988
        %v1990 = vpop.f32.mrb[0].mxu0
        %v1991 = vadd.f32 0.0, %v1990
        %v1992 = vpop.f32.mrb[0].mxu0
        %v1993 = vadd.f32 0.0, %v1992
        %v1994 = vpop.f32.mrb[0].mxu0
        %v1995 = vadd.f32 0.0, %v1994
        %1996 = vmatprep.mubr.bf16.mxu0 0
        %1997 = vmatmul.mubr.bf16.gmra.mrb[0].mxu0 %v1868
        %v1998 = vpop.f32.mrb[0].mxu0
        %v1999 = vadd.f32 0.0, %v1998
        %v2000 = vpop.f32.mrb[0].mxu0
        %v2001 = vadd.f32 0.0, %v2000
        %v2002 = vpop.f32.mrb[0].mxu0
        %v2003 = vadd.f32 0.0, %v2002
        %v2004 = vpop.f32.mrb[0].mxu0
        %v2005 = vadd.f32 0.0, %v2004
        %2006 = vmatprep.mubr.bf16.mxu0 0
        %2007 = vmatmul.mubr.bf16.gmra.mrb[0].mxu0 %v1871
        %v2008 = vpop.f32.mrb[0].mxu0
        %v2009 = vadd.f32 0.0, %v2008
        %v2010 = vpop.f32.mrb[0].mxu0
        %v2011 = vadd.f32 0.0, %v2010
        %v2012 = vpop.f32.mrb[0].mxu0
        %v2013 = vadd.f32 0.0, %v2012
        %v2014 = vpop.f32.mrb[0].mxu0
        %v2015 = vadd.f32 0.0, %v2014
        %2016 = vmatprep.mubr.bf16.mxu0 0
        %2017 = vmatmul.mubr.bf16.gmra.mrb[0].mxu0 %v1874
        %v2018 = vpop.f32.mrb[0].mxu0
        %v2019 = vadd.f32 0.0, %v2018
        %v2020 = vpop.f32.mrb[0].mxu0
        %v2021 = vadd.f32 0.0, %v2020
        %v2022 = vpop.f32.mrb[0].mxu0
        %v2023 = vadd.f32 0.0, %v2022
        %v2024 = vpop.f32.mrb[0].mxu0
        %v2025 = vadd.f32 0.0, %v2024
        %2026 = vmatprep.mubr.bf16.mxu0 0
        %2027 = vmatmul.mubr.bf16.gmra.mrb[0].mxu0 %v1877
        %v2028 = vpop.f32.mrb[0].mxu0
        %v2029 = vadd.f32 0.0, %v2028
        %v2030 = vpop.f32.mrb[0].mxu0
        %v2031 = vadd.f32 0.0, %v2030
        %v2032 = vpop.f32.mrb[0].mxu0
        %v2033 = vadd.f32 0.0, %v2032
        %v2034 = vpop.f32.mrb[0].mxu0
        %v2035 = vadd.f32 0.0, %v2034
        %2036 = vmatprep.mubr.bf16.mxu0 0
        %2037 = vmatmul.mubr.bf16.gmra.mrb[0].mxu0 %v1880
        %v2038 = vpop.f32.mrb[0].mxu0
        %v2039 = vadd.f32 0.0, %v2038
        %v2040 = vpop.f32.mrb[0].mxu0
        %v2041 = vadd.f32 0.0, %v2040
        %v2042 = vpop.f32.mrb[0].mxu0
        %v2043 = vadd.f32 0.0, %v2042
        %v2044 = vpop.f32.mrb[0].mxu0
        %v2045 = vadd.f32 0.0, %v2044
        %2046 = vmatprep.mubr.bf16.mxu0 0
        %2047 = vmatmul.mubr.bf16.gmra.mrb[0].mxu0 %v1883
        %v2048 = vpop.f32.mrb[0].mxu0
        %v2049 = vadd.f32 0.0, %v2048
        %v2050 = vpop.f32.mrb[0].mxu0
        %v2051 = vadd.f32 0.0, %v2050
        %v2052 = vpop.f32.mrb[0].mxu0
        %v2053 = vadd.f32 0.0, %v2052
        %v2054 = vpop.f32.mrb[0].mxu0
        %v2055 = vadd.f32 0.0, %v2054
        %2056 = vmatprep.mubr.bf16.mxu0 0
        %2057 = vmatmul.mubr.bf16.gmra.mrb[0].mxu0 %v1886
        %v2058 = vpop.f32.mrb[0].mxu0
        %v2059 = vadd.f32 0.0, %v2058
        %v2060 = vpop.f32.mrb[0].mxu0
        %v2061 = vadd.f32 0.0, %v2060
        %v2062 = vpop.f32.mrb[0].mxu0
        %v2063 = vadd.f32 0.0, %v2062
        %v2064 = vpop.f32.mrb[0].mxu0
        %v2065 = vadd.f32 0.0, %v2064
        %2066 = vmatprep.mubr.bf16.mxu0 0
        %2067 = vmatmul.mubr.bf16.gmra.mrb[0].mxu0 %v1889
        %v2068 = vpop.f32.mrb[0].mxu0
        %v2069 = vadd.f32 0.0, %v2068
        %v2070 = vpop.f32.mrb[0].mxu0
        %v2071 = vadd.f32 0.0, %v2070
        %v2072 = vpop.f32.mrb[0].mxu0
        %v2073 = vadd.f32 0.0, %v2072
        %v2074 = vpop.f32.mrb[0].mxu0
        %v2075 = vadd.f32 0.0, %v2074
        %2076 = vmatprep.mubr.bf16.mxu0 0
        %2077 = vmatmul.mubr.bf16.gmra.mrb[0].mxu0 %v1892
        %v2078 = vpop.f32.mrb[0].mxu0
        %v2079 = vadd.f32 0.0, %v2078
        %v2080 = vpop.f32.mrb[0].mxu0
        %v2081 = vadd.f32 0.0, %v2080
        %v2082 = vpop.f32.mrb[0].mxu0
        %v2083 = vadd.f32 0.0, %v2082
        %v2084 = vpop.f32.mrb[0].mxu0
        %v2085 = vadd.f32 0.0, %v2084
        %2086 = vmatprep.mubr.bf16.mxu0 0
        %2087 = vmatmul.mubr.bf16.gmra.mrb[0].mxu0 %v1895
        %v2088 = vpop.f32.mrb[0].mxu0
        %v2089 = vadd.f32 0.0, %v2088
        %v2090 = vpop.f32.mrb[0].mxu0
        %v2091 = vadd.f32 0.0, %v2090
        %v2092 = vpop.f32.mrb[0].mxu0
        %v2093 = vadd.f32 0.0, %v2092
        %v2094 = vpop.f32.mrb[0].mxu0
        %v2095 = vadd.f32 0.0, %v2094
        %2096 = vdwg.mxu0
        %v2097 = vmax.f32 %v1939, %v1941
        %2098 = vmax.xlane.f32.xlu0 %v2097
        %v2099 = vpop.xlane.xlu0 %2098
        %v2100 = vmax.f32 %v1943, %v1945
        %2101 = vmax.xlane.f32.xlu0 %v2100
        %v2102 = vpop.xlane.xlu0 %2101
        %v2103 = vmax.f32 %v1949, %v1951
        %2104 = vmax.xlane.f32.xlu0 %v2103
        %v2105 = vpop.xlane.xlu0 %2104
        %v2106 = vmax.f32 %v1953, %v1955
        %2107 = vmax.xlane.f32.xlu0 %v2106
        %v2108 = vpop.xlane.xlu0 %2107
        %v2109 = vmax.f32 %v1959, %v1961
        %2110 = vmax.xlane.f32.xlu0 %v2109
        %v2111 = vpop.xlane.xlu0 %2110
        %v2112 = vmax.f32 %v1963, %v1965
        %2113 = vmax.xlane.f32.xlu0 %v2112
        %v2114 = vpop.xlane.xlu0 %2113
        %v2115 = vmax.f32 %v1969, %v1971
        %2116 = vmax.xlane.f32.xlu0 %v2115
        %v2117 = vpop.xlane.xlu0 %2116
        %v2118 = vmax.f32 %v1973, %v1975
        %2119 = vmax.xlane.f32.xlu0 %v2118
        %v2120 = vpop.xlane.xlu0 %2119
        %v2121 = vmax.f32 %v1979, %v1981
        %2122 = vmax.xlane.f32.xlu0 %v2121
        %v2123 = vpop.xlane.xlu0 %2122
        %v2124 = vmax.f32 %v1983, %v1985
        %2125 = vmax.xlane.f32.xlu0 %v2124
        %v2126 = vpop.xlane.xlu0 %2125
        %v2127 = vmax.f32 %v1989, %v1991
        %2128 = vmax.xlane.f32.xlu0 %v2127
        %v2129 = vpop.xlane.xlu0 %2128
        %v2130 = vmax.f32 %v1993, %v1995
        %2131 = vmax.xlane.f32.xlu0 %v2130
        %v2132 = vpop.xlane.xlu0 %2131
        %v2133 = vmax.f32 %v1999, %v2001
        %2134 = vmax.xlane.f32.xlu0 %v2133
        %v2135 = vpop.xlane.xlu0 %2134
        %v2136 = vmax.f32 %v2003, %v2005
        %2137 = vmax.xlane.f32.xlu0 %v2136
        %v2138 = vpop.xlane.xlu0 %2137
        %v2139 = vmax.f32 %v2009, %v2011
        %2140 = vmax.xlane.f32.xlu0 %v2139
        %v2141 = vpop.xlane.xlu0 %2140
        %v2142 = vmax.f32 %v2013, %v2015
        %2143 = vmax.xlane.f32.xlu0 %v2142
        %v2144 = vpop.xlane.xlu0 %2143
        %v2145 = vmax.f32 %v2019, %v2021
        %2146 = vmax.xlane.f32.xlu0 %v2145
        %v2147 = vpop.xlane.xlu0 %2146
        %v2148 = vmax.f32 %v2023, %v2025
        %2149 = vmax.xlane.f32.xlu0 %v2148
        %v2150 = vpop.xlane.xlu0 %2149
        %v2151 = vmax.f32 %v2029, %v2031
        %2152 = vmax.xlane.f32.xlu0 %v2151
        %v2153 = vpop.xlane.xlu0 %2152
        %v2154 = vmax.f32 %v2033, %v2035
        %2155 = vmax.xlane.f32.xlu0 %v2154
        %v2156 = vpop.xlane.xlu0 %2155
        %v2157 = vmax.f32 %v2039, %v2041
        %2158 = vmax.xlane.f32.xlu0 %v2157
        %v2159 = vpop.xlane.xlu0 %2158
        %v2160 = vmax.f32 %v2043, %v2045
        %2161 = vmax.xlane.f32.xlu0 %v2160
        %v2162 = vpop.xlane.xlu0 %2161
        %v2163 = vmax.f32 %v2049, %v2051
        %2164 = vmax.xlane.f32.xlu0 %v2163
        %v2165 = vpop.xlane.xlu0 %2164
        %v2166 = vmax.f32 %v2053, %v2055
        %2167 = vmax.xlane.f32.xlu0 %v2166
        %v2168 = vpop.xlane.xlu0 %2167
        %v2169 = vmax.f32 %v2059, %v2061
        %2170 = vmax.xlane.f32.xlu0 %v2169
        %v2171 = vpop.xlane.xlu0 %2170
        %v2172 = vmax.f32 %v2063, %v2065
        %2173 = vmax.xlane.f32.xlu0 %v2172
        %v2174 = vpop.xlane.xlu0 %2173
        %v2175 = vmax.f32 %v2069, %v2071
        %2176 = vmax.xlane.f32.xlu0 %v2175
        %v2177 = vpop.xlane.xlu0 %2176
        %v2178 = vmax.f32 %v2073, %v2075
        %2179 = vmax.xlane.f32.xlu0 %v2178
        %v2180 = vpop.xlane.xlu0 %2179
        %v2181 = vmax.f32 %v2079, %v2081
        %2182 = vmax.xlane.f32.xlu0 %v2181
        %v2183 = vpop.xlane.xlu0 %2182
        %v2184 = vmax.f32 %v2083, %v2085
        %2185 = vmax.xlane.f32.xlu0 %v2184
        %v2186 = vpop.xlane.xlu0 %2185
        %v2187 = vmax.f32 %v2089, %v2091
        %2188 = vmax.xlane.f32.xlu0 %v2187
        %v2189 = vpop.xlane.xlu0 %2188
        %v2190 = vmax.f32 %v2093, %v2095
        %2191 = vmax.xlane.f32.xlu0 %v2190
        %v2192 = vpop.xlane.xlu0 %2191
        %v2193 = vsub.f32 %v1939, %v2099
        %v2194 = vsub.f32 %v1941, %v2099
        %v2195 = vsub.f32 %v1943, %v2102
        %v2196 = vsub.f32 %v1945, %v2102
        %v2197 = vsub.f32 %v1949, %v2105
        %v2198 = vsub.f32 %v1951, %v2105
        %v2199 = vsub.f32 %v1953, %v2108
        %v2200 = vsub.f32 %v1955, %v2108
        %v2201 = vsub.f32 %v1959, %v2111
        %v2202 = vsub.f32 %v1961, %v2111
        %v2203 = vsub.f32 %v1963, %v2114
        %v2204 = vsub.f32 %v1965, %v2114
        %v2205 = vsub.f32 %v1969, %v2117
        %v2206 = vsub.f32 %v1971, %v2117
        %v2207 = vsub.f32 %v1973, %v2120
        %v2208 = vsub.f32 %v1975, %v2120
        %v2209 = vsub.f32 %v1979, %v2123
        %v2210 = vsub.f32 %v1981, %v2123
        %v2211 = vsub.f32 %v1983, %v2126
        %v2212 = vsub.f32 %v1985, %v2126
        %v2213 = vsub.f32 %v1989, %v2129
        %v2214 = vsub.f32 %v1991, %v2129
        %v2215 = vsub.f32 %v1993, %v2132
        %v2216 = vsub.f32 %v1995, %v2132
        %v2217 = vsub.f32 %v1999, %v2135
        %v2218 = vsub.f32 %v2001, %v2135
        %v2219 = vsub.f32 %v2003, %v2138
        %v2220 = vsub.f32 %v2005, %v2138
        %v2221 = vsub.f32 %v2009, %v2141
        %v2222 = vsub.f32 %v2011, %v2141
        %v2223 = vsub.f32 %v2013, %v2144
        %v2224 = vsub.f32 %v2015, %v2144
        %v2225 = vsub.f32 %v2019, %v2147
        %v2226 = vsub.f32 %v2021, %v2147
        %v2227 = vsub.f32 %v2023, %v2150
        %v2228 = vsub.f32 %v2025, %v2150
        %v2229 = vsub.f32 %v2029, %v2153
        %v2230 = vsub.f32 %v2031, %v2153
        %v2231 = vsub.f32 %v2033, %v2156
        %v2232 = vsub.f32 %v2035, %v2156
        %v2233 = vsub.f32 %v2039, %v2159
        %v2234 = vsub.f32 %v2041, %v2159
        %v2235 = vsub.f32 %v2043, %v2162
        %v2236 = vsub.f32 %v2045, %v2162
        %v2237 = vsub.f32 %v2049, %v2165
        %v2238 = vsub.f32 %v2051, %v2165
        %v2239 = vsub.f32 %v2053, %v2168
        %v2240 = vsub.f32 %v2055, %v2168
        %v2241 = vsub.f32 %v2059, %v2171
        %v2242 = vsub.f32 %v2061, %v2171
        %v2243 = vsub.f32 %v2063, %v2174
        %v2244 = vsub.f32 %v2065, %v2174
        %v2245 = vsub.f32 %v2069, %v2177
        %v2246 = vsub.f32 %v2071, %v2177
        %v2247 = vsub.f32 %v2073, %v2180
        %v2248 = vsub.f32 %v2075, %v2180
        %v2249 = vsub.f32 %v2079, %v2183
        %v2250 = vsub.f32 %v2081, %v2183
        %v2251 = vsub.f32 %v2083, %v2186
        %v2252 = vsub.f32 %v2085, %v2186
        %v2253 = vsub.f32 %v2089, %v2189
        %v2254 = vsub.f32 %v2091, %v2189
        %v2255 = vsub.f32 %v2093, %v2192
        %v2256 = vsub.f32 %v2095, %v2192
        %v2257 = vmul.f32 %v2193, 1.442695
        %v2258 = vpow.pop %v2257
        %v2259 = vmul.f32 %v2194, 1.442695
        %v2260 = vpow.pop %v2259
        %v2261 = vmul.f32 %v2195, 1.442695
        %v2262 = vpow.pop %v2261
        %v2263 = vmul.f32 %v2196, 1.442695
        %v2264 = vpow.pop %v2263
        %v2265 = vmul.f32 %v2197, 1.442695
        %v2266 = vpow.pop %v2265
        %v2267 = vmul.f32 %v2198, 1.442695
        %v2268 = vpow.pop %v2267
        %v2269 = vmul.f32 %v2199, 1.442695
        %v2270 = vpow.pop %v2269
        %v2271 = vmul.f32 %v2200, 1.442695
        %v2272 = vpow.pop %v2271
        %v2273 = vmul.f32 %v2201, 1.442695
        %v2274 = vpow.pop %v2273
        %v2275 = vmul.f32 %v2202, 1.442695
        %v2276 = vpow.pop %v2275
        %v2277 = vmul.f32 %v2203, 1.442695
        %v2278 = vpow.pop %v2277
        %v2279 = vmul.f32 %v2204, 1.442695
        %v2280 = vpow.pop %v2279
        %v2281 = vmul.f32 %v2205, 1.442695
        %v2282 = vpow.pop %v2281
        %v2283 = vmul.f32 %v2206, 1.442695
        %v2284 = vpow.pop %v2283
        %v2285 = vmul.f32 %v2207, 1.442695
        %v2286 = vpow.pop %v2285
        %v2287 = vmul.f32 %v2208, 1.442695
        %v2288 = vpow.pop %v2287
        %v2289 = vmul.f32 %v2209, 1.442695
        %v2290 = vpow.pop %v2289
        %v2291 = vmul.f32 %v2210, 1.442695
        %v2292 = vpow.pop %v2291
        %v2293 = vmul.f32 %v2211, 1.442695
        %v2294 = vpow.pop %v2293
        %v2295 = vmul.f32 %v2212, 1.442695
        %v2296 = vpow.pop %v2295
        %v2297 = vmul.f32 %v2213, 1.442695
        %v2298 = vpow.pop %v2297
        %v2299 = vmul.f32 %v2214, 1.442695
        %v2300 = vpow.pop %v2299
        %v2301 = vmul.f32 %v2215, 1.442695
        %v2302 = vpow.pop %v2301
        %v2303 = vmul.f32 %v2216, 1.442695
        %v2304 = vpow.pop %v2303
        %v2305 = vmul.f32 %v2217, 1.442695
        %v2306 = vpow.pop %v2305
        %v2307 = vmul.f32 %v2218, 1.442695
        %v2308 = vpow.pop %v2307
        %v2309 = vmul.f32 %v2219, 1.442695
        %v2310 = vpow.pop %v2309
        %v2311 = vmul.f32 %v2220, 1.442695
        %v2312 = vpow.pop %v2311
        %v2313 = vmul.f32 %v2221, 1.442695
        %v2314 = vpow.pop %v2313
        %v2315 = vmul.f32 %v2222, 1.442695
        %v2316 = vpow.pop %v2315
        %v2317 = vmul.f32 %v2223, 1.442695
        %v2318 = vpow.pop %v2317
        %v2319 = vmul.f32 %v2224, 1.442695
        %v2320 = vpow.pop %v2319
        %v2321 = vmul.f32 %v2225, 1.442695
        %v2322 = vpow.pop %v2321
        %v2323 = vmul.f32 %v2226, 1.442695
        %v2324 = vpow.pop %v2323
        %v2325 = vmul.f32 %v2227, 1.442695
        %v2326 = vpow.pop %v2325
        %v2327 = vmul.f32 %v2228, 1.442695
        %v2328 = vpow.pop %v2327
        %v2329 = vmul.f32 %v2229, 1.442695
        %v2330 = vpow.pop %v2329
        %v2331 = vmul.f32 %v2230, 1.442695
        %v2332 = vpow.pop %v2331
        %v2333 = vmul.f32 %v2231, 1.442695
        %v2334 = vpow.pop %v2333
        %v2335 = vmul.f32 %v2232, 1.442695
        %v2336 = vpow.pop %v2335
        %v2337 = vmul.f32 %v2233, 1.442695
        %v2338 = vpow.pop %v2337
        %v2339 = vmul.f32 %v2234, 1.442695
        %v2340 = vpow.pop %v2339
        %v2341 = vmul.f32 %v2235, 1.442695
        %v2342 = vpow.pop %v2341
        %v2343 = vmul.f32 %v2236, 1.442695
        %v2344 = vpow.pop %v2343
        %v2345 = vmul.f32 %v2237, 1.442695
        %v2346 = vpow.pop %v2345
        %v2347 = vmul.f32 %v2238, 1.442695
        %v2348 = vpow.pop %v2347
        %v2349 = vmul.f32 %v2239, 1.442695
        %v2350 = vpow.pop %v2349
        %v2351 = vmul.f32 %v2240, 1.442695
        %v2352 = vpow.pop %v2351
        %v2353 = vmul.f32 %v2241, 1.442695
        %v2354 = vpow.pop %v2353
        %v2355 = vmul.f32 %v2242, 1.442695
        %v2356 = vpow.pop %v2355
        %v2357 = vmul.f32 %v2243, 1.442695
        %v2358 = vpow.pop %v2357
        %v2359 = vmul.f32 %v2244, 1.442695
        %v2360 = vpow.pop %v2359
        %v2361 = vmul.f32 %v2245, 1.442695
        %v2362 = vpow.pop %v2361
        %v2363 = vmul.f32 %v2246, 1.442695
        %v2364 = vpow.pop %v2363
        %v2365 = vmul.f32 %v2247, 1.442695
        %v2366 = vpow.pop %v2365
        %v2367 = vmul.f32 %v2248, 1.442695
        %v2368 = vpow.pop %v2367
        %v2369 = vmul.f32 %v2249, 1.442695
        %v2370 = vpow.pop %v2369
        %v2371 = vmul.f32 %v2250, 1.442695
        %v2372 = vpow.pop %v2371
        %v2373 = vmul.f32 %v2251, 1.442695
        %v2374 = vpow.pop %v2373
        %v2375 = vmul.f32 %v2252, 1.442695
        %v2376 = vpow.pop %v2375
        %v2377 = vmul.f32 %v2253, 1.442695
        %v2378 = vpow.pop %v2377
        %v2379 = vmul.f32 %v2254, 1.442695
        %v2380 = vpow.pop %v2379
        %v2381 = vmul.f32 %v2255, 1.442695
        %v2382 = vpow.pop %v2381
        %v2383 = vmul.f32 %v2256, 1.442695
        %v2384 = vpow.pop %v2383
        %v2385 = vadd.f32 %v2258, %v2260
        %2386 = vadd.xlane.f32.xlu0 %v2385
        %v2387 = vpop.xlane.xlu0 %2386
        %v2388 = vadd.f32 %v2262, %v2264
        %2389 = vadd.xlane.f32.xlu0 %v2388
        %v2390 = vpop.xlane.xlu0 %2389
        %v2391 = vadd.f32 %v2266, %v2268
        %2392 = vadd.xlane.f32.xlu0 %v2391
        %v2393 = vpop.xlane.xlu0 %2392
        %v2394 = vadd.f32 %v2270, %v2272
        %2395 = vadd.xlane.f32.xlu0 %v2394
        %v2396 = vpop.xlane.xlu0 %2395
        %v2397 = vadd.f32 %v2274, %v2276
        %2398 = vadd.xlane.f32.xlu0 %v2397
        %v2399 = vpop.xlane.xlu0 %2398
        %v2400 = vadd.f32 %v2278, %v2280
        %2401 = vadd.xlane.f32.xlu0 %v2400
        %v2402 = vpop.xlane.xlu0 %2401
        %v2403 = vadd.f32 %v2282, %v2284
        %2404 = vadd.xlane.f32.xlu0 %v2403
        %v2405 = vpop.xlane.xlu0 %2404
        %v2406 = vadd.f32 %v2286, %v2288
        %2407 = vadd.xlane.f32.xlu0 %v2406
        %v2408 = vpop.xlane.xlu0 %2407
        %v2409 = vadd.f32 %v2290, %v2292
        %2410 = vadd.xlane.f32.xlu0 %v2409
        %v2411 = vpop.xlane.xlu0 %2410
        %v2412 = vadd.f32 %v2294, %v2296
        %2413 = vadd.xlane.f32.xlu0 %v2412
        %v2414 = vpop.xlane.xlu0 %2413
        %v2415 = vadd.f32 %v2298, %v2300
        %2416 = vadd.xlane.f32.xlu0 %v2415
        %v2417 = vpop.xlane.xlu0 %2416
        %v2418 = vadd.f32 %v2302, %v2304
        %2419 = vadd.xlane.f32.xlu0 %v2418
        %v2420 = vpop.xlane.xlu0 %2419
        %v2421 = vadd.f32 %v2306, %v2308
        %2422 = vadd.xlane.f32.xlu0 %v2421
        %v2423 = vpop.xlane.xlu0 %2422
        %v2424 = vadd.f32 %v2310, %v2312
        %2425 = vadd.xlane.f32.xlu0 %v2424
        %v2426 = vpop.xlane.xlu0 %2425
        %v2427 = vadd.f32 %v2314, %v2316
        %2428 = vadd.xlane.f32.xlu0 %v2427
        %v2429 = vpop.xlane.xlu0 %2428
        %v2430 = vadd.f32 %v2318, %v2320
        %2431 = vadd.xlane.f32.xlu0 %v2430
        %v2432 = vpop.xlane.xlu0 %2431
        %v2433 = vadd.f32 %v2322, %v2324
        %2434 = vadd.xlane.f32.xlu0 %v2433
        %v2435 = vpop.xlane.xlu0 %2434
        %v2436 = vadd.f32 %v2326, %v2328
        %2437 = vadd.xlane.f32.xlu0 %v2436
        %v2438 = vpop.xlane.xlu0 %2437
        %v2439 = vadd.f32 %v2330, %v2332
        %2440 = vadd.xlane.f32.xlu0 %v2439
        %v2441 = vpop.xlane.xlu0 %2440
        %v2442 = vadd.f32 %v2334, %v2336
        %2443 = vadd.xlane.f32.xlu0 %v2442
        %v2444 = vpop.xlane.xlu0 %2443
        %v2445 = vadd.f32 %v2338, %v2340
        %2446 = vadd.xlane.f32.xlu0 %v2445
        %v2447 = vpop.xlane.xlu0 %2446
        %v2448 = vadd.f32 %v2342, %v2344
        %2449 = vadd.xlane.f32.xlu0 %v2448
        %v2450 = vpop.xlane.xlu0 %2449
        %v2451 = vadd.f32 %v2346, %v2348
        %2452 = vadd.xlane.f32.xlu0 %v2451
        %v2453 = vpop.xlane.xlu0 %2452
        %v2454 = vadd.f32 %v2350, %v2352
        %2455 = vadd.xlane.f32.xlu0 %v2454
        %v2456 = vpop.xlane.xlu0 %2455
        %v2457 = vadd.f32 %v2354, %v2356
        %2458 = vadd.xlane.f32.xlu0 %v2457
        %v2459 = vpop.xlane.xlu0 %2458
        %v2460 = vadd.f32 %v2358, %v2360
        %2461 = vadd.xlane.f32.xlu0 %v2460
        %v2462 = vpop.xlane.xlu0 %2461
        %v2463 = vadd.f32 %v2362, %v2364
        %2464 = vadd.xlane.f32.xlu0 %v2463
        %v2465 = vpop.xlane.xlu0 %2464
        %v2466 = vadd.f32 %v2366, %v2368
        %2467 = vadd.xlane.f32.xlu0 %v2466
        %v2468 = vpop.xlane.xlu0 %2467
        %v2469 = vadd.f32 %v2370, %v2372
        %2470 = vadd.xlane.f32.xlu0 %v2469
        %v2471 = vpop.xlane.xlu0 %2470
        %v2472 = vadd.f32 %v2374, %v2376
        %2473 = vadd.xlane.f32.xlu0 %v2472
        %v2474 = vpop.xlane.xlu0 %2473
        %v2475 = vadd.f32 %v2378, %v2380
        %2476 = vadd.xlane.f32.xlu0 %v2475
        %v2477 = vpop.xlane.xlu0 %2476
        %v2478 = vadd.f32 %v2382, %v2384
        %2479 = vadd.xlane.f32.xlu0 %v2478
        %v2480 = vpop.xlane.xlu0 %2479
        %v2481 = vrcp.pop %v2387
        %v2482 = vrcp.pop %v2390
        %v2483 = vrcp.pop %v2393
        %v2484 = vrcp.pop %v2396
        %v2485 = vrcp.pop %v2399
        %v2486 = vrcp.pop %v2402
        %v2487 = vrcp.pop %v2405
        %v2488 = vrcp.pop %v2408
        %v2489 = vrcp.pop %v2411
        %v2490 = vrcp.pop %v2414
        %v2491 = vrcp.pop %v2417
        %v2492 = vrcp.pop %v2420
        %v2493 = vrcp.pop %v2423
        %v2494 = vrcp.pop %v2426
        %v2495 = vrcp.pop %v2429
        %v2496 = vrcp.pop %v2432
        %v2497 = vrcp.pop %v2435
        %v2498 = vrcp.pop %v2438
        %v2499 = vrcp.pop %v2441
        %v2500 = vrcp.pop %v2444
        %v2501 = vrcp.pop %v2447
        %v2502 = vrcp.pop %v2450
        %v2503 = vrcp.pop %v2453
        %v2504 = vrcp.pop %v2456
        %v2505 = vrcp.pop %v2459
        %v2506 = vrcp.pop %v2462
        %v2507 = vrcp.pop %v2465
        %v2508 = vrcp.pop %v2468
        %v2509 = vrcp.pop %v2471
        %v2510 = vrcp.pop %v2474
        %v2511 = vrcp.pop %v2477
        %v2512 = vrcp.pop %v2480
        %v2513 = vmul.f32 %v2258, %v2481
        %v2514 = vmul.f32 %v2260, %v2481
        %v2515 = vmul.f32 %v2262, %v2482
        %v2516 = vmul.f32 %v2264, %v2482
        %v2517 = vmul.f32 %v2266, %v2483
        %v2518 = vmul.f32 %v2268, %v2483
        %v2519 = vmul.f32 %v2270, %v2484
        %v2520 = vmul.f32 %v2272, %v2484
        %v2521 = vmul.f32 %v2274, %v2485
        %v2522 = vmul.f32 %v2276, %v2485
        %v2523 = vmul.f32 %v2278, %v2486
        %v2524 = vmul.f32 %v2280, %v2486
        %v2525 = vmul.f32 %v2282, %v2487
        %v2526 = vmul.f32 %v2284, %v2487
        %v2527 = vmul.f32 %v2286, %v2488
        %v2528 = vmul.f32 %v2288, %v2488
        %v2529 = vmul.f32 %v2290, %v2489
        %v2530 = vmul.f32 %v2292, %v2489
        %v2531 = vmul.f32 %v2294, %v2490
        %v2532 = vmul.f32 %v2296, %v2490
        %v2533 = vmul.f32 %v2298, %v2491
        %v2534 = vmul.f32 %v2300, %v2491
        %v2535 = vmul.f32 %v2302, %v2492
        %v2536 = vmul.f32 %v2304, %v2492
        %v2537 = vmul.f32 %v2306, %v2493
        %v2538 = vmul.f32 %v2308, %v2493
        %v2539 = vmul.f32 %v2310, %v2494
        %v2540 = vmul.f32 %v2312, %v2494
        %v2541 = vmul.f32 %v2314, %v2495
        %v2542 = vmul.f32 %v2316, %v2495
        %v2543 = vmul.f32 %v2318, %v2496
        %v2544 = vmul.f32 %v2320, %v2496
        %v2545 = vmul.f32 %v2322, %v2497
        %v2546 = vmul.f32 %v2324, %v2497
        %v2547 = vmul.f32 %v2326, %v2498
        %v2548 = vmul.f32 %v2328, %v2498
        %v2549 = vmul.f32 %v2330, %v2499
        %v2550 = vmul.f32 %v2332, %v2499
        %v2551 = vmul.f32 %v2334, %v2500
        %v2552 = vmul.f32 %v2336, %v2500
        %v2553 = vmul.f32 %v2338, %v2501
        %v2554 = vmul.f32 %v2340, %v2501
        %v2555 = vmul.f32 %v2342, %v2502
        %v2556 = vmul.f32 %v2344, %v2502
        %v2557 = vmul.f32 %v2346, %v2503
        %v2558 = vmul.f32 %v2348, %v2503
        %v2559 = vmul.f32 %v2350, %v2504
        %v2560 = vmul.f32 %v2352, %v2504
        %v2561 = vmul.f32 %v2354, %v2505
        %v2562 = vmul.f32 %v2356, %v2505
        %v2563 = vmul.f32 %v2358, %v2506
        %v2564 = vmul.f32 %v2360, %v2506
        %v2565 = vmul.f32 %v2362, %v2507
        %v2566 = vmul.f32 %v2364, %v2507
        %v2567 = vmul.f32 %v2366, %v2508
        %v2568 = vmul.f32 %v2368, %v2508
        %v2569 = vmul.f32 %v2370, %v2509
        %v2570 = vmul.f32 %v2372, %v2509
        %v2571 = vmul.f32 %v2374, %v2510
        %v2572 = vmul.f32 %v2376, %v2510
        %v2573 = vmul.f32 %v2378, %v2511
        %v2574 = vmul.f32 %v2380, %v2511
        %v2575 = vmul.f32 %v2382, %v2512
        %v2576 = vmul.f32 %v2384, %v2512
        %v2577 = vpack.c.bf16 %v1683, %v1679
        %v2578 = vpack.c.bf16 %v1685, %v1681
        %v2579 = vpack.c.bf16 %v1693, %v1689
        %v2580 = vpack.c.bf16 %v1695, %v1691
        %v2581 = vpack.c.bf16 %v2515, %v2513
        %v2582 = vpack.c.bf16 %v2516, %v2514
        %v2583 = vpack.c.bf16 %v2519, %v2517
        %v2584 = vpack.c.bf16 %v2520, %v2518
        %v2585 = vpack.c.bf16 %v2523, %v2521
        %v2586 = vpack.c.bf16 %v2524, %v2522
        %v2587 = vpack.c.bf16 %v2527, %v2525
        %v2588 = vpack.c.bf16 %v2528, %v2526
        %v2589 = vpack.c.bf16 %v2531, %v2529
        %v2590 = vpack.c.bf16 %v2532, %v2530
        %v2591 = vpack.c.bf16 %v2535, %v2533
        %v2592 = vpack.c.bf16 %v2536, %v2534
        %v2593 = vpack.c.bf16 %v2539, %v2537
        %v2594 = vpack.c.bf16 %v2540, %v2538
        %v2595 = vpack.c.bf16 %v2543, %v2541
        %v2596 = vpack.c.bf16 %v2544, %v2542
        %v2597 = vpack.c.bf16 %v2547, %v2545
        %v2598 = vpack.c.bf16 %v2548, %v2546
        %v2599 = vpack.c.bf16 %v2551, %v2549
        %v2600 = vpack.c.bf16 %v2552, %v2550
        %v2601 = vpack.c.bf16 %v2555, %v2553
        %v2602 = vpack.c.bf16 %v2556, %v2554
        %v2603 = vpack.c.bf16 %v2559, %v2557
        %v2604 = vpack.c.bf16 %v2560, %v2558
        %v2605 = vpack.c.bf16 %v2563, %v2561
        %v2606 = vpack.c.bf16 %v2564, %v2562
        %v2607 = vpack.c.bf16 %v2567, %v2565
        %v2608 = vpack.c.bf16 %v2568, %v2566
        %v2609 = vpack.c.bf16 %v2571, %v2569
        %v2610 = vpack.c.bf16 %v2572, %v2570
        %v2611 = vpack.c.bf16 %v2575, %v2573
        %v2612 = vpack.c.bf16 %v2576, %v2574
        %2613 = vmatprep.subr.bf16.mxu0 %v2582
        %2614 = vmatpush1.bf16.xpose.msra.mxu0 %v2581
        %2615 = vmatprep.subr.bf16.mxu0 %v2584
        %2616 = vmatpush1.bf16.xpose.msra.mxu0 %v2583
        %2617 = vmatprep.subr.bf16.mxu0 %v2586
        %2618 = vmatpush1.bf16.xpose.msra.mxu0 %v2585
        %2619 = vmatprep.subr.bf16.mxu0 %v2588
        %2620 = vmatpush1.bf16.xpose.msra.mxu0 %v2587
        %2621 = vmatprep.subr.bf16.mxu0 %v2590
        %2622 = vmatpush1.bf16.xpose.msra.mxu0 %v2589
        %2623 = vmatprep.subr.bf16.mxu0 %v2592
        %2624 = vmatpush1.bf16.xpose.msra.mxu0 %v2591
        %2625 = vmatprep.subr.bf16.mxu0 %v2594
        %2626 = vmatpush1.bf16.xpose.msra.mxu0 %v2593
        %2627 = vmatprep.subr.bf16.mxu0 %v2596
        %2628 = vmatpush1.bf16.xpose.msra.mxu0 %v2595
        %2629 = vmatprep.subr.bf16.mxu0 %v2598
        %2630 = vmatpush1.bf16.xpose.msra.mxu0 %v2597
        %2631 = vmatprep.subr.bf16.mxu0 %v2600
        %2632 = vmatpush1.bf16.xpose.msra.mxu0 %v2599
        %2633 = vmatprep.subr.bf16.mxu0 %v2602
        %2634 = vmatpush1.bf16.xpose.msra.mxu0 %v2601
        %2635 = vmatprep.subr.bf16.mxu0 %v2604
        %2636 = vmatpush1.bf16.xpose.msra.mxu0 %v2603
        %2637 = vmatprep.subr.bf16.mxu0 %v2606
        %2638 = vmatpush1.bf16.xpose.msra.mxu0 %v2605
        %2639 = vmatprep.subr.bf16.mxu0 %v2608
        %2640 = vmatpush1.bf16.xpose.msra.mxu0 %v2607
        %2641 = vmatprep.subr.bf16.mxu0 %v2610
        %2642 = vmatpush1.bf16.xpose.msra.mxu0 %v2609
        %2643 = vmatprep.subr.bf16.mxu0 %v2612
        %2644 = vmatpush1.bf16.xpose.msra.mxu0 %v2611
        %2645 = vmatprep.mubr.bf16.mxu0 %v2578
        %2646 = vmatmul.mubr.bf16.gmra.mrb[0].mxu0 %v2577
        %v2647 = vpop.f32.mrb[0].mxu0
        %v2648 = vadd.f32 0.0, %v2647
        %v2649 = vpop.f32.mrb[0].mxu0
        %v2650 = vadd.f32 0.0, %v2649
        %v2651 = vpop.f32.mrb[0].mxu0
        %v2652 = vadd.f32 0.0, %v2651
        %v2653 = vpop.f32.mrb[0].mxu0
        %v2654 = vadd.f32 0.0, %v2653
        %2655 = vmatprep.mubr.bf16.mxu0 %v2580
        %2656 = vmatmul.mubr.bf16.gmra.mrb[0].mxu0 %v2579
        %v2657 = vpop.f32.mrb[0].mxu0
        %v2658 = vadd.f32 0.0, %v2657
        %v2659 = vpop.f32.mrb[0].mxu0
        %v2660 = vadd.f32 0.0, %v2659
        %v2661 = vpop.f32.mrb[0].mxu0
        %v2662 = vadd.f32 0.0, %v2661
        %v2663 = vpop.f32.mrb[0].mxu0
        %v2664 = vadd.f32 0.0, %v2663
        %2665 = vdwg.mxu0
        %v2666 = vstv %s1760
        %v2667 = vmul.f32 %v2666, %v2648
        %v2668 = vmul.f32 %v2666, %v2650
        %v2669 = vmul.f32 %v2666, %v2652
        %v2670 = vmul.f32 %v2666, %v2654
        %v2671 = vmul.f32 %v2666, %v2658
        %v2672 = vmul.f32 %v2666, %v2660
        %v2673 = vmul.f32 %v2666, %v2662
        %v2674 = vmul.f32 %v2666, %v2664
        %v2675 = vadd.f32 %v2667, %v1528
        %v2676 = vadd.f32 %v2668, %v1529
        %v2677 = vadd.f32 %v2669, %v1532
        %v2678 = vadd.f32 %v2670, %v1533
        %v2679 = vadd.f32 %v2671, %v1536
        %v2680 = vadd.f32 %v2672, %v1537
        %v2681 = vadd.f32 %v2673, %v1540
        %v2682 = vadd.f32 %v2674, %v1541
        %2683 = vst [vmem:[%s214] sm:$0xff] %v2675
        %2684 = vst [vmem:[%s214 + $0x8] sm:$0xff] %v2676
        %2685 = vst [vmem:[%s214 + $0x10] sm:$0xff] %v2677
        %2686 = vst [vmem:[%s214 + $0x18] sm:$0xff] %v2678
        %2687 = vst [vmem:[%s214 + $0x20] sm:$0xff] %v2679
        %2688 = vst [vmem:[%s214 + $0x28] sm:$0xff] %v2680
        %2689 = vst [vmem:[%s214 + $0x30] sm:$0xff] %v2681
        %2690 = vst [vmem:[%s214 + $0x38] sm:$0xff] %v2682
        %v2691 = vpack.c.bf16 %v2677, %v2675
        %v2692 = vpack.c.bf16 %v2678, %v2676
        %v2693 = vpack.c.bf16 %v2681, %v2679
        %v2694 = vpack.c.bf16 %v2682, %v2680
        %vm2695 = vcmp.eq.s32.totalorder %v1764, 0
        %vm2696 = vcmp.eq.s32.totalorder %v1765, 0
        %vm2697 = vmpackc.low %vm2696, %vm2695
        %v2698 = vsel %vm2697, 65537, 0
        %v2699 = vlaneseq
        %v2700 = vshrl.u32 %v2699, 7
        %v2701 = vsub.s32 0, %v2700
        %v2702 = vrot.slane %v2698, %v2701
        %v2703 = vlaneseq
        %v2704 = vshrl.u32 %v2703, 7
        %v2705 = vsub.s32 4, %v2704
        %v2706 = vrot.slane %v2698, %v2705
        %vm2707 = vcmp.ne.s16.totalorder %v2702, 0
        %vm2708 = vcmp.ne.s16.totalorder %v2706, 0
        %v2709 = vsel %vm2707, 0, %v2691
        %v2710 = vsel %vm2708, 0, %v2692
        %v2711 = vsel %vm2707, 0, %v2693
        %v2712 = vsel %vm2708, 0, %v2694
        %vm2713 = vcmp.eq.s32.totalorder %v1764, 15
        %vm2714 = vcmp.eq.s32.totalorder %v1765, 15
        %vm2715 = vmpackc.low %vm2714, %vm2713
        %v2716 = vsel %vm2715, 65537, 0
        %v2717 = vlaneseq
        %v2718 = vshrl.u32 %v2717, 7
        %v2719 = vsub.s32 0, %v2718
        %v2720 = vrot.slane %v2716, %v2719
        %v2721 = vlaneseq
        %v2722 = vshrl.u32 %v2721, 7
        %v2723 = vsub.s32 4, %v2722
        %v2724 = vrot.slane %v2716, %v2723
        %vm2725 = vcmp.ne.s16.totalorder %v2720, 0
        %vm2726 = vcmp.ne.s16.totalorder %v2724, 0
        %v2727 = vsel %vm2725, 0, %v2691
        %v2728 = vsel %vm2726, 0, %v2692
        %v2729 = vsel %vm2725, 0, %v2693
        %v2730 = vsel %vm2726, 0, %v2694
        %2735 = vrot.lane.b32.xlu0 %v2727, 17
        %v2736 = vpop.permute.xlu0 %2735
        %2737 = vrot.lane.b32.xlu0 %v2728, 17
        %v2738 = vpop.permute.xlu0 %2737
        %2739 = vrot.lane.b32.xlu0 %v2729, 17
        %v2740 = vpop.permute.xlu0 %2739
        %2741 = vrot.lane.b32.xlu0 %v2730, 17
        %v2742 = vpop.permute.xlu0 %2741
        %vm2743 = vcmask 138240
        %v2744 = vsel %vm2743, %v2736, %v2738
        %v2745 = vsel %vm2743, %v2740, %v2742
        %vm2748 = vcmask 138240
        %v2751 = vsel %vm2748, 0, %v2736
        %v2754 = vsel %vm2748, 0, %v2740
        %2756 = vst [vmem:[#allocation2] sm:$0xff] %v2751
        %2757 = vst [vmem:[#allocation2 + $0x8] sm:$0xff] %v2744
        %2758 = vst [vmem:[#allocation2 + $0x20] sm:$0xff] %v2754
        %2759 = vst [vmem:[#allocation2 + $0x28] sm:$0xff] %v2745
        %2764 = vrot.lane.b32.xlu0 %v2691, 16
        %v2765 = vpop.permute.xlu0 %2764
        %2766 = vrot.lane.b32.xlu0 %v2692, 16
        %v2767 = vpop.permute.xlu0 %2766
        %2768 = vrot.lane.b32.xlu0 %v2693, 16
        %v2769 = vpop.permute.xlu0 %2768
        %2770 = vrot.lane.b32.xlu0 %v2694, 16
        %v2771 = vpop.permute.xlu0 %2770
        %vm2772 = vcmask 130048
        %v2773 = vsel %vm2772, %v2765, %v2767
        %v2774 = vsel %vm2772, %v2769, %v2771
        %vm2777 = vcmask 130048
        %v2779 = vsel %vm2777, 0, %v2765
        %v2782 = vsel %vm2777, 0, %v2769
        %2784 = vst [vmem:[#allocation2 + $0x40] sm:$0xff] %v2779
        %2785 = vst [vmem:[#allocation2 + $0x48] sm:$0xff] %v2773
        %2786 = vst [vmem:[#allocation2 + $0x60] sm:$0xff] %v2782
        %2787 = vst [vmem:[#allocation2 + $0x68] sm:$0xff] %v2774
        %2792 = vrot.lane.b32.xlu0 %v2709, 15
        %v2793 = vpop.permute.xlu0 %2792
        %2794 = vrot.lane.b32.xlu0 %v2710, 15
        %v2795 = vpop.permute.xlu0 %2794
        %2796 = vrot.lane.b32.xlu0 %v2711, 15
        %v2797 = vpop.permute.xlu0 %2796
        %2798 = vrot.lane.b32.xlu0 %v2712, 15
        %v2799 = vpop.permute.xlu0 %2798
        %vm2800 = vcmask 121856
        %v2801 = vsel %vm2800, %v2793, %v2795
        %v2802 = vsel %vm2800, %v2797, %v2799
        %vm2805 = vcmask 121856
        %v2807 = vsel %vm2805, 0, %v2793
        %v2810 = vsel %vm2805, 0, %v2797
        %2812 = vst [vmem:[#allocation2 + $0x80] sm:$0xff] %v2807
        %2813 = vst [vmem:[#allocation2 + $0x88] sm:$0xff] %v2801
        %2814 = vst [vmem:[#allocation2 + $0xa0] sm:$0xff] %v2810
        %2815 = vst [vmem:[#allocation2 + $0xa8] sm:$0xff] %v2802
        %2816 = vrot.lane.b32.xlu0 %v2727, 1
        %v2817 = vpop.permute.xlu0 %2816
        %2818 = vrot.lane.b32.xlu0 %v2728, 1
        %v2819 = vpop.permute.xlu0 %2818
        %2820 = vrot.lane.b32.xlu0 %v2729, 1
        %v2821 = vpop.permute.xlu0 %2820
        %2822 = vrot.lane.b32.xlu0 %v2730, 1
        %v2823 = vpop.permute.xlu0 %2822
        %vm2824 = vcmask 7168
        %v2825 = vsel %vm2824, %v2817, %v2819
        %v2826 = vsel %vm2824, %v2821, %v2823
        %vm2829 = vcmask 7168
        %v2831 = vsel %vm2829, 0, %v2817
        %v2834 = vsel %vm2829, 0, %v2821
        %2836 = vst [vmem:[#allocation2 + $0xc0] sm:$0xff] %v2831
        %2837 = vst [vmem:[#allocation2 + $0xc8] sm:$0xff] %v2825
        %2838 = vst [vmem:[#allocation2 + $0xe0] sm:$0xff] %v2834
        %2839 = vst [vmem:[#allocation2 + $0xe8] sm:$0xff] %v2826
        %2840 = vst [vmem:[#allocation2 + $0x100] sm:$0xff] %v2691
        %2841 = vst [vmem:[#allocation2 + $0x108] sm:$0xff] %v2692
        %2842 = vst [vmem:[#allocation2 + $0x120] sm:$0xff] %v2693
        %2843 = vst [vmem:[#allocation2 + $0x128] sm:$0xff] %v2694
        %2844 = vrot.lane.b32.xlu0 %v2709, 127
        %v2845 = vpop.permute.xlu0 %2844
        %2846 = vrot.lane.b32.xlu0 %v2710, 127
        %v2847 = vpop.permute.xlu0 %2846
        %2848 = vrot.lane.b32.xlu0 %v2711, 127
        %v2849 = vpop.permute.xlu0 %2848
        %2850 = vrot.lane.b32.xlu0 %v2712, 127
        %v2851 = vpop.permute.xlu0 %2850
        %vm2852 = vcmask 1039360
        %v2853 = vsel %vm2852, %v2845, %v2847
        %v2854 = vsel %vm2852, %v2849, %v2851
        %vm2857 = vcmask 1039360
        %v2859 = vsel %vm2857, %v2847, 0
        %v2862 = vsel %vm2857, %v2851, 0
        %2864 = vst [vmem:[#allocation2 + $0x140] sm:$0xff] %v2853
        %2865 = vst [vmem:[#allocation2 + $0x148] sm:$0xff] %v2859
        %2866 = vst [vmem:[#allocation2 + $0x160] sm:$0xff] %v2854
        %2867 = vst [vmem:[#allocation2 + $0x168] sm:$0xff] %v2862
        %2868 = vrot.lane.b32.xlu0 %v2727, 113
        %v2869 = vpop.permute.xlu0 %2868
        %2870 = vrot.lane.b32.xlu0 %v2728, 113
        %v2871 = vpop.permute.xlu0 %2870
        %2872 = vrot.lane.b32.xlu0 %v2729, 113
        %v2873 = vpop.permute.xlu0 %2872
        %2874 = vrot.lane.b32.xlu0 %v2730, 113
        %v2875 = vpop.permute.xlu0 %2874
        %vm2876 = vcmask 924672
        %v2877 = vsel %vm2876, %v2869, %v2871
        %v2878 = vsel %vm2876, %v2873, %v2875
        %vm2881 = vcmask 924672
        %v2883 = vsel %vm2881, %v2871, 0
        %v2886 = vsel %vm2881, %v2875, 0
        %2888 = vst [vmem:[#allocation2 + $0x180] sm:$0xff] %v2877
        %2889 = vst [vmem:[#allocation2 + $0x188] sm:$0xff] %v2883
        %2890 = vst [vmem:[#allocation2 + $0x1a0] sm:$0xff] %v2878
        %2891 = vst [vmem:[#allocation2 + $0x1a8] sm:$0xff] %v2886
        %2892 = vrot.lane.b32.xlu0 %v2691, 112
        %v2893 = vpop.permute.xlu0 %2892
        %2894 = vrot.lane.b32.xlu0 %v2692, 112
        %v2895 = vpop.permute.xlu0 %2894
        %2896 = vrot.lane.b32.xlu0 %v2693, 112
        %v2897 = vpop.permute.xlu0 %2896
        %2898 = vrot.lane.b32.xlu0 %v2694, 112
        %v2899 = vpop.permute.xlu0 %2898
        %vm2900 = vcmask 916480
        %v2901 = vsel %vm2900, %v2893, %v2895
        %v2902 = vsel %vm2900, %v2897, %v2899
        %vm2905 = vcmask 916480
        %v2907 = vsel %vm2905, %v2895, 0
        %v2910 = vsel %vm2905, %v2899, 0
        %2912 = vst [vmem:[#allocation2 + $0x1c0] sm:$0xff] %v2901
        %2913 = vst [vmem:[#allocation2 + $0x1c8] sm:$0xff] %v2907
        %2914 = vst [vmem:[#allocation2 + $0x1e0] sm:$0xff] %v2902
        %2915 = vst [vmem:[#allocation2 + $0x1e8] sm:$0xff] %v2910
        %2916 = vrot.lane.b32.xlu0 %v2709, 111
        %v2917 = vpop.permute.xlu0 %2916
        %2918 = vrot.lane.b32.xlu0 %v2710, 111
        %v2919 = vpop.permute.xlu0 %2918
        %2920 = vrot.lane.b32.xlu0 %v2711, 111
        %v2921 = vpop.permute.xlu0 %2920
        %2922 = vrot.lane.b32.xlu0 %v2712, 111
        %v2923 = vpop.permute.xlu0 %2922
        %vm2924 = vcmask 908288
        %v2925 = vsel %vm2924, %v2917, %v2919
        %v2926 = vsel %vm2924, %v2921, %v2923
        %vm2929 = vcmask 908288
        %v2931 = vsel %vm2929, %v2919, 0
        %v2934 = vsel %vm2929, %v2923, 0
        %2936 = vst [vmem:[#allocation2 + $0x200] sm:$0xff] %v2925
        %2937 = vst [vmem:[#allocation2 + $0x208] sm:$0xff] %v2931
        %2938 = vst [vmem:[#allocation2 + $0x220] sm:$0xff] %v2926
        %2939 = vst [vmem:[#allocation2 + $0x228] sm:$0xff] %v2934
        %2940 = vxpose.xlu0.b32.start [1/16] %v1732, 128
        %2941 = vxpose.xlu0.b32.cont [2/16] 0.0, 128
        %2942 = vxpose.xlu0.b32.cont [3/16] 0.0, 128
        %2943 = vxpose.xlu0.b32.cont [4/16] 0.0, 128
        %2944 = vxpose.xlu0.b32.cont [5/16] 0.0, 128
        %2945 = vxpose.xlu0.b32.cont [6/16] 0.0, 128
        %2946 = vxpose.xlu0.b32.cont [7/16] 0.0, 128
        %2947 = vxpose.xlu0.b32.cont [8/16] 0.0, 128
        %2948 = vxpose.xlu0.b32.cont [9/16] 0.0, 128
        %2949 = vxpose.xlu0.b32.cont [10/16] 0.0, 128
        %2950 = vxpose.xlu0.b32.cont [11/16] 0.0, 128
        %2951 = vxpose.xlu0.b32.cont [12/16] 0.0, 128
        %2952 = vxpose.xlu0.b32.cont [13/16] 0.0, 128
        %2953 = vxpose.xlu0.b32.cont [14/16] 0.0, 128
        %2954 = vxpose.xlu0.b32.cont [15/16] 0.0, 128
        %2955 = vxpose.xlu0.b32.end [16/16] 0.0, 128
        %v2956 = vpop.trf.xlu0
        %v2957 = vpop.trf.xlu0
        %v2958 = vpop.trf.xlu0
        %v2959 = vpop.trf.xlu0
        %v2960 = vpop.trf.xlu0
        %v2961 = vpop.trf.xlu0
        %v2962 = vpop.trf.xlu0
        %v2963 = vpop.trf.xlu0
        %v2964 = vpop.trf.xlu0
        %v2965 = vpop.trf.xlu0
        %v2966 = vpop.trf.xlu0
        %v2967 = vpop.trf.xlu0
        %v2968 = vpop.trf.xlu0
        %v2969 = vpop.trf.xlu0
        %v2970 = vpop.trf.xlu0
        %v2971 = vpop.trf.xlu0
        %2972 = vxpose.xlu0.b32.start [1/16] %v1734, 128
        %2973 = vxpose.xlu0.b32.cont [2/16] 0.0, 128
        %2974 = vxpose.xlu0.b32.cont [3/16] 0.0, 128
        %2975 = vxpose.xlu0.b32.cont [4/16] 0.0, 128
        %2976 = vxpose.xlu0.b32.cont [5/16] 0.0, 128
        %2977 = vxpose.xlu0.b32.cont [6/16] 0.0, 128
        %2978 = vxpose.xlu0.b32.cont [7/16] 0.0, 128
        %2979 = vxpose.xlu0.b32.cont [8/16] 0.0, 128
        %2980 = vxpose.xlu0.b32.cont [9/16] 0.0, 128
        %2981 = vxpose.xlu0.b32.cont [10/16] 0.0, 128
        %2982 = vxpose.xlu0.b32.cont [11/16] 0.0, 128
        %2983 = vxpose.xlu0.b32.cont [12/16] 0.0, 128
        %2984 = vxpose.xlu0.b32.cont [13/16] 0.0, 128
        %2985 = vxpose.xlu0.b32.cont [14/16] 0.0, 128
        %2986 = vxpose.xlu0.b32.cont [15/16] 0.0, 128
        %2987 = vxpose.xlu0.b32.end [16/16] 0.0, 128
        %v2988 = vpop.trf.xlu0
        %v2989 = vpop.trf.xlu0
        %v2990 = vpop.trf.xlu0
        %v2991 = vpop.trf.xlu0
        %v2992 = vpop.trf.xlu0
        %v2993 = vpop.trf.xlu0
        %v2994 = vpop.trf.xlu0
        %v2995 = vpop.trf.xlu0
        %v2996 = vpop.trf.xlu0
        %v2997 = vpop.trf.xlu0
        %v2998 = vpop.trf.xlu0
        %v2999 = vpop.trf.xlu0
        %v3000 = vpop.trf.xlu0
        %v3001 = vpop.trf.xlu0
        %v3002 = vpop.trf.xlu0
        %v3003 = vpop.trf.xlu0
        %v3004 = vpack.c.bf16 %v2957, %v2956
        %v3005 = vpack.c.bf16 %v2959, %v2958
        %v3006 = vpack.c.bf16 %v2961, %v2960
        %v3007 = vpack.c.bf16 %v2963, %v2962
        %v3008 = vpack.c.bf16 %v2965, %v2964
        %v3009 = vpack.c.bf16 %v2967, %v2966
        %v3010 = vpack.c.bf16 %v2969, %v2968
        %v3011 = vpack.c.bf16 %v2971, %v2970
        %v3012 = vpack.c.bf16 %v2989, %v2988
        %v3013 = vpack.c.bf16 %v2991, %v2990
        %v3014 = vpack.c.bf16 %v2993, %v2992
        %v3015 = vpack.c.bf16 %v2995, %v2994
        %v3016 = vpack.c.bf16 %v2997, %v2996
        %v3017 = vpack.c.bf16 %v2999, %v2998
        %v3018 = vpack.c.bf16 %v3001, %v3000
        %v3019 = vpack.c.bf16 %v3003, %v3002
        %v3020 = vpack.c.bf16 %v1736, %v1736
        %v3021 = vpack.c.bf16 %v1738, %v1738
        %v3023 = vsel %vm1848, %v3004, 0
        %v3026 = vsel %vm1848, %v3005, 0
        %v3029 = vsel %vm1848, %v3006, 0
        %v3032 = vsel %vm1848, %v3007, 0
        %v3035 = vsel %vm1848, %v3008, 0
        %v3038 = vsel %vm1848, %v3009, 0
        %v3041 = vsel %vm1848, %v3010, 0
        %v3044 = vsel %vm1848, %v3011, 0
        %v3047 = vsel %vm1848, %v3012, 0
        %v3050 = vsel %vm1848, %v3013, 0
        %v3053 = vsel %vm1848, %v3014, 0
        %v3056 = vsel %vm1848, %v3015, 0
        %v3059 = vsel %vm1848, %v3016, 0
        %v3062 = vsel %vm1848, %v3017, 0
        %v3065 = vsel %vm1848, %v3018, 0
        %v3068 = vsel %vm1848, %v3019, 0
        %v3071 = vsel %vm1897, %v3020, 0
        %v3074 = vsel %vm1897, %v3021, 0
        %3076 = vmatprep.subr.bf16.mxu0 %v3074
        %3077 = vmatpush1.bf16.msra.mxu0 %v3071
        %3078 = vmatprep.subr.bf16.mxu0 0
        %3079 = vmatpush1.bf16.msra.mxu0 0
        %3080 = vmatprep.subr.bf16.mxu0 0
        %3081 = vmatpush1.bf16.msra.mxu0 0
        %3082 = vmatprep.subr.bf16.mxu0 0
        %3083 = vmatpush1.bf16.msra.mxu0 0
        %3084 = vmatprep.subr.bf16.mxu0 0
        %3085 = vmatpush1.bf16.msra.mxu0 0
        %3086 = vmatprep.subr.bf16.mxu0 0
        %3087 = vmatpush1.bf16.msra.mxu0 0
        %3088 = vmatprep.subr.bf16.mxu0 0
        %3089 = vmatpush1.bf16.msra.mxu0 0
        %3090 = vmatprep.subr.bf16.mxu0 0
        %3091 = vmatpush1.bf16.msra.mxu0 0
        %3092 = vmatprep.subr.bf16.mxu0 0
        %3093 = vmatpush1.bf16.msra.mxu0 0
        %3094 = vmatprep.subr.bf16.mxu0 0
        %3095 = vmatpush1.bf16.msra.mxu0 0
        %3096 = vmatprep.subr.bf16.mxu0 0
        %3097 = vmatpush1.bf16.msra.mxu0 0
        %3098 = vmatprep.subr.bf16.mxu0 0
        %3099 = vmatpush1.bf16.msra.mxu0 0
        %3100 = vmatprep.subr.bf16.mxu0 0
        %3101 = vmatpush1.bf16.msra.mxu0 0
        %3102 = vmatprep.subr.bf16.mxu0 0
        %3103 = vmatpush1.bf16.msra.mxu0 0
        %3104 = vmatprep.subr.bf16.mxu0 0
        %3105 = vmatpush1.bf16.msra.mxu0 0
        %3106 = vmatprep.subr.bf16.mxu0 0
        %3107 = vmatpush1.bf16.msra.mxu0 0
        %3108 = vmatprep.mubr.bf16.mxu0 0
        %3109 = vmatmul.mubr.bf16.gmra.mrb[0].mxu0 %v3023
        %v3110 = vpop.f32.mrb[0].mxu0
        %v3111 = vadd.f32 0.0, %v3110
        %v3112 = vpop.f32.mrb[0].mxu0
        %v3113 = vadd.f32 0.0, %v3112
        %v3114 = vpop.f32.mrb[0].mxu0
        %v3115 = vadd.f32 0.0, %v3114
        %v3116 = vpop.f32.mrb[0].mxu0
        %v3117 = vadd.f32 0.0, %v3116
        %3118 = vmatprep.mubr.bf16.mxu0 0
        %3119 = vmatmul.mubr.bf16.gmra.mrb[0].mxu0 %v3026
        %v3120 = vpop.f32.mrb[0].mxu0
        %v3121 = vadd.f32 0.0, %v3120
        %v3122 = vpop.f32.mrb[0].mxu0
        %v3123 = vadd.f32 0.0, %v3122
        %v3124 = vpop.f32.mrb[0].mxu0
        %v3125 = vadd.f32 0.0, %v3124
        %v3126 = vpop.f32.mrb[0].mxu0
        %v3127 = vadd.f32 0.0, %v3126
        %3128 = vmatprep.mubr.bf16.mxu0 0
        %3129 = vmatmul.mubr.bf16.gmra.mrb[0].mxu0 %v3029
        %v3130 = vpop.f32.mrb[0].mxu0
        %v3131 = vadd.f32 0.0, %v3130
        %v3132 = vpop.f32.mrb[0].mxu0
        %v3133 = vadd.f32 0.0, %v3132
        %v3134 = vpop.f32.mrb[0].mxu0
        %v3135 = vadd.f32 0.0, %v3134
        %v3136 = vpop.f32.mrb[0].mxu0
        %v3137 = vadd.f32 0.0, %v3136
        %3138 = vmatprep.mubr.bf16.mxu0 0
        %3139 = vmatmul.mubr.bf16.gmra.mrb[0].mxu0 %v3032
        %v3140 = vpop.f32.mrb[0].mxu0
        %v3141 = vadd.f32 0.0, %v3140
        %v3142 = vpop.f32.mrb[0].mxu0
        %v3143 = vadd.f32 0.0, %v3142
        %v3144 = vpop.f32.mrb[0].mxu0
        %v3145 = vadd.f32 0.0, %v3144
        %v3146 = vpop.f32.mrb[0].mxu0
        %v3147 = vadd.f32 0.0, %v3146
        %3148 = vmatprep.mubr.bf16.mxu0 0
        %3149 = vmatmul.mubr.bf16.gmra.mrb[0].mxu0 %v3035
        %v3150 = vpop.f32.mrb[0].mxu0
        %v3151 = vadd.f32 0.0, %v3150
        %v3152 = vpop.f32.mrb[0].mxu0
        %v3153 = vadd.f32 0.0, %v3152
        %v3154 = vpop.f32.mrb[0].mxu0
        %v3155 = vadd.f32 0.0, %v3154
        %v3156 = vpop.f32.mrb[0].mxu0
        %v3157 = vadd.f32 0.0, %v3156
        %3158 = vmatprep.mubr.bf16.mxu0 0
        %3159 = vmatmul.mubr.bf16.gmra.mrb[0].mxu0 %v3038
        %v3160 = vpop.f32.mrb[0].mxu0
        %v3161 = vadd.f32 0.0, %v3160
        %v3162 = vpop.f32.mrb[0].mxu0
        %v3163 = vadd.f32 0.0, %v3162
        %v3164 = vpop.f32.mrb[0].mxu0
        %v3165 = vadd.f32 0.0, %v3164
        %v3166 = vpop.f32.mrb[0].mxu0
        %v3167 = vadd.f32 0.0, %v3166
        %3168 = vmatprep.mubr.bf16.mxu0 0
        %3169 = vmatmul.mubr.bf16.gmra.mrb[0].mxu0 %v3041
        %v3170 = vpop.f32.mrb[0].mxu0
        %v3171 = vadd.f32 0.0, %v3170
        %v3172 = vpop.f32.mrb[0].mxu0
        %v3173 = vadd.f32 0.0, %v3172
        %v3174 = vpop.f32.mrb[0].mxu0
        %v3175 = vadd.f32 0.0, %v3174
        %v3176 = vpop.f32.mrb[0].mxu0
        %v3177 = vadd.f32 0.0, %v3176
        %3178 = vmatprep.mubr.bf16.mxu0 0
        %3179 = vmatmul.mubr.bf16.gmra.mrb[0].mxu0 %v3044
        %v3180 = vpop.f32.mrb[0].mxu0
        %v3181 = vadd.f32 0.0, %v3180
        %v3182 = vpop.f32.mrb[0].mxu0
        %v3183 = vadd.f32 0.0, %v3182
        %v3184 = vpop.f32.mrb[0].mxu0
        %v3185 = vadd.f32 0.0, %v3184
        %v3186 = vpop.f32.mrb[0].mxu0
        %v3187 = vadd.f32 0.0, %v3186
        %3188 = vmatprep.mubr.bf16.mxu0 0
        %3189 = vmatmul.mubr.bf16.gmra.mrb[0].mxu0 %v3047
        %v3190 = vpop.f32.mrb[0].mxu0
        %v3191 = vadd.f32 0.0, %v3190
        %v3192 = vpop.f32.mrb[0].mxu0
        %v3193 = vadd.f32 0.0, %v3192
        %v3194 = vpop.f32.mrb[0].mxu0
        %v3195 = vadd.f32 0.0, %v3194
        %v3196 = vpop.f32.mrb[0].mxu0
        %v3197 = vadd.f32 0.0, %v3196
        %3198 = vmatprep.mubr.bf16.mxu0 0
        %3199 = vmatmul.mubr.bf16.gmra.mrb[0].mxu0 %v3050
        %v3200 = vpop.f32.mrb[0].mxu0
        %v3201 = vadd.f32 0.0, %v3200
        %v3202 = vpop.f32.mrb[0].mxu0
        %v3203 = vadd.f32 0.0, %v3202
        %v3204 = vpop.f32.mrb[0].mxu0
        %v3205 = vadd.f32 0.0, %v3204
        %v3206 = vpop.f32.mrb[0].mxu0
        %v3207 = vadd.f32 0.0, %v3206
        %3208 = vmatprep.mubr.bf16.mxu0 0
        %3209 = vmatmul.mubr.bf16.gmra.mrb[0].mxu0 %v3053
        %v3210 = vpop.f32.mrb[0].mxu0
        %v3211 = vadd.f32 0.0, %v3210
        %v3212 = vpop.f32.mrb[0].mxu0
        %v3213 = vadd.f32 0.0, %v3212
        %v3214 = vpop.f32.mrb[0].mxu0
        %v3215 = vadd.f32 0.0, %v3214
        %v3216 = vpop.f32.mrb[0].mxu0
        %v3217 = vadd.f32 0.0, %v3216
        %3218 = vmatprep.mubr.bf16.mxu0 0
        %3219 = vmatmul.mubr.bf16.gmra.mrb[0].mxu0 %v3056
        %v3220 = vpop.f32.mrb[0].mxu0
        %v3221 = vadd.f32 0.0, %v3220
        %v3222 = vpop.f32.mrb[0].mxu0
        %v3223 = vadd.f32 0.0, %v3222
        %v3224 = vpop.f32.mrb[0].mxu0
        %v3225 = vadd.f32 0.0, %v3224
        %v3226 = vpop.f32.mrb[0].mxu0
        %v3227 = vadd.f32 0.0, %v3226
        %3228 = vmatprep.mubr.bf16.mxu0 0
        %3229 = vmatmul.mubr.bf16.gmra.mrb[0].mxu0 %v3059
        %v3230 = vpop.f32.mrb[0].mxu0
        %v3231 = vadd.f32 0.0, %v3230
        %v3232 = vpop.f32.mrb[0].mxu0
        %v3233 = vadd.f32 0.0, %v3232
        %v3234 = vpop.f32.mrb[0].mxu0
        %v3235 = vadd.f32 0.0, %v3234
        %v3236 = vpop.f32.mrb[0].mxu0
        %v3237 = vadd.f32 0.0, %v3236
        %3238 = vmatprep.mubr.bf16.mxu0 0
        %3239 = vmatmul.mubr.bf16.gmra.mrb[0].mxu0 %v3062
        %v3240 = vpop.f32.mrb[0].mxu0
        %v3241 = vadd.f32 0.0, %v3240
        %v3242 = vpop.f32.mrb[0].mxu0
        %v3243 = vadd.f32 0.0, %v3242
        %v3244 = vpop.f32.mrb[0].mxu0
        %v3245 = vadd.f32 0.0, %v3244
        %v3246 = vpop.f32.mrb[0].mxu0
        %v3247 = vadd.f32 0.0, %v3246
        %3248 = vmatprep.mubr.bf16.mxu0 0
        %3249 = vmatmul.mubr.bf16.gmra.mrb[0].mxu0 %v3065
        %v3250 = vpop.f32.mrb[0].mxu0
        %v3251 = vadd.f32 0.0, %v3250
        %v3252 = vpop.f32.mrb[0].mxu0
        %v3253 = vadd.f32 0.0, %v3252
        %v3254 = vpop.f32.mrb[0].mxu0
        %v3255 = vadd.f32 0.0, %v3254
        %v3256 = vpop.f32.mrb[0].mxu0
        %v3257 = vadd.f32 0.0, %v3256
        %3258 = vmatprep.mubr.bf16.mxu0 0
        %3259 = vmatmul.mubr.bf16.gmra.mrb[0].mxu0 %v3068
        %v3260 = vpop.f32.mrb[0].mxu0
        %v3261 = vadd.f32 0.0, %v3260
        %v3262 = vpop.f32.mrb[0].mxu0
        %v3263 = vadd.f32 0.0, %v3262
        %v3264 = vpop.f32.mrb[0].mxu0
        %v3265 = vadd.f32 0.0, %v3264
        %v3266 = vpop.f32.mrb[0].mxu0
        %v3267 = vadd.f32 0.0, %v3266
        %3268 = vdwg.mxu0
        %v3269 = vmax.f32 %v3111, %v3113
        %3270 = vmax.xlane.f32.xlu0 %v3269
        %v3271 = vpop.xlane.xlu0 %3270
        %v3272 = vmax.f32 %v3115, %v3117
        %3273 = vmax.xlane.f32.xlu0 %v3272
        %v3274 = vpop.xlane.xlu0 %3273
        %v3275 = vmax.f32 %v3121, %v3123
        %3276 = vmax.xlane.f32.xlu0 %v3275
        %v3277 = vpop.xlane.xlu0 %3276
        %v3278 = vmax.f32 %v3125, %v3127
        %3279 = vmax.xlane.f32.xlu0 %v3278
        %v3280 = vpop.xlane.xlu0 %3279
        %v3281 = vmax.f32 %v3131, %v3133
        %3282 = vmax.xlane.f32.xlu0 %v3281
        %v3283 = vpop.xlane.xlu0 %3282
        %v3284 = vmax.f32 %v3135, %v3137
        %3285 = vmax.xlane.f32.xlu0 %v3284
        %v3286 = vpop.xlane.xlu0 %3285
        %v3287 = vmax.f32 %v3141, %v3143
        %3288 = vmax.xlane.f32.xlu0 %v3287
        %v3289 = vpop.xlane.xlu0 %3288
        %v3290 = vmax.f32 %v3145, %v3147
        %3291 = vmax.xlane.f32.xlu0 %v3290
        %v3292 = vpop.xlane.xlu0 %3291
        %v3293 = vmax.f32 %v3151, %v3153
        %3294 = vmax.xlane.f32.xlu0 %v3293
        %v3295 = vpop.xlane.xlu0 %3294
        %v3296 = vmax.f32 %v3155, %v3157
        %3297 = vmax.xlane.f32.xlu0 %v3296
        %v3298 = vpop.xlane.xlu0 %3297
        %v3299 = vmax.f32 %v3161, %v3163
        %3300 = vmax.xlane.f32.xlu0 %v3299
        %v3301 = vpop.xlane.xlu0 %3300
        %v3302 = vmax.f32 %v3165, %v3167
        %3303 = vmax.xlane.f32.xlu0 %v3302
        %v3304 = vpop.xlane.xlu0 %3303
        %v3305 = vmax.f32 %v3171, %v3173
        %3306 = vmax.xlane.f32.xlu0 %v3305
        %v3307 = vpop.xlane.xlu0 %3306
        %v3308 = vmax.f32 %v3175, %v3177
        %3309 = vmax.xlane.f32.xlu0 %v3308
        %v3310 = vpop.xlane.xlu0 %3309
        %v3311 = vmax.f32 %v3181, %v3183
        %3312 = vmax.xlane.f32.xlu0 %v3311
        %v3313 = vpop.xlane.xlu0 %3312
        %v3314 = vmax.f32 %v3185, %v3187
        %3315 = vmax.xlane.f32.xlu0 %v3314
        %v3316 = vpop.xlane.xlu0 %3315
        %v3317 = vmax.f32 %v3191, %v3193
        %3318 = vmax.xlane.f32.xlu0 %v3317
        %v3319 = vpop.xlane.xlu0 %3318
        %v3320 = vmax.f32 %v3195, %v3197
        %3321 = vmax.xlane.f32.xlu0 %v3320
        %v3322 = vpop.xlane.xlu0 %3321
        %v3323 = vmax.f32 %v3201, %v3203
        %3324 = vmax.xlane.f32.xlu0 %v3323
        %v3325 = vpop.xlane.xlu0 %3324
        %v3326 = vmax.f32 %v3205, %v3207
        %3327 = vmax.xlane.f32.xlu0 %v3326
        %v3328 = vpop.xlane.xlu0 %3327
        %v3329 = vmax.f32 %v3211, %v3213
        %3330 = vmax.xlane.f32.xlu0 %v3329
        %v3331 = vpop.xlane.xlu0 %3330
        %v3332 = vmax.f32 %v3215, %v3217
        %3333 = vmax.xlane.f32.xlu0 %v3332
        %v3334 = vpop.xlane.xlu0 %3333
        %v3335 = vmax.f32 %v3221, %v3223
        %3336 = vmax.xlane.f32.xlu0 %v3335
        %v3337 = vpop.xlane.xlu0 %3336
        %v3338 = vmax.f32 %v3225, %v3227
        %3339 = vmax.xlane.f32.xlu0 %v3338
        %v3340 = vpop.xlane.xlu0 %3339
        %v3341 = vmax.f32 %v3231, %v3233
        %3342 = vmax.xlane.f32.xlu0 %v3341
        %v3343 = vpop.xlane.xlu0 %3342
        %v3344 = vmax.f32 %v3235, %v3237
        %3345 = vmax.xlane.f32.xlu0 %v3344
        %v3346 = vpop.xlane.xlu0 %3345
        %v3347 = vmax.f32 %v3241, %v3243
        %3348 = vmax.xlane.f32.xlu0 %v3347
        %v3349 = vpop.xlane.xlu0 %3348
        %v3350 = vmax.f32 %v3245, %v3247
        %3351 = vmax.xlane.f32.xlu0 %v3350
        %v3352 = vpop.xlane.xlu0 %3351
        %v3353 = vmax.f32 %v3251, %v3253
        %3354 = vmax.xlane.f32.xlu0 %v3353
        %v3355 = vpop.xlane.xlu0 %3354
        %v3356 = vmax.f32 %v3255, %v3257
        %3357 = vmax.xlane.f32.xlu0 %v3356
        %v3358 = vpop.xlane.xlu0 %3357
        %v3359 = vmax.f32 %v3261, %v3263
        %3360 = vmax.xlane.f32.xlu0 %v3359
        %v3361 = vpop.xlane.xlu0 %3360
        %v3362 = vmax.f32 %v3265, %v3267
        %3363 = vmax.xlane.f32.xlu0 %v3362
        %v3364 = vpop.xlane.xlu0 %3363
        %v3365 = vsub.f32 %v3111, %v3271
        %v3366 = vsub.f32 %v3113, %v3271
        %v3367 = vsub.f32 %v3115, %v3274
        %v3368 = vsub.f32 %v3117, %v3274
        %v3369 = vsub.f32 %v3121, %v3277
        %v3370 = vsub.f32 %v3123, %v3277
        %v3371 = vsub.f32 %v3125, %v3280
        %v3372 = vsub.f32 %v3127, %v3280
        %v3373 = vsub.f32 %v3131, %v3283
        %v3374 = vsub.f32 %v3133, %v3283
        %v3375 = vsub.f32 %v3135, %v3286
        %v3376 = vsub.f32 %v3137, %v3286
        %v3377 = vsub.f32 %v3141, %v3289
        %v3378 = vsub.f32 %v3143, %v3289
        %v3379 = vsub.f32 %v3145, %v3292
        %v3380 = vsub.f32 %v3147, %v3292
        %v3381 = vsub.f32 %v3151, %v3295
        %v3382 = vsub.f32 %v3153, %v3295
        %v3383 = vsub.f32 %v3155, %v3298
        %v3384 = vsub.f32 %v3157, %v3298
        %v3385 = vsub.f32 %v3161, %v3301
        %v3386 = vsub.f32 %v3163, %v3301
        %v3387 = vsub.f32 %v3165, %v3304
        %v3388 = vsub.f32 %v3167, %v3304
        %v3389 = vsub.f32 %v3171, %v3307
        %v3390 = vsub.f32 %v3173, %v3307
        %v3391 = vsub.f32 %v3175, %v3310
        %v3392 = vsub.f32 %v3177, %v3310
        %v3393 = vsub.f32 %v3181, %v3313
        %v3394 = vsub.f32 %v3183, %v3313
        %v3395 = vsub.f32 %v3185, %v3316
        %v3396 = vsub.f32 %v3187, %v3316
        %v3397 = vsub.f32 %v3191, %v3319
        %v3398 = vsub.f32 %v3193, %v3319
        %v3399 = vsub.f32 %v3195, %v3322
        %v3400 = vsub.f32 %v3197, %v3322
        %v3401 = vsub.f32 %v3201, %v3325
        %v3402 = vsub.f32 %v3203, %v3325
        %v3403 = vsub.f32 %v3205, %v3328
        %v3404 = vsub.f32 %v3207, %v3328
        %v3405 = vsub.f32 %v3211, %v3331
        %v3406 = vsub.f32 %v3213, %v3331
        %v3407 = vsub.f32 %v3215, %v3334
        %v3408 = vsub.f32 %v3217, %v3334
        %v3409 = vsub.f32 %v3221, %v3337
        %v3410 = vsub.f32 %v3223, %v3337
        %v3411 = vsub.f32 %v3225, %v3340
        %v3412 = vsub.f32 %v3227, %v3340
        %v3413 = vsub.f32 %v3231, %v3343
        %v3414 = vsub.f32 %v3233, %v3343
        %v3415 = vsub.f32 %v3235, %v3346
        %v3416 = vsub.f32 %v3237, %v3346
        %v3417 = vsub.f32 %v3241, %v3349
        %v3418 = vsub.f32 %v3243, %v3349
        %v3419 = vsub.f32 %v3245, %v3352
        %v3420 = vsub.f32 %v3247, %v3352
        %v3421 = vsub.f32 %v3251, %v3355
        %v3422 = vsub.f32 %v3253, %v3355
        %v3423 = vsub.f32 %v3255, %v3358
        %v3424 = vsub.f32 %v3257, %v3358
        %v3425 = vsub.f32 %v3261, %v3361
        %v3426 = vsub.f32 %v3263, %v3361
        %v3427 = vsub.f32 %v3265, %v3364
        %v3428 = vsub.f32 %v3267, %v3364
        %v3429 = vmul.f32 %v3365, 1.442695
        %v3430 = vpow.pop %v3429
        %v3431 = vmul.f32 %v3366, 1.442695
        %v3432 = vpow.pop %v3431
        %v3433 = vmul.f32 %v3367, 1.442695
        %v3434 = vpow.pop %v3433
        %v3435 = vmul.f32 %v3368, 1.442695
        %v3436 = vpow.pop %v3435
        %v3437 = vmul.f32 %v3369, 1.442695
        %v3438 = vpow.pop %v3437
        %v3439 = vmul.f32 %v3370, 1.442695
        %v3440 = vpow.pop %v3439
        %v3441 = vmul.f32 %v3371, 1.442695
        %v3442 = vpow.pop %v3441
        %v3443 = vmul.f32 %v3372, 1.442695
        %v3444 = vpow.pop %v3443
        %v3445 = vmul.f32 %v3373, 1.442695
        %v3446 = vpow.pop %v3445
        %v3447 = vmul.f32 %v3374, 1.442695
        %v3448 = vpow.pop %v3447
        %v3449 = vmul.f32 %v3375, 1.442695
        %v3450 = vpow.pop %v3449
        %v3451 = vmul.f32 %v3376, 1.442695
        %v3452 = vpow.pop %v3451
        %v3453 = vmul.f32 %v3377, 1.442695
        %v3454 = vpow.pop %v3453
        %v3455 = vmul.f32 %v3378, 1.442695
        %v3456 = vpow.pop %v3455
        %v3457 = vmul.f32 %v3379, 1.442695
        %v3458 = vpow.pop %v3457
        %v3459 = vmul.f32 %v3380, 1.442695
        %v3460 = vpow.pop %v3459
        %v3461 = vmul.f32 %v3381, 1.442695
        %v3462 = vpow.pop %v3461
        %v3463 = vmul.f32 %v3382, 1.442695
        %v3464 = vpow.pop %v3463
        %v3465 = vmul.f32 %v3383, 1.442695
        %v3466 = vpow.pop %v3465
        %v3467 = vmul.f32 %v3384, 1.442695
        %v3468 = vpow.pop %v3467
        %v3469 = vmul.f32 %v3385, 1.442695
        %v3470 = vpow.pop %v3469
        %v3471 = vmul.f32 %v3386, 1.442695
        %v3472 = vpow.pop %v3471
        %v3473 = vmul.f32 %v3387, 1.442695
        %v3474 = vpow.pop %v3473
        %v3475 = vmul.f32 %v3388, 1.442695
        %v3476 = vpow.pop %v3475
        %v3477 = vmul.f32 %v3389, 1.442695
        %v3478 = vpow.pop %v3477
        %v3479 = vmul.f32 %v3390, 1.442695
        %v3480 = vpow.pop %v3479
        %v3481 = vmul.f32 %v3391, 1.442695
        %v3482 = vpow.pop %v3481
        %v3483 = vmul.f32 %v3392, 1.442695
        %v3484 = vpow.pop %v3483
        %v3485 = vmul.f32 %v3393, 1.442695
        %v3486 = vpow.pop %v3485
        %v3487 = vmul.f32 %v3394, 1.442695
        %v3488 = vpow.pop %v3487
        %v3489 = vmul.f32 %v3395, 1.442695
        %v3490 = vpow.pop %v3489
        %v3491 = vmul.f32 %v3396, 1.442695
        %v3492 = vpow.pop %v3491
        %v3493 = vmul.f32 %v3397, 1.442695
        %v3494 = vpow.pop %v3493
        %v3495 = vmul.f32 %v3398, 1.442695
        %v3496 = vpow.pop %v3495
        %v3497 = vmul.f32 %v3399, 1.442695
        %v3498 = vpow.pop %v3497
        %v3499 = vmul.f32 %v3400, 1.442695
        %v3500 = vpow.pop %v3499
        %v3501 = vmul.f32 %v3401, 1.442695
        %v3502 = vpow.pop %v3501
        %v3503 = vmul.f32 %v3402, 1.442695
        %v3504 = vpow.pop %v3503
        %v3505 = vmul.f32 %v3403, 1.442695
        %v3506 = vpow.pop %v3505
        %v3507 = vmul.f32 %v3404, 1.442695
        %v3508 = vpow.pop %v3507
        %v3509 = vmul.f32 %v3405, 1.442695
        %v3510 = vpow.pop %v3509
        %v3511 = vmul.f32 %v3406, 1.442695
        %v3512 = vpow.pop %v3511
        %v3513 = vmul.f32 %v3407, 1.442695
        %v3514 = vpow.pop %v3513
        %v3515 = vmul.f32 %v3408, 1.442695
        %v3516 = vpow.pop %v3515
        %v3517 = vmul.f32 %v3409, 1.442695
        %v3518 = vpow.pop %v3517
        %v3519 = vmul.f32 %v3410, 1.442695
        %v3520 = vpow.pop %v3519
        %v3521 = vmul.f32 %v3411, 1.442695
        %v3522 = vpow.pop %v3521
        %v3523 = vmul.f32 %v3412, 1.442695
        %v3524 = vpow.pop %v3523
        %v3525 = vmul.f32 %v3413, 1.442695
        %v3526 = vpow.pop %v3525
        %v3527 = vmul.f32 %v3414, 1.442695
        %v3528 = vpow.pop %v3527
        %v3529 = vmul.f32 %v3415, 1.442695
        %v3530 = vpow.pop %v3529
        %v3531 = vmul.f32 %v3416, 1.442695
        %v3532 = vpow.pop %v3531
        %v3533 = vmul.f32 %v3417, 1.442695
        %v3534 = vpow.pop %v3533
        %v3535 = vmul.f32 %v3418, 1.442695
        %v3536 = vpow.pop %v3535
        %v3537 = vmul.f32 %v3419, 1.442695
        %v3538 = vpow.pop %v3537
        %v3539 = vmul.f32 %v3420, 1.442695
        %v3540 = vpow.pop %v3539
        %v3541 = vmul.f32 %v3421, 1.442695
        %v3542 = vpow.pop %v3541
        %v3543 = vmul.f32 %v3422, 1.442695
        %v3544 = vpow.pop %v3543
        %v3545 = vmul.f32 %v3423, 1.442695
        %v3546 = vpow.pop %v3545
        %v3547 = vmul.f32 %v3424, 1.442695
        %v3548 = vpow.pop %v3547
        %v3549 = vmul.f32 %v3425, 1.442695
        %v3550 = vpow.pop %v3549
        %v3551 = vmul.f32 %v3426, 1.442695
        %v3552 = vpow.pop %v3551
        %v3553 = vmul.f32 %v3427, 1.442695
        %v3554 = vpow.pop %v3553
        %v3555 = vmul.f32 %v3428, 1.442695
        %v3556 = vpow.pop %v3555
        %v3557 = vadd.f32 %v3430, %v3432
        %3558 = vadd.xlane.f32.xlu0 %v3557
        %v3559 = vpop.xlane.xlu0 %3558
        %v3560 = vadd.f32 %v3434, %v3436
        %3561 = vadd.xlane.f32.xlu0 %v3560
        %v3562 = vpop.xlane.xlu0 %3561
        %v3563 = vadd.f32 %v3438, %v3440
        %3564 = vadd.xlane.f32.xlu0 %v3563
        %v3565 = vpop.xlane.xlu0 %3564
        %v3566 = vadd.f32 %v3442, %v3444
        %3567 = vadd.xlane.f32.xlu0 %v3566
        %v3568 = vpop.xlane.xlu0 %3567
        %v3569 = vadd.f32 %v3446, %v3448
        %3570 = vadd.xlane.f32.xlu0 %v3569
        %v3571 = vpop.xlane.xlu0 %3570
        %v3572 = vadd.f32 %v3450, %v3452
        %3573 = vadd.xlane.f32.xlu0 %v3572
        %v3574 = vpop.xlane.xlu0 %3573
        %v3575 = vadd.f32 %v3454, %v3456
        %3576 = vadd.xlane.f32.xlu0 %v3575
        %v3577 = vpop.xlane.xlu0 %3576
        %v3578 = vadd.f32 %v3458, %v3460
        %3579 = vadd.xlane.f32.xlu0 %v3578
        %v3580 = vpop.xlane.xlu0 %3579
        %v3581 = vadd.f32 %v3462, %v3464
        %3582 = vadd.xlane.f32.xlu0 %v3581
        %v3583 = vpop.xlane.xlu0 %3582
        %v3584 = vadd.f32 %v3466, %v3468
        %3585 = vadd.xlane.f32.xlu0 %v3584
        %v3586 = vpop.xlane.xlu0 %3585
        %v3587 = vadd.f32 %v3470, %v3472
        %3588 = vadd.xlane.f32.xlu0 %v3587
        %v3589 = vpop.xlane.xlu0 %3588
        %v3590 = vadd.f32 %v3474, %v3476
        %3591 = vadd.xlane.f32.xlu0 %v3590
        %v3592 = vpop.xlane.xlu0 %3591
        %v3593 = vadd.f32 %v3478, %v3480
        %3594 = vadd.xlane.f32.xlu0 %v3593
        %v3595 = vpop.xlane.xlu0 %3594
        %v3596 = vadd.f32 %v3482, %v3484
        %3597 = vadd.xlane.f32.xlu0 %v3596
        %v3598 = vpop.xlane.xlu0 %3597
        %v3599 = vadd.f32 %v3486, %v3488
        %3600 = vadd.xlane.f32.xlu0 %v3599
        %v3601 = vpop.xlane.xlu0 %3600
        %v3602 = vadd.f32 %v3490, %v3492
        %3603 = vadd.xlane.f32.xlu0 %v3602
        %v3604 = vpop.xlane.xlu0 %3603
        %v3605 = vadd.f32 %v3494, %v3496
        %3606 = vadd.xlane.f32.xlu0 %v3605
        %v3607 = vpop.xlane.xlu0 %3606
        %v3608 = vadd.f32 %v3498, %v3500
        %3609 = vadd.xlane.f32.xlu0 %v3608
        %v3610 = vpop.xlane.xlu0 %3609
        %v3611 = vadd.f32 %v3502, %v3504
        %3612 = vadd.xlane.f32.xlu0 %v3611
        %v3613 = vpop.xlane.xlu0 %3612
        %v3614 = vadd.f32 %v3506, %v3508
        %3615 = vadd.xlane.f32.xlu0 %v3614
        %v3616 = vpop.xlane.xlu0 %3615
        %v3617 = vadd.f32 %v3510, %v3512
        %3618 = vadd.xlane.f32.xlu0 %v3617
        %v3619 = vpop.xlane.xlu0 %3618
        %v3620 = vadd.f32 %v3514, %v3516
        %3621 = vadd.xlane.f32.xlu0 %v3620
        %v3622 = vpop.xlane.xlu0 %3621
        %v3623 = vadd.f32 %v3518, %v3520
        %3624 = vadd.xlane.f32.xlu0 %v3623
        %v3625 = vpop.xlane.xlu0 %3624
        %v3626 = vadd.f32 %v3522, %v3524
        %3627 = vadd.xlane.f32.xlu0 %v3626
        %v3628 = vpop.xlane.xlu0 %3627
        %v3629 = vadd.f32 %v3526, %v3528
        %3630 = vadd.xlane.f32.xlu0 %v3629
        %v3631 = vpop.xlane.xlu0 %3630
        %v3632 = vadd.f32 %v3530, %v3532
        %3633 = vadd.xlane.f32.xlu0 %v3632
        %v3634 = vpop.xlane.xlu0 %3633
        %v3635 = vadd.f32 %v3534, %v3536
        %3636 = vadd.xlane.f32.xlu0 %v3635
        %v3637 = vpop.xlane.xlu0 %3636
        %v3638 = vadd.f32 %v3538, %v3540
        %3639 = vadd.xlane.f32.xlu0 %v3638
        %v3640 = vpop.xlane.xlu0 %3639
        %v3641 = vadd.f32 %v3542, %v3544
        %3642 = vadd.xlane.f32.xlu0 %v3641
        %v3643 = vpop.xlane.xlu0 %3642
        %v3644 = vadd.f32 %v3546, %v3548
        %3645 = vadd.xlane.f32.xlu0 %v3644
        %v3646 = vpop.xlane.xlu0 %3645
        %v3647 = vadd.f32 %v3550, %v3552
        %3648 = vadd.xlane.f32.xlu0 %v3647
        %v3649 = vpop.xlane.xlu0 %3648
        %v3650 = vadd.f32 %v3554, %v3556
        %3651 = vadd.xlane.f32.xlu0 %v3650
        %v3652 = vpop.xlane.xlu0 %3651
        %v3653 = vrcp.pop %v3559
        %v3654 = vrcp.pop %v3562
        %v3655 = vrcp.pop %v3565
        %v3656 = vrcp.pop %v3568
        %v3657 = vrcp.pop %v3571
        %v3658 = vrcp.pop %v3574
        %v3659 = vrcp.pop %v3577
        %v3660 = vrcp.pop %v3580
        %v3661 = vrcp.pop %v3583
        %v3662 = vrcp.pop %v3586
        %v3663 = vrcp.pop %v3589
        %v3664 = vrcp.pop %v3592
        %v3665 = vrcp.pop %v3595
        %v3666 = vrcp.pop %v3598
        %v3667 = vrcp.pop %v3601
        %v3668 = vrcp.pop %v3604
        %v3669 = vrcp.pop %v3607
        %v3670 = vrcp.pop %v3610
        %v3671 = vrcp.pop %v3613
        %v3672 = vrcp.pop %v3616
        %v3673 = vrcp.pop %v3619
        %v3674 = vrcp.pop %v3622
        %v3675 = vrcp.pop %v3625
        %v3676 = vrcp.pop %v3628
        %v3677 = vrcp.pop %v3631
        %v3678 = vrcp.pop %v3634
        %v3679 = vrcp.pop %v3637
        %v3680 = vrcp.pop %v3640
        %v3681 = vrcp.pop %v3643
        %v3682 = vrcp.pop %v3646
        %v3683 = vrcp.pop %v3649
        %v3684 = vrcp.pop %v3652
        %v3685 = vmul.f32 %v3430, %v3653
        %v3686 = vmul.f32 %v3432, %v3653
        %v3687 = vmul.f32 %v3434, %v3654
        %v3688 = vmul.f32 %v3436, %v3654
        %v3689 = vmul.f32 %v3438, %v3655
        %v3690 = vmul.f32 %v3440, %v3655
        %v3691 = vmul.f32 %v3442, %v3656
        %v3692 = vmul.f32 %v3444, %v3656
        %v3693 = vmul.f32 %v3446, %v3657
        %v3694 = vmul.f32 %v3448, %v3657
        %v3695 = vmul.f32 %v3450, %v3658
        %v3696 = vmul.f32 %v3452, %v3658
        %v3697 = vmul.f32 %v3454, %v3659
        %v3698 = vmul.f32 %v3456, %v3659
        %v3699 = vmul.f32 %v3458, %v3660
        %v3700 = vmul.f32 %v3460, %v3660
        %v3701 = vmul.f32 %v3462, %v3661
        %v3702 = vmul.f32 %v3464, %v3661
        %v3703 = vmul.f32 %v3466, %v3662
        %v3704 = vmul.f32 %v3468, %v3662
        %v3705 = vmul.f32 %v3470, %v3663
        %v3706 = vmul.f32 %v3472, %v3663
        %v3707 = vmul.f32 %v3474, %v3664
        %v3708 = vmul.f32 %v3476, %v3664
        %v3709 = vmul.f32 %v3478, %v3665
        %v3710 = vmul.f32 %v3480, %v3665
        %v3711 = vmul.f32 %v3482, %v3666
        %v3712 = vmul.f32 %v3484, %v3666
        %v3713 = vmul.f32 %v3486, %v3667
        %v3714 = vmul.f32 %v3488, %v3667
        %v3715 = vmul.f32 %v3490, %v3668
        %v3716 = vmul.f32 %v3492, %v3668
        %v3717 = vmul.f32 %v3494, %v3669
        %v3718 = vmul.f32 %v3496, %v3669
        %v3719 = vmul.f32 %v3498, %v3670
        %v3720 = vmul.f32 %v3500, %v3670
        %v3721 = vmul.f32 %v3502, %v3671
        %v3722 = vmul.f32 %v3504, %v3671
        %v3723 = vmul.f32 %v3506, %v3672
        %v3724 = vmul.f32 %v3508, %v3672
        %v3725 = vmul.f32 %v3510, %v3673
        %v3726 = vmul.f32 %v3512, %v3673
        %v3727 = vmul.f32 %v3514, %v3674
        %v3728 = vmul.f32 %v3516, %v3674
        %v3729 = vmul.f32 %v3518, %v3675
        %v3730 = vmul.f32 %v3520, %v3675
        %v3731 = vmul.f32 %v3522, %v3676
        %v3732 = vmul.f32 %v3524, %v3676
        %v3733 = vmul.f32 %v3526, %v3677
        %v3734 = vmul.f32 %v3528, %v3677
        %v3735 = vmul.f32 %v3530, %v3678
        %v3736 = vmul.f32 %v3532, %v3678
        %v3737 = vmul.f32 %v3534, %v3679
        %v3738 = vmul.f32 %v3536, %v3679
        %v3739 = vmul.f32 %v3538, %v3680
        %v3740 = vmul.f32 %v3540, %v3680
        %v3741 = vmul.f32 %v3542, %v3681
        %v3742 = vmul.f32 %v3544, %v3681
        %v3743 = vmul.f32 %v3546, %v3682
        %v3744 = vmul.f32 %v3548, %v3682
        %v3745 = vmul.f32 %v3550, %v3683
        %v3746 = vmul.f32 %v3552, %v3683
        %v3747 = vmul.f32 %v3554, %v3684
        %v3748 = vmul.f32 %v3556, %v3684
        %v3749 = vpack.c.bf16 %v1746, %v1742
        %v3750 = vpack.c.bf16 %v1748, %v1744
        %v3751 = vpack.c.bf16 %v1756, %v1752
        %v3752 = vpack.c.bf16 %v1758, %v1754
        %v3753 = vpack.c.bf16 %v3687, %v3685
        %v3754 = vpack.c.bf16 %v3688, %v3686
        %v3755 = vpack.c.bf16 %v3691, %v3689
        %v3756 = vpack.c.bf16 %v3692, %v3690
        %v3757 = vpack.c.bf16 %v3695, %v3693
        %v3758 = vpack.c.bf16 %v3696, %v3694
        %v3759 = vpack.c.bf16 %v3699, %v3697
        %v3760 = vpack.c.bf16 %v3700, %v3698
        %v3761 = vpack.c.bf16 %v3703, %v3701
        %v3762 = vpack.c.bf16 %v3704, %v3702
        %v3763 = vpack.c.bf16 %v3707, %v3705
        %v3764 = vpack.c.bf16 %v3708, %v3706
        %v3765 = vpack.c.bf16 %v3711, %v3709
        %v3766 = vpack.c.bf16 %v3712, %v3710
        %v3767 = vpack.c.bf16 %v3715, %v3713
        %v3768 = vpack.c.bf16 %v3716, %v3714
        %v3769 = vpack.c.bf16 %v3719, %v3717
        %v3770 = vpack.c.bf16 %v3720, %v3718
        %v3771 = vpack.c.bf16 %v3723, %v3721
        %v3772 = vpack.c.bf16 %v3724, %v3722
        %v3773 = vpack.c.bf16 %v3727, %v3725
        %v3774 = vpack.c.bf16 %v3728, %v3726
        %v3775 = vpack.c.bf16 %v3731, %v3729
        %v3776 = vpack.c.bf16 %v3732, %v3730
        %v3777 = vpack.c.bf16 %v3735, %v3733
        %v3778 = vpack.c.bf16 %v3736, %v3734
        %v3779 = vpack.c.bf16 %v3739, %v3737
        %v3780 = vpack.c.bf16 %v3740, %v3738
        %v3781 = vpack.c.bf16 %v3743, %v3741
        %v3782 = vpack.c.bf16 %v3744, %v3742
        %v3783 = vpack.c.bf16 %v3747, %v3745
        %v3784 = vpack.c.bf16 %v3748, %v3746
        %3785 = vmatprep.subr.bf16.mxu0 %v3754
        %3786 = vmatpush1.bf16.xpose.msra.mxu0 %v3753
        %3787 = vmatprep.subr.bf16.mxu0 %v3756
        %3788 = vmatpush1.bf16.xpose.msra.mxu0 %v3755
        %3789 = vmatprep.subr.bf16.mxu0 %v3758
        %3790 = vmatpush1.bf16.xpose.msra.mxu0 %v3757
        %3791 = vmatprep.subr.bf16.mxu0 %v3760
        %3792 = vmatpush1.bf16.xpose.msra.mxu0 %v3759
        %3793 = vmatprep.subr.bf16.mxu0 %v3762
        %3794 = vmatpush1.bf16.xpose.msra.mxu0 %v3761
        %3795 = vmatprep.subr.bf16.mxu0 %v3764
        %3796 = vmatpush1.bf16.xpose.msra.mxu0 %v3763
        %3797 = vmatprep.subr.bf16.mxu0 %v3766
        %3798 = vmatpush1.bf16.xpose.msra.mxu0 %v3765
        %3799 = vmatprep.subr.bf16.mxu0 %v3768
        %3800 = vmatpush1.bf16.xpose.msra.mxu0 %v3767
        %3801 = vmatprep.subr.bf16.mxu0 %v3770
        %3802 = vmatpush1.bf16.xpose.msra.mxu0 %v3769
        %3803 = vmatprep.subr.bf16.mxu0 %v3772
        %3804 = vmatpush1.bf16.xpose.msra.mxu0 %v3771
        %3805 = vmatprep.subr.bf16.mxu0 %v3774
        %3806 = vmatpush1.bf16.xpose.msra.mxu0 %v3773
        %3807 = vmatprep.subr.bf16.mxu0 %v3776
        %3808 = vmatpush1.bf16.xpose.msra.mxu0 %v3775
        %3809 = vmatprep.subr.bf16.mxu0 %v3778
        %3810 = vmatpush1.bf16.xpose.msra.mxu0 %v3777
        %3811 = vmatprep.subr.bf16.mxu0 %v3780
        %3812 = vmatpush1.bf16.xpose.msra.mxu0 %v3779
        %3813 = vmatprep.subr.bf16.mxu0 %v3782
        %3814 = vmatpush1.bf16.xpose.msra.mxu0 %v3781
        %3815 = vmatprep.subr.bf16.mxu0 %v3784
        %3816 = vmatpush1.bf16.xpose.msra.mxu0 %v3783
        %3817 = vmatprep.mubr.bf16.mxu0 %v3750
        %3818 = vmatmul.mubr.bf16.gmra.mrb[0].mxu0 %v3749
        %v3819 = vpop.f32.mrb[0].mxu0
        %v3820 = vadd.f32 0.0, %v3819
        %v3821 = vpop.f32.mrb[0].mxu0
        %v3822 = vadd.f32 0.0, %v3821
        %v3823 = vpop.f32.mrb[0].mxu0
        %v3824 = vadd.f32 0.0, %v3823
        %v3825 = vpop.f32.mrb[0].mxu0
        %v3826 = vadd.f32 0.0, %v3825
        %3827 = vmatprep.mubr.bf16.mxu0 %v3752
        %3828 = vmatmul.mubr.bf16.gmra.mrb[0].mxu0 %v3751
        %v3829 = vpop.f32.mrb[0].mxu0
        %v3830 = vadd.f32 0.0, %v3829
        %v3831 = vpop.f32.mrb[0].mxu0
        %v3832 = vadd.f32 0.0, %v3831
        %v3833 = vpop.f32.mrb[0].mxu0
        %v3834 = vadd.f32 0.0, %v3833
        %v3835 = vpop.f32.mrb[0].mxu0
        %v3836 = vadd.f32 0.0, %v3835
        %3837 = vdwg.mxu0
        %v3838 = vmul.f32 %v2666, %v3820
        %v3839 = vmul.f32 %v2666, %v3822
        %v3840 = vmul.f32 %v2666, %v3824
        %v3841 = vmul.f32 %v2666, %v3826
        %v3842 = vmul.f32 %v2666, %v3830
        %v3843 = vmul.f32 %v2666, %v3832
        %v3844 = vmul.f32 %v2666, %v3834
        %v3845 = vmul.f32 %v2666, %v3836
        %v3846 = vadd.f32 %v3838, %v1530
        %v3847 = vadd.f32 %v3839, %v1531
        %v3848 = vadd.f32 %v3840, %v1534
        %v3849 = vadd.f32 %v3841, %v1535
        %v3850 = vadd.f32 %v3842, %v1538
        %v3851 = vadd.f32 %v3843, %v1539
        %v3852 = vadd.f32 %v3844, %v1542
        %v3853 = vadd.f32 %v3845, %v1543
        %s3854 = scalar_lea.vmem %s214, 64 [#allocation5]
        %3855 = vst [vmem:[%s3854] sm:$0xff] %v3846
        %3856 = vst [vmem:[%s3854 + $0x8] sm:$0xff] %v3847
        %3857 = vst [vmem:[%s3854 + $0x10] sm:$0xff] %v3848
        %3858 = vst [vmem:[%s3854 + $0x18] sm:$0xff] %v3849
        %3859 = vst [vmem:[%s3854 + $0x20] sm:$0xff] %v3850
        %3860 = vst [vmem:[%s3854 + $0x28] sm:$0xff] %v3851
        %3861 = vst [vmem:[%s3854 + $0x30] sm:$0xff] %v3852
        %3862 = vst [vmem:[%s3854 + $0x38] sm:$0xff] %v3853
        %v3863 = vpack.c.bf16 %v3848, %v3846
        %v3864 = vpack.c.bf16 %v3849, %v3847
        %v3865 = vpack.c.bf16 %v3852, %v3850
        %v3866 = vpack.c.bf16 %v3853, %v3851
        %v3867 = vsel %vm2707, 0, %v3863
        %v3868 = vsel %vm2708, 0, %v3864
        %v3869 = vsel %vm2707, 0, %v3865
        %v3870 = vsel %vm2708, 0, %v3866
        %v3871 = vsel %vm2725, 0, %v3863
        %v3872 = vsel %vm2726, 0, %v3864
        %v3873 = vsel %vm2725, 0, %v3865
        %v3874 = vsel %vm2726, 0, %v3866
        %3879 = vrot.lane.b32.xlu0 %v3871, 17
        %v3880 = vpop.permute.xlu0 %3879
        %3881 = vrot.lane.b32.xlu0 %v3872, 17
        %v3882 = vpop.permute.xlu0 %3881
        %3883 = vrot.lane.b32.xlu0 %v3873, 17
        %v3884 = vpop.permute.xlu0 %3883
        %3885 = vrot.lane.b32.xlu0 %v3874, 17
        %v3886 = vpop.permute.xlu0 %3885
        %v3887 = vsel %vm2743, %v3880, %v3882
        %v3888 = vsel %vm2743, %v3884, %v3886
        %v3892 = vsel %vm2748, 0, %v3880
        %v3895 = vsel %vm2748, 0, %v3884
        %3897 = vst [vmem:[#allocation2 + $0x10] sm:$0xff] %v3892
        %3898 = vst [vmem:[#allocation2 + $0x18] sm:$0xff] %v3887
        %3899 = vst [vmem:[#allocation2 + $0x30] sm:$0xff] %v3895
        %3900 = vst [vmem:[#allocation2 + $0x38] sm:$0xff] %v3888
        %3905 = vrot.lane.b32.xlu0 %v3863, 16
        %v3906 = vpop.permute.xlu0 %3905
        %3907 = vrot.lane.b32.xlu0 %v3864, 16
        %v3908 = vpop.permute.xlu0 %3907
        %3909 = vrot.lane.b32.xlu0 %v3865, 16
        %v3910 = vpop.permute.xlu0 %3909
        %3911 = vrot.lane.b32.xlu0 %v3866, 16
        %v3912 = vpop.permute.xlu0 %3911
        %v3913 = vsel %vm2772, %v3906, %v3908
        %v3914 = vsel %vm2772, %v3910, %v3912
        %v3918 = vsel %vm2777, 0, %v3906
        %v3921 = vsel %vm2777, 0, %v3910
        %3923 = vst [vmem:[#allocation2 + $0x50] sm:$0xff] %v3918
        %3924 = vst [vmem:[#allocation2 + $0x58] sm:$0xff] %v3913
        %3925 = vst [vmem:[#allocation2 + $0x70] sm:$0xff] %v3921
        %3926 = vst [vmem:[#allocation2 + $0x78] sm:$0xff] %v3914
        %3931 = vrot.lane.b32.xlu0 %v3867, 15
        %v3932 = vpop.permute.xlu0 %3931
        %3933 = vrot.lane.b32.xlu0 %v3868, 15
        %v3934 = vpop.permute.xlu0 %3933
        %3935 = vrot.lane.b32.xlu0 %v3869, 15
        %v3936 = vpop.permute.xlu0 %3935
        %3937 = vrot.lane.b32.xlu0 %v3870, 15
        %v3938 = vpop.permute.xlu0 %3937
        %v3939 = vsel %vm2800, %v3932, %v3934
        %v3940 = vsel %vm2800, %v3936, %v3938
        %v3944 = vsel %vm2805, 0, %v3932
        %v3947 = vsel %vm2805, 0, %v3936
        %3949 = vst [vmem:[#allocation2 + $0x90] sm:$0xff] %v3944
        %3950 = vst [vmem:[#allocation2 + $0x98] sm:$0xff] %v3939
        %3951 = vst [vmem:[#allocation2 + $0xb0] sm:$0xff] %v3947
        %3952 = vst [vmem:[#allocation2 + $0xb8] sm:$0xff] %v3940
        %3953 = vrot.lane.b32.xlu0 %v3871, 1
        %v3954 = vpop.permute.xlu0 %3953
        %3955 = vrot.lane.b32.xlu0 %v3872, 1
        %v3956 = vpop.permute.xlu0 %3955
        %3957 = vrot.lane.b32.xlu0 %v3873, 1
        %v3958 = vpop.permute.xlu0 %3957
        %3959 = vrot.lane.b32.xlu0 %v3874, 1
        %v3960 = vpop.permute.xlu0 %3959
        %v3961 = vsel %vm2824, %v3954, %v3956
        %v3962 = vsel %vm2824, %v3958, %v3960
        %v3966 = vsel %vm2829, 0, %v3954
        %v3969 = vsel %vm2829, 0, %v3958
        %3971 = vst [vmem:[#allocation2 + $0xd0] sm:$0xff] %v3966
        %3972 = vst [vmem:[#allocation2 + $0xd8] sm:$0xff] %v3961
        %3973 = vst [vmem:[#allocation2 + $0xf0] sm:$0xff] %v3969
        %3974 = vst [vmem:[#allocation2 + $0xf8] sm:$0xff] %v3962
        %3975 = vst [vmem:[#allocation2 + $0x110] sm:$0xff] %v3863
        %3976 = vst [vmem:[#allocation2 + $0x118] sm:$0xff] %v3864
        %3977 = vst [vmem:[#allocation2 + $0x130] sm:$0xff] %v3865
        %3978 = vst [vmem:[#allocation2 + $0x138] sm:$0xff] %v3866
        %3979 = vrot.lane.b32.xlu0 %v3867, 127
        %v3980 = vpop.permute.xlu0 %3979
        %3981 = vrot.lane.b32.xlu0 %v3868, 127
        %v3982 = vpop.permute.xlu0 %3981
        %3983 = vrot.lane.b32.xlu0 %v3869, 127
        %v3984 = vpop.permute.xlu0 %3983
        %3985 = vrot.lane.b32.xlu0 %v3870, 127
        %v3986 = vpop.permute.xlu0 %3985
        %v3987 = vsel %vm2852, %v3980, %v3982
        %v3988 = vsel %vm2852, %v3984, %v3986
        %v3992 = vsel %vm2857, %v3982, 0
        %v3995 = vsel %vm2857, %v3986, 0
        %3997 = vst [vmem:[#allocation2 + $0x150] sm:$0xff] %v3987
        %3998 = vst [vmem:[#allocation2 + $0x158] sm:$0xff] %v3992
        %3999 = vst [vmem:[#allocation2 + $0x170] sm:$0xff] %v3988
        %4000 = vst [vmem:[#allocation2 + $0x178] sm:$0xff] %v3995
        %4001 = vrot.lane.b32.xlu0 %v3871, 113
        %v4002 = vpop.permute.xlu0 %4001
        %4003 = vrot.lane.b32.xlu0 %v3872, 113
        %v4004 = vpop.permute.xlu0 %4003
        %4005 = vrot.lane.b32.xlu0 %v3873, 113
        %v4006 = vpop.permute.xlu0 %4005
        %4007 = vrot.lane.b32.xlu0 %v3874, 113
        %v4008 = vpop.permute.xlu0 %4007
        %v4009 = vsel %vm2876, %v4002, %v4004
        %v4010 = vsel %vm2876, %v4006, %v4008
        %v4014 = vsel %vm2881, %v4004, 0
        %v4017 = vsel %vm2881, %v4008, 0
        %4019 = vst [vmem:[#allocation2 + $0x190] sm:$0xff] %v4009
        %4020 = vst [vmem:[#allocation2 + $0x198] sm:$0xff] %v4014
        %4021 = vst [vmem:[#allocation2 + $0x1b0] sm:$0xff] %v4010
        %4022 = vst [vmem:[#allocation2 + $0x1b8] sm:$0xff] %v4017
        %4023 = vrot.lane.b32.xlu0 %v3863, 112
        %v4024 = vpop.permute.xlu0 %4023
        %4025 = vrot.lane.b32.xlu0 %v3864, 112
        %v4026 = vpop.permute.xlu0 %4025
        %4027 = vrot.lane.b32.xlu0 %v3865, 112
        %v4028 = vpop.permute.xlu0 %4027
        %4029 = vrot.lane.b32.xlu0 %v3866, 112
        %v4030 = vpop.permute.xlu0 %4029
        %v4031 = vsel %vm2900, %v4024, %v4026
        %v4032 = vsel %vm2900, %v4028, %v4030
        %v4036 = vsel %vm2905, %v4026, 0
        %v4039 = vsel %vm2905, %v4030, 0
        %4041 = vst [vmem:[#allocation2 + $0x1d0] sm:$0xff] %v4031
        %4042 = vst [vmem:[#allocation2 + $0x1d8] sm:$0xff] %v4036
        %4043 = vst [vmem:[#allocation2 + $0x1f0] sm:$0xff] %v4032
        %4044 = vst [vmem:[#allocation2 + $0x1f8] sm:$0xff] %v4039
        %4045 = vrot.lane.b32.xlu0 %v3867, 111
        %v4046 = vpop.permute.xlu0 %4045
        %4047 = vrot.lane.b32.xlu0 %v3868, 111
        %v4048 = vpop.permute.xlu0 %4047
        %4049 = vrot.lane.b32.xlu0 %v3869, 111
        %v4050 = vpop.permute.xlu0 %4049
        %4051 = vrot.lane.b32.xlu0 %v3870, 111
        %v4052 = vpop.permute.xlu0 %4051
        %v4053 = vsel %vm2924, %v4046, %v4048
        %v4054 = vsel %vm2924, %v4050, %v4052
        %v4058 = vsel %vm2929, %v4048, 0
        %v4061 = vsel %vm2929, %v4052, 0
        %4063 = vst [vmem:[#allocation2 + $0x210] sm:$0xff] %v4053
        %4064 = vst [vmem:[#allocation2 + $0x218] sm:$0xff] %v4058
        %4065 = vst [vmem:[#allocation2 + $0x230] sm:$0xff] %v4054
        %4066 = vst [vmem:[#allocation2 + $0x238] sm:$0xff] %v4061
        %s4067 = sand.u32 %s135, 1
        %s4068 = sand.u32 %s135, 1
        %s4069 = smul.addr %s4068, 128
        %s4070 = scalar_lea.vmem [#allocation5], %s4069
        // Predicated region
        $region45: #{aclstm_forward.1} parent=39 // pred_check
          %p4071 = pneg %p145
        $region46: #{aclstm_forward.1} parent=39 // pred_check_branch
          %4073 = sbr.rel (%p4071) target = $region48
        $region47: #{aclstm_forward.1} parent=39 // pred_region
          %s4074 = smul.addr %s17, 8
          %s4075 = smul.addr %s4074, 8
          %s4076 = scalar_lea.vmem %s5, %s4075
          // Predicated region
          $region49: #{aclstm_forward.1} parent=47 // pred_check
            _
          $region50: #{aclstm_forward.1} parent=47 // pred_check_branch
            %4078 = sbr.rel (0) target = $region52
          $region51: #{aclstm_forward.1} parent=47 // pred_region
            // Predicated region
            $region53: #{aclstm_forward.1} parent=51 // pred_check
              _
            $region54: #{aclstm_forward.1} parent=51 // pred_check_branch
              %4080 = sbr.rel (0) target = $region56
            $region55: #{aclstm_forward.1} parent=51 // pred_region
              loop: start=0, step=1, limit=1
              $region57: #{aclstm_forward.1} parent=55 // loop_pre_header
                _
              $region58: #{aclstm_forward.1} parent=55 // loop_header
                %s4082 = sphi 0, %s4086
                %p4083 = scmp.ge.s32.totalorder %s4082, 1
                %s4087 = sphi %s4070, %s4070
                %s4088 = sphi %s4076, %s4076
              $region59: #{aclstm_forward.1} parent=55 // loop_header_branch
                %4085 = sbr.rel (%p4083) target = $region63
              $region60: #{aclstm_forward.1} parent=55 // loop_body
                %v4089 = vld [vmem:[%s4087] sm:$0xff]
                %4090 = vst [vmem:[%s4088] sm:$0xff] %v4089
                %v4091 = vld [vmem:[%s4087 + $0x8] sm:$0xff]
                %4092 = vst [vmem:[%s4088 + $0x8] sm:$0xff] %v4091
                %v4093 = vld [vmem:[%s4087 + $0x10] sm:$0xff]
                %4094 = vst [vmem:[%s4088 + $0x10] sm:$0xff] %v4093
                %v4095 = vld [vmem:[%s4087 + $0x18] sm:$0xff]
                %4096 = vst [vmem:[%s4088 + $0x18] sm:$0xff] %v4095
                %v4097 = vld [vmem:[%s4087 + $0x20] sm:$0xff]
                %4098 = vst [vmem:[%s4088 + $0x20] sm:$0xff] %v4097
                %v4099 = vld [vmem:[%s4087 + $0x28] sm:$0xff]
                %4100 = vst [vmem:[%s4088 + $0x28] sm:$0xff] %v4099
                %v4101 = vld [vmem:[%s4087 + $0x30] sm:$0xff]
                %4102 = vst [vmem:[%s4088 + $0x30] sm:$0xff] %v4101
                %v4103 = vld [vmem:[%s4087 + $0x38] sm:$0xff]
                %4104 = vst [vmem:[%s4088 + $0x38] sm:$0xff] %v4103
                %v4105 = vld [vmem:[%s4087 + $0x40] sm:$0xff]
                %4106 = vst [vmem:[%s4088 + $0x100] sm:$0xff] %v4105
                %v4107 = vld [vmem:[%s4087 + $0x48] sm:$0xff]
                %4108 = vst [vmem:[%s4088 + $0x108] sm:$0xff] %v4107
                %v4109 = vld [vmem:[%s4087 + $0x50] sm:$0xff]
                %4110 = vst [vmem:[%s4088 + $0x110] sm:$0xff] %v4109
                %v4111 = vld [vmem:[%s4087 + $0x58] sm:$0xff]
                %4112 = vst [vmem:[%s4088 + $0x118] sm:$0xff] %v4111
                %v4113 = vld [vmem:[%s4087 + $0x60] sm:$0xff]
                %4114 = vst [vmem:[%s4088 + $0x120] sm:$0xff] %v4113
                %v4115 = vld [vmem:[%s4087 + $0x68] sm:$0xff]
                %4116 = vst [vmem:[%s4088 + $0x128] sm:$0xff] %v4115
                %v4117 = vld [vmem:[%s4087 + $0x70] sm:$0xff]
                %4118 = vst [vmem:[%s4088 + $0x130] sm:$0xff] %v4117
                %v4119 = vld [vmem:[%s4087 + $0x78] sm:$0xff]
                %4120 = vst [vmem:[%s4088 + $0x138] sm:$0xff] %v4119
              $region61: #{aclstm_forward.1} parent=55 // loop_footer
                %s4086 = sadd.s32 1, %s4082
              $region62: #{aclstm_forward.1} parent=55 // loop_footer_branch
                %4081 = sbr.rel target = $region58
              $region63: #{aclstm_forward.1} parent=55 // loop_exit
                _
            $region56: #{aclstm_forward.1} parent=51 // pred_fallthru
              _
            // Predicated region
            $region64: #{aclstm_forward.1} parent=51 // pred_check
              _
            $region65: #{aclstm_forward.1} parent=51 // pred_check_branch
              %4122 = sbr.rel target = $region67
            $region66: #{aclstm_forward.1} parent=51 // pred_region
              _
            $region67: #{aclstm_forward.1} parent=51 // pred_fallthru
              _
          $region52: #{aclstm_forward.1} parent=47 // pred_fallthru
            _
          %4123 = vnop
        $region48: #{aclstm_forward.1} parent=39 // pred_fallthru
          _
      $region40: #{aclstm_forward.1} parent=5 // pred_fallthru
        _
      %p4124 = scmp.le.s32.totalorder 2, %s12
      // Predicated region
      $region68: #{aclstm_forward.1} parent=5 // pred_check
        %p4125 = pneg %p4124
      $region69: #{aclstm_forward.1} parent=5 // pred_check_branch
        %4127 = sbr.rel (%p4125) target = $region71
      $region70: #{aclstm_forward.1} parent=5 // pred_region
        %s4128 = ssub.s32 %s12, 2
        // Predicated region
        $region72: #{aclstm_forward.1} parent=70 // pred_check
          %p4129 = pneg %p151
        $region73: #{aclstm_forward.1} parent=70 // pred_check_branch
          %4131 = sbr.rel (%p4129) target = $region75
        $region74: #{aclstm_forward.1} parent=70 // pred_region
          %s4132 = sand.u32 %s136, 1
          %s4133 = sand.u32 %s136, 1
          %s4134 = smul.addr %s4133, 128
          %s4135 = scalar_lea.vmem [#allocation5], %s4134
        $region75: #{aclstm_forward.1} parent=70 // pred_fallthru
          _
      $region71: #{aclstm_forward.1} parent=5 // pred_fallthru
        _
    $region6: #{aclstm_forward.1} parent=1 // loop_footer
      %s16 = sadd.s32 1, %s12
    $region7: #{aclstm_forward.1} parent=1 // loop_footer_branch
      %11 = sbr.rel target = $region3
    $region8: #{aclstm_forward.1} parent=1 // loop_exit
      _

</llo_original>
